<compile_context>
chip_gen: v6e
topology: v6e:2x2x1
jax: 0.10.0
libtpu: 0.0.40
codegen_flags: <defaults>
</compile_context>

<pallas_src>
import functools

import jax
import jax.numpy as jnp
import numpy as np
from jax import lax
from jax.experimental import pallas as pl
from jax.experimental.pallas import tpu as pltpu


def _make_conv_bn_silu_kernel(N, C1, H, W, C2, K, padding):
    """Builds the kernel body; all shapes are static and closed over."""
    Hp = H + 2 * padding                     # padded height
    Ho = Hp - K + 1                          # output height (stride 1)
    Wo = W + 2 * padding - K + 1             # output width  (stride 1)
    HW = Ho * Wo

    def kernel(x_ref, w_ref, b_ref, o_ref, flat_scr, rhs_scr):
        # x_ref:    (N, C1, H, W)       raw (un-padded) NCHW input
        # w_ref:    (C2, K*K*C1)        BN-scale-folded weights, cols = (kh,kw,c1)
        # b_ref:    (C2, 1)             folded BN bias
        # o_ref:    (N, C2, Ho*Wo)      flattened-NCHW output (lane dim = Ho*Wo)
        # flat_scr: (K, N, C1, Hp*Wo)   width-shifted, row-flattened copies of x_pad
        # rhs_scr:  (K*K*C1, N*Ho*Wo)   im2col slab (matmul rhs)

        # ---- in-kernel zero-pad + width-shift + row-flatten -----------------
        # Invariant built here:
        #   flat_scr[kw, n, c1, i*Wo + w] = x_pad[n, c1, i, w + kw]
        # (i = padded row index).  Zero-init supplies every padding position;
        # only in-bounds input data is copied, with static slices.
        flat_scr[...] = jnp.zeros(flat_scr.shape, flat_scr.dtype)
        for kw in range(K):
            w_lo = max(0, padding - kw)          # first output col hitting real data
            w_hi = min(Wo, W + padding - kw)     # one past the last such col
            width = w_hi - w_lo
            u_lo = w_lo + kw - padding           # matching input column
            for r in range(H):                   # input row r -> padded row r+padding
                i = r + padding
                flat_scr[kw, :, :, pl.ds(i * Wo + w_lo, width)] = (
                    x_ref[:, :, r, pl.ds(u_lo, width)])

        # ---- assemble the matmul rhs: rows (kh,kw,c1), lanes (n, h, w) ------
        # rhs_scr[(kh*K+kw)*C1 + c1, n*HW + h*Wo + w] = x_pad[n, c1, h+kh, w+kw]
        for kh in range(K):
            for kw in range(K):
                t = kh * K + kw
                for n in range(N):
                    rhs_scr[pl.ds(t * C1, C1), pl.ds(n * HW, HW)] = (
                        flat_scr[kw, n, :, pl.ds(kh * Wo, HW)])

        # ---- single MXU matmul + f32 bias / SiLU epilogue -------------------
        acc = jnp.dot(w_ref[...], rhs_scr[...],
                      preferred_element_type=jnp.float32)      # (C2, N*HW) f32
        y = acc + b_ref[...]                                    # lane-broadcast bias
        y = y * jax.nn.sigmoid(y)                                # SiLU
        for n in range(N):                                       # unmasked 256-wide stores
            o_ref[n, :, :] = y[:, n * HW:(n + 1) * HW].astype(o_ref.dtype)

    return kernel, Ho, Wo


@functools.partial(jax.jit, static_argnames=("stride", "padding", "eps"))
def conv_bn_silu(x_nchw, weight_oihw, gamma, beta, running_mean, running_var,
                 *, stride=1, padding=1, eps=1e-3):
    """Pallas TPU Conv.forward: Conv2d(bias=False) -> BatchNorm2d(eval) -> SiLU."""
    N, C1, H, W = x_nchw.shape
    C2, C1w, K, Kw = weight_oihw.shape
    assert C1 == C1w and K == Kw
    assert stride == 1, "kernel implements the stride-1 Conv instance"
    # groups=1, dilation=1 as in the reference module instance.

    kernel, Ho, Wo = _make_conv_bn_silu_kernel(N, C1, H, W, C2, K, padding)
    HW = Ho * Wo
    KKC1 = K * K * C1
    Hp = H + 2 * padding

    # Fold BN (inference) into the conv weights / bias; weight columns ordered
    # (kh, kw, c1) to match the in-kernel slab row order.  Tiny (C2 x 36) ops.
    scale = gamma.astype(jnp.float32) / jnp.sqrt(
        running_var.astype(jnp.float32) + eps)
    bias = beta.astype(jnp.float32) - running_mean.astype(jnp.float32) * scale
    w_mat = (weight_oihw.astype(jnp.float32) * scale[:, None, None, None]
             ).transpose(0, 2, 3, 1).reshape(C2, KKC1)
    bias2d = bias.reshape(C2, 1)

    x = x_nchw if x_nchw.dtype == jnp.float32 else x_nchw.astype(jnp.float32)

    out_flat = pl.pallas_call(
        kernel,
        out_shape=jax.ShapeDtypeStruct((N, C2, HW), jnp.float32),
        grid_spec=pltpu.PrefetchScalarGridSpec(
            num_scalar_prefetch=0,
            grid=(1,),
            in_specs=[
                pl.BlockSpec((N, C1, H, W), lambda i: (0, 0, 0, 0)),
                pl.BlockSpec((C2, KKC1), lambda i: (0, 0)),
                pl.BlockSpec((C2, 1), lambda i: (0, 0)),
            ],
            out_specs=pl.BlockSpec((N, C2, HW), lambda i: (0, 0, 0)),
            scratch_shapes=[
                pltpu.VMEM((K, N, C1, Hp * Wo), jnp.float32),
                pltpu.VMEM((KKC1, N * HW), jnp.float32),
            ],
        ),
        compiler_params=pltpu.CompilerParams(
            dimension_semantics=("arbitrary",)),
    )(x, w_mat, bias2d)

    # (N, C2, Ho*Wo) is flattened NCHW: reshape only, no transpose needed.
    return out_flat.reshape(N, C2, Ho, Wo)


def _reference(x_nchw, weight_oihw, gamma, beta, running_mean, running_var,
               *, stride=1, padding=1, eps=1e-3):
    """Pure-JAX reference (lax conv) for correctness checking."""
    y = lax.conv_general_dilated(
        x_nchw.astype(jnp.float32), weight_oihw.astype(jnp.float32),
        window_strides=(stride, stride),
        padding=((padding, padding), (padding, padding)),
        dimension_numbers=("NCHW", "OIHW", "NCHW"))
    scale = gamma / jnp.sqrt(running_var + eps)
    bias = beta - running_mean * scale
    y = y * scale[None, :, None, None] + bias[None, :, None, None]
    return y * jax.nn.sigmoid(y)


if __name__ == "__main__":
    # Module config: Conv(c1=4, c2=8, k=3, s=1) -> autopad gives p=1
    N, C1, H, W = 2, 4, 16, 16
    C2, K, S, P = 8, 3, 1, 1

    key = jax.random.PRNGKey(0)
    kx, kw, kg, kb, km, kv = jax.random.split(key, 6)

    x = jax.random.normal(kx, (N, C1, H, W), dtype=jnp.float32)
    weight = jax.random.normal(kw, (C2, C1, K, K), dtype=jnp.float32) * 0.1
    gamma = jax.random.normal(kg, (C2,), dtype=jnp.float32) * 0.1 + 1.0
    beta = jax.random.normal(kb, (C2,), dtype=jnp.float32) * 0.1
    running_mean = jax.random.normal(km, (C2,), dtype=jnp.float32) * 0.1
    running_var = jax.random.uniform(kv, (C2,), dtype=jnp.float32,
                                     minval=0.5, maxval=1.5)

    out = conv_bn_silu(x, weight, gamma, beta, running_mean, running_var,
                       stride=S, padding=P, eps=1e-3)
    out = jax.block_until_ready(out)

    ref = _reference(x, weight, gamma, beta, running_mean, running_var,
                     stride=S, padding=P, eps=1e-3)
    np.testing.assert_allclose(np.asarray(out), np.asarray(ref),
                               rtol=1e-5, atol=1e-5)

    print("KERNEL_OK")
</pallas_src>

<mosaic_0001>
module attributes {stable_mosaic.version = 11 : i64} {
  func.func @kernel(%arg0: i32, %arg1: memref<2x4x16x16xf32, #tpu.memory_space<vmem>>, %arg2: memref<8x36xf32, #tpu.memory_space<vmem>>, %arg3: memref<8x1xf32, #tpu.memory_space<vmem>>, %arg4: memref<2x8x256xf32, #tpu.memory_space<vmem>>, %arg5: memref<3x2x4x288xf32, #tpu.memory_space<vmem>>, %arg6: memref<36x512xf32, #tpu.memory_space<vmem>>) attributes {dimension_semantics = [#tpu.dimension_semantics<arbitrary>], iteration_bounds = array<i64: 1>, scalar_prefetch = 0 : i64, scratch_operands = 2 : i64, tpu.core_type = #tpu.core_type<tc>, window_params = [{pipeline_mode = #tpu.pipeline_mode<synchronous>, transform_indices = @transform_0, window_bounds = array<i64: 2, 4, 16, 16>}, {pipeline_mode = #tpu.pipeline_mode<synchronous>, transform_indices = @transform_1, window_bounds = array<i64: 8, 36>}, {pipeline_mode = #tpu.pipeline_mode<synchronous>, transform_indices = @transform_2, window_bounds = array<i64: 8, 1>}, {pipeline_mode = #tpu.pipeline_mode<synchronous>, transform_indices = @transform_3, window_bounds = array<i64: 2, 8, 256>}]} {
    %cst = arith.constant 0.000000e+00 : f32
    %0 = vector.broadcast %cst : f32 to vector<3x2x4x288xf32>
    %c0 = arith.constant 0 : index
    %c0_0 = arith.constant 0 : index
    %c0_1 = arith.constant 0 : index
    %c0_2 = arith.constant 0 : index
    %1 = vector.load %arg5[%c0, %c0_0, %c0_1, %c0_2] : memref<3x2x4x288xf32, #tpu.memory_space<vmem>>, vector<3x2x4x288xf32>
    tpu.vector_store %arg5[%c0, %c0_0, %c0_1, %c0_2], %0 {strides = array<i32>} : memref<3x2x4x288xf32, #tpu.memory_space<vmem>>, vector<3x2x4x288xf32>,
    %c0_3 = arith.constant 0 : index
    %c0_4 = arith.constant 0 : index
    %c0_5 = arith.constant 0 : index
    %c0_6 = arith.constant 0 : index
    %2 = vector.load %arg1[%c0_3, %c0_4, %c0_5, %c0_6] : memref<2x4x16x16xf32, #tpu.memory_space<vmem>>, vector<2x4x1x15xf32>
    %3 = vector.shape_cast %2 : vector<2x4x1x15xf32> to vector<2x4x15xf32>
    %c0_7 = arith.constant 0 : index
    %c0_8 = arith.constant 0 : index
    %c0_9 = arith.constant 0 : index
    %c17 = arith.constant 17 : index
    %4 = vector.load %arg5[%c0_7, %c0_8, %c0_9, %c17] : memref<3x2x4x288xf32, #tpu.memory_space<vmem>>, vector<1x2x4x15xf32>
    %5 = vector.shape_cast %4 : vector<1x2x4x15xf32> to vector<2x4x15xf32>
    %6 = vector.shape_cast %3 : vector<2x4x15xf32> to vector<1x2x4x15xf32>
    tpu.vector_store %arg5[%c0_7, %c0_8, %c0_9, %c17], %6 {strides = array<i32>} : memref<3x2x4x288xf32, #tpu.memory_space<vmem>>, vector<1x2x4x15xf32>,
    %c0_10 = arith.constant 0 : index
    %c0_11 = arith.constant 0 : index
    %c1 = arith.constant 1 : index
    %c0_12 = arith.constant 0 : index
    %7 = vector.load %arg1[%c0_10, %c0_11, %c1, %c0_12] : memref<2x4x16x16xf32, #tpu.memory_space<vmem>>, vector<2x4x1x15xf32>
    %8 = vector.shape_cast %7 : vector<2x4x1x15xf32> to vector<2x4x15xf32>
    %c0_13 = arith.constant 0 : index
    %c0_14 = arith.constant 0 : index
    %c0_15 = arith.constant 0 : index
    %c33 = arith.constant 33 : index
    %9 = vector.load %arg5[%c0_13, %c0_14, %c0_15, %c33] : memref<3x2x4x288xf32, #tpu.memory_space<vmem>>, vector<1x2x4x15xf32>
    %10 = vector.shape_cast %9 : vector<1x2x4x15xf32> to vector<2x4x15xf32>
    %11 = vector.shape_cast %8 : vector<2x4x15xf32> to vector<1x2x4x15xf32>
    tpu.vector_store %arg5[%c0_13, %c0_14, %c0_15, %c33], %11 {strides = array<i32>} : memref<3x2x4x288xf32, #tpu.memory_space<vmem>>, vector<1x2x4x15xf32>,
    %c0_16 = arith.constant 0 : index
    %c0_17 = arith.constant 0 : index
    %c2 = arith.constant 2 : index
    %c0_18 = arith.constant 0 : index
    %12 = vector.load %arg1[%c0_16, %c0_17, %c2, %c0_18] : memref<2x4x16x16xf32, #tpu.memory_space<vmem>>, vector<2x4x1x15xf32>
    %13 = vector.shape_cast %12 : vector<2x4x1x15xf32> to vector<2x4x15xf32>
    %c0_19 = arith.constant 0 : index
    %c0_20 = arith.constant 0 : index
    %c0_21 = arith.constant 0 : index
    %c49 = arith.constant 49 : index
    %14 = vector.load %arg5[%c0_19, %c0_20, %c0_21, %c49] : memref<3x2x4x288xf32, #tpu.memory_space<vmem>>, vector<1x2x4x15xf32>
    %15 = vector.shape_cast %14 : vector<1x2x4x15xf32> to vector<2x4x15xf32>
    %16 = vector.shape_cast %13 : vector<2x4x15xf32> to vector<1x2x4x15xf32>
    tpu.vector_store %arg5[%c0_19, %c0_20, %c0_21, %c49], %16 {strides = array<i32>} : memref<3x2x4x288xf32, #tpu.memory_space<vmem>>, vector<1x2x4x15xf32>,
    %c0_22 = arith.constant 0 : index
    %c0_23 = arith.constant 0 : index
    %c3 = arith.constant 3 : index
    %c0_24 = arith.constant 0 : index
    %17 = vector.load %arg1[%c0_22, %c0_23, %c3, %c0_24] : memref<2x4x16x16xf32, #tpu.memory_space<vmem>>, vector<2x4x1x15xf32>
    %18 = vector.shape_cast %17 : vector<2x4x1x15xf32> to vector<2x4x15xf32>
    %c0_25 = arith.constant 0 : index
    %c0_26 = arith.constant 0 : index
    %c0_27 = arith.constant 0 : index
    %c65 = arith.constant 65 : index
    %19 = vector.load %arg5[%c0_25, %c0_26, %c0_27, %c65] : memref<3x2x4x288xf32, #tpu.memory_space<vmem>>, vector<1x2x4x15xf32>
    %20 = vector.shape_cast %19 : vector<1x2x4x15xf32> to vector<2x4x15xf32>
    %21 = vector.shape_cast %18 : vector<2x4x15xf32> to vector<1x2x4x15xf32>
    tpu.vector_store %arg5[%c0_25, %c0_26, %c0_27, %c65], %21 {strides = array<i32>} : memref<3x2x4x288xf32, #tpu.memory_space<vmem>>, vector<1x2x4x15xf32>,
    %c0_28 = arith.constant 0 : index
    %c0_29 = arith.constant 0 : index
    %c4 = arith.constant 4 : index
    %c0_30 = arith.constant 0 : index
    %22 = vector.load %arg1[%c0_28, %c0_29, %c4, %c0_30] : memref<2x4x16x16xf32, #tpu.memory_space<vmem>>, vector<2x4x1x15xf32>
    %23 = vector.shape_cast %22 : vector<2x4x1x15xf32> to vector<2x4x15xf32>
    %c0_31 = arith.constant 0 : index
    %c0_32 = arith.constant 0 : index
    %c0_33 = arith.constant 0 : index
    %c81 = arith.constant 81 : index
    %24 = vector.load %arg5[%c0_31, %c0_32, %c0_33, %c81] : memref<3x2x4x288xf32, #tpu.memory_space<vmem>>, vector<1x2x4x15xf32>
    %25 = vector.shape_cast %24 : vector<1x2x4x15xf32> to vector<2x4x15xf32>
    %26 = vector.shape_cast %23 : vector<2x4x15xf32> to vector<1x2x4x15xf32>
    tpu.vector_store %arg5[%c0_31, %c0_32, %c0_33, %c81], %26 {strides = array<i32>} : memref<3x2x4x288xf32, #tpu.memory_space<vmem>>, vector<1x2x4x15xf32>,
    %c0_34 = arith.constant 0 : index
    %c0_35 = arith.constant 0 : index
    %c5 = arith.constant 5 : index
    %c0_36 = arith.constant 0 : index
    %27 = vector.load %arg1[%c0_34, %c0_35, %c5, %c0_36] : memref<2x4x16x16xf32, #tpu.memory_space<vmem>>, vector<2x4x1x15xf32>
    %28 = vector.shape_cast %27 : vector<2x4x1x15xf32> to vector<2x4x15xf32>
    %c0_37 = arith.constant 0 : index
    %c0_38 = arith.constant 0 : index
    %c0_39 = arith.constant 0 : index
    %c97 = arith.constant 97 : index
    %29 = vector.load %arg5[%c0_37, %c0_38, %c0_39, %c97] : memref<3x2x4x288xf32, #tpu.memory_space<vmem>>, vector<1x2x4x15xf32>
    %30 = vector.shape_cast %29 : vector<1x2x4x15xf32> to vector<2x4x15xf32>
    %31 = vector.shape_cast %28 : vector<2x4x15xf32> to vector<1x2x4x15xf32>
    tpu.vector_store %arg5[%c0_37, %c0_38, %c0_39, %c97], %31 {strides = array<i32>} : memref<3x2x4x288xf32, #tpu.memory_space<vmem>>, vector<1x2x4x15xf32>,
    %c0_40 = arith.constant 0 : index
    %c0_41 = arith.constant 0 : index
    %c6 = arith.constant 6 : index
    %c0_42 = arith.constant 0 : index
    %32 = vector.load %arg1[%c0_40, %c0_41, %c6, %c0_42] : memref<2x4x16x16xf32, #tpu.memory_space<vmem>>, vector<2x4x1x15xf32>
    %33 = vector.shape_cast %32 : vector<2x4x1x15xf32> to vector<2x4x15xf32>
    %c0_43 = arith.constant 0 : index
    %c0_44 = arith.constant 0 : index
    %c0_45 = arith.constant 0 : index
    %c113 = arith.constant 113 : index
    %34 = vector.load %arg5[%c0_43, %c0_44, %c0_45, %c113] : memref<3x2x4x288xf32, #tpu.memory_space<vmem>>, vector<1x2x4x15xf32>
    %35 = vector.shape_cast %34 : vector<1x2x4x15xf32> to vector<2x4x15xf32>
    %36 = vector.shape_cast %33 : vector<2x4x15xf32> to vector<1x2x4x15xf32>
    tpu.vector_store %arg5[%c0_43, %c0_44, %c0_45, %c113], %36 {strides = array<i32>} : memref<3x2x4x288xf32, #tpu.memory_space<vmem>>, vector<1x2x4x15xf32>,
    %c0_46 = arith.constant 0 : index
    %c0_47 = arith.constant 0 : index
    %c7 = arith.constant 7 : index
    %c0_48 = arith.constant 0 : index
    %37 = vector.load %arg1[%c0_46, %c0_47, %c7, %c0_48] : memref<2x4x16x16xf32, #tpu.memory_space<vmem>>, vector<2x4x1x15xf32>
    %38 = vector.shape_cast %37 : vector<2x4x1x15xf32> to vector<2x4x15xf32>
    %c0_49 = arith.constant 0 : index
    %c0_50 = arith.constant 0 : index
    %c0_51 = arith.constant 0 : index
    %c129 = arith.constant 129 : index
    %39 = vector.load %arg5[%c0_49, %c0_50, %c0_51, %c129] : memref<3x2x4x288xf32, #tpu.memory_space<vmem>>, vector<1x2x4x15xf32>
    %40 = vector.shape_cast %39 : vector<1x2x4x15xf32> to vector<2x4x15xf32>
    %41 = vector.shape_cast %38 : vector<2x4x15xf32> to vector<1x2x4x15xf32>
    tpu.vector_store %arg5[%c0_49, %c0_50, %c0_51, %c129], %41 {strides = array<i32>} : memref<3x2x4x288xf32, #tpu.memory_space<vmem>>, vector<1x2x4x15xf32>,
    %c0_52 = arith.constant 0 : index
    %c0_53 = arith.constant 0 : index
    %c8 = arith.constant 8 : index
    %c0_54 = arith.constant 0 : index
    %42 = vector.load %arg1[%c0_52, %c0_53, %c8, %c0_54] : memref<2x4x16x16xf32, #tpu.memory_space<vmem>>, vector<2x4x1x15xf32>
    %43 = vector.shape_cast %42 : vector<2x4x1x15xf32> to vector<2x4x15xf32>
    %c0_55 = arith.constant 0 : index
    %c0_56 = arith.constant 0 : index
    %c0_57 = arith.constant 0 : index
    %c145 = arith.constant 145 : index
    %44 = vector.load %arg5[%c0_55, %c0_56, %c0_57, %c145] : memref<3x2x4x288xf32, #tpu.memory_space<vmem>>, vector<1x2x4x15xf32>
    %45 = vector.shape_cast %44 : vector<1x2x4x15xf32> to vector<2x4x15xf32>
    %46 = vector.shape_cast %43 : vector<2x4x15xf32> to vector<1x2x4x15xf32>
    tpu.vector_store %arg5[%c0_55, %c0_56, %c0_57, %c145], %46 {strides = array<i32>} : memref<3x2x4x288xf32, #tpu.memory_space<vmem>>, vector<1x2x4x15xf32>,
    %c0_58 = arith.constant 0 : index
    %c0_59 = arith.constant 0 : index
    %c9 = arith.constant 9 : index
    %c0_60 = arith.constant 0 : index
    %47 = vector.load %arg1[%c0_58, %c0_59, %c9, %c0_60] : memref<2x4x16x16xf32, #tpu.memory_space<vmem>>, vector<2x4x1x15xf32>
    %48 = vector.shape_cast %47 : vector<2x4x1x15xf32> to vector<2x4x15xf32>
    %c0_61 = arith.constant 0 : index
    %c0_62 = arith.constant 0 : index
    %c0_63 = arith.constant 0 : index
    %c161 = arith.constant 161 : index
    %49 = vector.load %arg5[%c0_61, %c0_62, %c0_63, %c161] : memref<3x2x4x288xf32, #tpu.memory_space<vmem>>, vector<1x2x4x15xf32>
    %50 = vector.shape_cast %49 : vector<1x2x4x15xf32> to vector<2x4x15xf32>
    %51 = vector.shape_cast %48 : vector<2x4x15xf32> to vector<1x2x4x15xf32>
    tpu.vector_store %arg5[%c0_61, %c0_62, %c0_63, %c161], %51 {strides = array<i32>} : memref<3x2x4x288xf32, #tpu.memory_space<vmem>>, vector<1x2x4x15xf32>,
    %c0_64 = arith.constant 0 : index
    %c0_65 = arith.constant 0 : index
    %c10 = arith.constant 10 : index
    %c0_66 = arith.constant 0 : index
    %52 = vector.load %arg1[%c0_64, %c0_65, %c10, %c0_66] : memref<2x4x16x16xf32, #tpu.memory_space<vmem>>, vector<2x4x1x15xf32>
    %53 = vector.shape_cast %52 : vector<2x4x1x15xf32> to vector<2x4x15xf32>
    %c0_67 = arith.constant 0 : index
    %c0_68 = arith.constant 0 : index
    %c0_69 = arith.constant 0 : index
    %c177 = arith.constant 177 : index
    %54 = vector.load %arg5[%c0_67, %c0_68, %c0_69, %c177] : memref<3x2x4x288xf32, #tpu.memory_space<vmem>>, vector<1x2x4x15xf32>
    %55 = vector.shape_cast %54 : vector<1x2x4x15xf32> to vector<2x4x15xf32>
    %56 = vector.shape_cast %53 : vector<2x4x15xf32> to vector<1x2x4x15xf32>
    tpu.vector_store %arg5[%c0_67, %c0_68, %c0_69, %c177], %56 {strides = array<i32>} : memref<3x2x4x288xf32, #tpu.memory_space<vmem>>, vector<1x2x4x15xf32>,
    %c0_70 = arith.constant 0 : index
    %c0_71 = arith.constant 0 : index
    %c11 = arith.constant 11 : index
    %c0_72 = arith.constant 0 : index
    %57 = vector.load %arg1[%c0_70, %c0_71, %c11, %c0_72] : memref<2x4x16x16xf32, #tpu.memory_space<vmem>>, vector<2x4x1x15xf32>
    %58 = vector.shape_cast %57 : vector<2x4x1x15xf32> to vector<2x4x15xf32>
    %c0_73 = arith.constant 0 : index
    %c0_74 = arith.constant 0 : index
    %c0_75 = arith.constant 0 : index
    %c193 = arith.constant 193 : index
    %59 = vector.load %arg5[%c0_73, %c0_74, %c0_75, %c193] : memref<3x2x4x288xf32, #tpu.memory_space<vmem>>, vector<1x2x4x15xf32>
    %60 = vector.shape_cast %59 : vector<1x2x4x15xf32> to vector<2x4x15xf32>
    %61 = vector.shape_cast %58 : vector<2x4x15xf32> to vector<1x2x4x15xf32>
    tpu.vector_store %arg5[%c0_73, %c0_74, %c0_75, %c193], %61 {strides = array<i32>} : memref<3x2x4x288xf32, #tpu.memory_space<vmem>>, vector<1x2x4x15xf32>,
    %c0_76 = arith.constant 0 : index
    %c0_77 = arith.constant 0 : index
    %c12 = arith.constant 12 : index
    %c0_78 = arith.constant 0 : index
    %62 = vector.load %arg1[%c0_76, %c0_77, %c12, %c0_78] : memref<2x4x16x16xf32, #tpu.memory_space<vmem>>, vector<2x4x1x15xf32>
    %63 = vector.shape_cast %62 : vector<2x4x1x15xf32> to vector<2x4x15xf32>
    %c0_79 = arith.constant 0 : index
    %c0_80 = arith.constant 0 : index
    %c0_81 = arith.constant 0 : index
    %c209 = arith.constant 209 : index
    %64 = vector.load %arg5[%c0_79, %c0_80, %c0_81, %c209] : memref<3x2x4x288xf32, #tpu.memory_space<vmem>>, vector<1x2x4x15xf32>
    %65 = vector.shape_cast %64 : vector<1x2x4x15xf32> to vector<2x4x15xf32>
    %66 = vector.shape_cast %63 : vector<2x4x15xf32> to vector<1x2x4x15xf32>
    tpu.vector_store %arg5[%c0_79, %c0_80, %c0_81, %c209], %66 {strides = array<i32>} : memref<3x2x4x288xf32, #tpu.memory_space<vmem>>, vector<1x2x4x15xf32>,
    %c0_82 = arith.constant 0 : index
    %c0_83 = arith.constant 0 : index
    %c13 = arith.constant 13 : index
    %c0_84 = arith.constant 0 : index
    %67 = vector.load %arg1[%c0_82, %c0_83, %c13, %c0_84] : memref<2x4x16x16xf32, #tpu.memory_space<vmem>>, vector<2x4x1x15xf32>
    %68 = vector.shape_cast %67 : vector<2x4x1x15xf32> to vector<2x4x15xf32>
    %c0_85 = arith.constant 0 : index
    %c0_86 = arith.constant 0 : index
    %c0_87 = arith.constant 0 : index
    %c225 = arith.constant 225 : index
    %69 = vector.load %arg5[%c0_85, %c0_86, %c0_87, %c225] : memref<3x2x4x288xf32, #tpu.memory_space<vmem>>, vector<1x2x4x15xf32>
    %70 = vector.shape_cast %69 : vector<1x2x4x15xf32> to vector<2x4x15xf32>
    %71 = vector.shape_cast %68 : vector<2x4x15xf32> to vector<1x2x4x15xf32>
    tpu.vector_store %arg5[%c0_85, %c0_86, %c0_87, %c225], %71 {strides = array<i32>} : memref<3x2x4x288xf32, #tpu.memory_space<vmem>>, vector<1x2x4x15xf32>,
    %c0_88 = arith.constant 0 : index
    %c0_89 = arith.constant 0 : index
    %c14 = arith.constant 14 : index
    %c0_90 = arith.constant 0 : index
    %72 = vector.load %arg1[%c0_88, %c0_89, %c14, %c0_90] : memref<2x4x16x16xf32, #tpu.memory_space<vmem>>, vector<2x4x1x15xf32>
    %73 = vector.shape_cast %72 : vector<2x4x1x15xf32> to vector<2x4x15xf32>
    %c0_91 = arith.constant 0 : index
    %c0_92 = arith.constant 0 : index
    %c0_93 = arith.constant 0 : index
    %c241 = arith.constant 241 : index
    %74 = vector.load %arg5[%c0_91, %c0_92, %c0_93, %c241] : memref<3x2x4x288xf32, #tpu.memory_space<vmem>>, vector<1x2x4x15xf32>
    %75 = vector.shape_cast %74 : vector<1x2x4x15xf32> to vector<2x4x15xf32>
    %76 = vector.shape_cast %73 : vector<2x4x15xf32> to vector<1x2x4x15xf32>
    tpu.vector_store %arg5[%c0_91, %c0_92, %c0_93, %c241], %76 {strides = array<i32>} : memref<3x2x4x288xf32, #tpu.memory_space<vmem>>, vector<1x2x4x15xf32>,
    %c0_94 = arith.constant 0 : index
    %c0_95 = arith.constant 0 : index
    %c15 = arith.constant 15 : index
    %c0_96 = arith.constant 0 : index
    %77 = vector.load %arg1[%c0_94, %c0_95, %c15, %c0_96] : memref<2x4x16x16xf32, #tpu.memory_space<vmem>>, vector<2x4x1x15xf32>
    %78 = vector.shape_cast %77 : vector<2x4x1x15xf32> to vector<2x4x15xf32>
    %c0_97 = arith.constant 0 : index
    %c0_98 = arith.constant 0 : index
    %c0_99 = arith.constant 0 : index
    %c257 = arith.constant 257 : index
    %79 = vector.load %arg5[%c0_97, %c0_98, %c0_99, %c257] : memref<3x2x4x288xf32, #tpu.memory_space<vmem>>, vector<1x2x4x15xf32>
    %80 = vector.shape_cast %79 : vector<1x2x4x15xf32> to vector<2x4x15xf32>
    %81 = vector.shape_cast %78 : vector<2x4x15xf32> to vector<1x2x4x15xf32>
    tpu.vector_store %arg5[%c0_97, %c0_98, %c0_99, %c257], %81 {strides = array<i32>} : memref<3x2x4x288xf32, #tpu.memory_space<vmem>>, vector<1x2x4x15xf32>,
    %c0_100 = arith.constant 0 : index
    %c0_101 = arith.constant 0 : index
    %c0_102 = arith.constant 0 : index
    %c0_103 = arith.constant 0 : index
    %82 = vector.load %arg1[%c0_100, %c0_101, %c0_102, %c0_103] : memref<2x4x16x16xf32, #tpu.memory_space<vmem>>, vector<2x4x1x16xf32>
    %83 = vector.shape_cast %82 : vector<2x4x1x16xf32> to vector<2x4x16xf32>
    %c1_104 = arith.constant 1 : index
    %c0_105 = arith.constant 0 : index
    %c0_106 = arith.constant 0 : index
    %c16 = arith.constant 16 : index
    %84 = vector.load %arg5[%c1_104, %c0_105, %c0_106, %c16] : memref<3x2x4x288xf32, #tpu.memory_space<vmem>>, vector<1x2x4x16xf32>
    %85 = vector.shape_cast %84 : vector<1x2x4x16xf32> to vector<2x4x16xf32>
    %86 = vector.shape_cast %83 : vector<2x4x16xf32> to vector<1x2x4x16xf32>
    tpu.vector_store %arg5[%c1_104, %c0_105, %c0_106, %c16], %86 {strides = array<i32>} : memref<3x2x4x288xf32, #tpu.memory_space<vmem>>, vector<1x2x4x16xf32>,
    %c0_107 = arith.constant 0 : index
    %c0_108 = arith.constant 0 : index
    %c1_109 = arith.constant 1 : index
    %c0_110 = arith.constant 0 : index
    %87 = vector.load %arg1[%c0_107, %c0_108, %c1_109, %c0_110] : memref<2x4x16x16xf32, #tpu.memory_space<vmem>>, vector<2x4x1x16xf32>
    %88 = vector.shape_cast %87 : vector<2x4x1x16xf32> to vector<2x4x16xf32>
    %c1_111 = arith.constant 1 : index
    %c0_112 = arith.constant 0 : index
    %c0_113 = arith.constant 0 : index
    %c32 = arith.constant 32 : index
    %89 = vector.load %arg5[%c1_111, %c0_112, %c0_113, %c32] : memref<3x2x4x288xf32, #tpu.memory_space<vmem>>, vector<1x2x4x16xf32>
    %90 = vector.shape_cast %89 : vector<1x2x4x16xf32> to vector<2x4x16xf32>
    %91 = vector.shape_cast %88 : vector<2x4x16xf32> to vector<1x2x4x16xf32>
    tpu.vector_store %arg5[%c1_111, %c0_112, %c0_113, %c32], %91 {strides = array<i32>} : memref<3x2x4x288xf32, #tpu.memory_space<vmem>>, vector<1x2x4x16xf32>,
    %c0_114 = arith.constant 0 : index
    %c0_115 = arith.constant 0 : index
    %c2_116 = arith.constant 2 : index
    %c0_117 = arith.constant 0 : index
    %92 = vector.load %arg1[%c0_114, %c0_115, %c2_116, %c0_117] : memref<2x4x16x16xf32, #tpu.memory_space<vmem>>, vector<2x4x1x16xf32>
    %93 = vector.shape_cast %92 : vector<2x4x1x16xf32> to vector<2x4x16xf32>
    %c1_118 = arith.constant 1 : index
    %c0_119 = arith.constant 0 : index
    %c0_120 = arith.constant 0 : index
    %c48 = arith.constant 48 : index
    %94 = vector.load %arg5[%c1_118, %c0_119, %c0_120, %c48] : memref<3x2x4x288xf32, #tpu.memory_space<vmem>>, vector<1x2x4x16xf32>
    %95 = vector.shape_cast %94 : vector<1x2x4x16xf32> to vector<2x4x16xf32>
    %96 = vector.shape_cast %93 : vector<2x4x16xf32> to vector<1x2x4x16xf32>
    tpu.vector_store %arg5[%c1_118, %c0_119, %c0_120, %c48], %96 {strides = array<i32>} : memref<3x2x4x288xf32, #tpu.memory_space<vmem>>, vector<1x2x4x16xf32>,
    %c0_121 = arith.constant 0 : index
    %c0_122 = arith.constant 0 : index
    %c3_123 = arith.constant 3 : index
    %c0_124 = arith.constant 0 : index
    %97 = vector.load %arg1[%c0_121, %c0_122, %c3_123, %c0_124] : memref<2x4x16x16xf32, #tpu.memory_space<vmem>>, vector<2x4x1x16xf32>
    %98 = vector.shape_cast %97 : vector<2x4x1x16xf32> to vector<2x4x16xf32>
    %c1_125 = arith.constant 1 : index
    %c0_126 = arith.constant 0 : index
    %c0_127 = arith.constant 0 : index
    %c64 = arith.constant 64 : index
    %99 = vector.load %arg5[%c1_125, %c0_126, %c0_127, %c64] : memref<3x2x4x288xf32, #tpu.memory_space<vmem>>, vector<1x2x4x16xf32>
    %100 = vector.shape_cast %99 : vector<1x2x4x16xf32> to vector<2x4x16xf32>
    %101 = vector.shape_cast %98 : vector<2x4x16xf32> to vector<1x2x4x16xf32>
    tpu.vector_store %arg5[%c1_125, %c0_126, %c0_127, %c64], %101 {strides = array<i32>} : memref<3x2x4x288xf32, #tpu.memory_space<vmem>>, vector<1x2x4x16xf32>,
    %c0_128 = arith.constant 0 : index
    %c0_129 = arith.constant 0 : index
    %c4_130 = arith.constant 4 : index
    %c0_131 = arith.constant 0 : index
    %102 = vector.load %arg1[%c0_128, %c0_129, %c4_130, %c0_131] : memref<2x4x16x16xf32, #tpu.memory_space<vmem>>, vector<2x4x1x16xf32>
    %103 = vector.shape_cast %102 : vector<2x4x1x16xf32> to vector<2x4x16xf32>
    %c1_132 = arith.constant 1 : index
    %c0_133 = arith.constant 0 : index
    %c0_134 = arith.constant 0 : index
    %c80 = arith.constant 80 : index
    %104 = vector.load %arg5[%c1_132, %c0_133, %c0_134, %c80] : memref<3x2x4x288xf32, #tpu.memory_space<vmem>>, vector<1x2x4x16xf32>
    %105 = vector.shape_cast %104 : vector<1x2x4x16xf32> to vector<2x4x16xf32>
    %106 = vector.shape_cast %103 : vector<2x4x16xf32> to vector<1x2x4x16xf32>
    tpu.vector_store %arg5[%c1_132, %c0_133, %c0_134, %c80], %106 {strides = array<i32>} : memref<3x2x4x288xf32, #tpu.memory_space<vmem>>, vector<1x2x4x16xf32>,
    %c0_135 = arith.constant 0 : index
    %c0_136 = arith.constant 0 : index
    %c5_137 = arith.constant 5 : index
    %c0_138 = arith.constant 0 : index
    %107 = vector.load %arg1[%c0_135, %c0_136, %c5_137, %c0_138] : memref<2x4x16x16xf32, #tpu.memory_space<vmem>>, vector<2x4x1x16xf32>
    %108 = vector.shape_cast %107 : vector<2x4x1x16xf32> to vector<2x4x16xf32>
    %c1_139 = arith.constant 1 : index
    %c0_140 = arith.constant 0 : index
    %c0_141 = arith.constant 0 : index
    %c96 = arith.constant 96 : index
    %109 = vector.load %arg5[%c1_139, %c0_140, %c0_141, %c96] : memref<3x2x4x288xf32, #tpu.memory_space<vmem>>, vector<1x2x4x16xf32>
    %110 = vector.shape_cast %109 : vector<1x2x4x16xf32> to vector<2x4x16xf32>
    %111 = vector.shape_cast %108 : vector<2x4x16xf32> to vector<1x2x4x16xf32>
    tpu.vector_store %arg5[%c1_139, %c0_140, %c0_141, %c96], %111 {strides = array<i32>} : memref<3x2x4x288xf32, #tpu.memory_space<vmem>>, vector<1x2x4x16xf32>,
    %c0_142 = arith.constant 0 : index
    %c0_143 = arith.constant 0 : index
    %c6_144 = arith.constant 6 : index
    %c0_145 = arith.constant 0 : index
    %112 = vector.load %arg1[%c0_142, %c0_143, %c6_144, %c0_145] : memref<2x4x16x16xf32, #tpu.memory_space<vmem>>, vector<2x4x1x16xf32>
    %113 = vector.shape_cast %112 : vector<2x4x1x16xf32> to vector<2x4x16xf32>
    %c1_146 = arith.constant 1 : index
    %c0_147 = arith.constant 0 : index
    %c0_148 = arith.constant 0 : index
    %c112 = arith.constant 112 : index
    %114 = vector.load %arg5[%c1_146, %c0_147, %c0_148, %c112] : memref<3x2x4x288xf32, #tpu.memory_space<vmem>>, vector<1x2x4x16xf32>
    %115 = vector.shape_cast %114 : vector<1x2x4x16xf32> to vector<2x4x16xf32>
    %116 = vector.shape_cast %113 : vector<2x4x16xf32> to vector<1x2x4x16xf32>
    tpu.vector_store %arg5[%c1_146, %c0_147, %c0_148, %c112], %116 {strides = array<i32>} : memref<3x2x4x288xf32, #tpu.memory_space<vmem>>, vector<1x2x4x16xf32>,
    %c0_149 = arith.constant 0 : index
    %c0_150 = arith.constant 0 : index
    %c7_151 = arith.constant 7 : index
    %c0_152 = arith.constant 0 : index
    %117 = vector.load %arg1[%c0_149, %c0_150, %c7_151, %c0_152] : memref<2x4x16x16xf32, #tpu.memory_space<vmem>>, vector<2x4x1x16xf32>
    %118 = vector.shape_cast %117 : vector<2x4x1x16xf32> to vector<2x4x16xf32>
    %c1_153 = arith.constant 1 : index
    %c0_154 = arith.constant 0 : index
    %c0_155 = arith.constant 0 : index
    %c128 = arith.constant 128 : index
    %119 = vector.load %arg5[%c1_153, %c0_154, %c0_155, %c128] : memref<3x2x4x288xf32, #tpu.memory_space<vmem>>, vector<1x2x4x16xf32>
    %120 = vector.shape_cast %119 : vector<1x2x4x16xf32> to vector<2x4x16xf32>
    %121 = vector.shape_cast %118 : vector<2x4x16xf32> to vector<1x2x4x16xf32>
    tpu.vector_store %arg5[%c1_153, %c0_154, %c0_155, %c128], %121 {strides = array<i32>} : memref<3x2x4x288xf32, #tpu.memory_space<vmem>>, vector<1x2x4x16xf32>,
    %c0_156 = arith.constant 0 : index
    %c0_157 = arith.constant 0 : index
    %c8_158 = arith.constant 8 : index
    %c0_159 = arith.constant 0 : index
    %122 = vector.load %arg1[%c0_156, %c0_157, %c8_158, %c0_159] : memref<2x4x16x16xf32, #tpu.memory_space<vmem>>, vector<2x4x1x16xf32>
    %123 = vector.shape_cast %122 : vector<2x4x1x16xf32> to vector<2x4x16xf32>
    %c1_160 = arith.constant 1 : index
    %c0_161 = arith.constant 0 : index
    %c0_162 = arith.constant 0 : index
    %c144 = arith.constant 144 : index
    %124 = vector.load %arg5[%c1_160, %c0_161, %c0_162, %c144] : memref<3x2x4x288xf32, #tpu.memory_space<vmem>>, vector<1x2x4x16xf32>
    %125 = vector.shape_cast %124 : vector<1x2x4x16xf32> to vector<2x4x16xf32>
    %126 = vector.shape_cast %123 : vector<2x4x16xf32> to vector<1x2x4x16xf32>
    tpu.vector_store %arg5[%c1_160, %c0_161, %c0_162, %c144], %126 {strides = array<i32>} : memref<3x2x4x288xf32, #tpu.memory_space<vmem>>, vector<1x2x4x16xf32>,
    %c0_163 = arith.constant 0 : index
    %c0_164 = arith.constant 0 : index
    %c9_165 = arith.constant 9 : index
    %c0_166 = arith.constant 0 : index
    %127 = vector.load %arg1[%c0_163, %c0_164, %c9_165, %c0_166] : memref<2x4x16x16xf32, #tpu.memory_space<vmem>>, vector<2x4x1x16xf32>
    %128 = vector.shape_cast %127 : vector<2x4x1x16xf32> to vector<2x4x16xf32>
    %c1_167 = arith.constant 1 : index
    %c0_168 = arith.constant 0 : index
    %c0_169 = arith.constant 0 : index
    %c160 = arith.constant 160 : index
    %129 = vector.load %arg5[%c1_167, %c0_168, %c0_169, %c160] : memref<3x2x4x288xf32, #tpu.memory_space<vmem>>, vector<1x2x4x16xf32>
    %130 = vector.shape_cast %129 : vector<1x2x4x16xf32> to vector<2x4x16xf32>
    %131 = vector.shape_cast %128 : vector<2x4x16xf32> to vector<1x2x4x16xf32>
    tpu.vector_store %arg5[%c1_167, %c0_168, %c0_169, %c160], %131 {strides = array<i32>} : memref<3x2x4x288xf32, #tpu.memory_space<vmem>>, vector<1x2x4x16xf32>,
    %c0_170 = arith.constant 0 : index
    %c0_171 = arith.constant 0 : index
    %c10_172 = arith.constant 10 : index
    %c0_173 = arith.constant 0 : index
    %132 = vector.load %arg1[%c0_170, %c0_171, %c10_172, %c0_173] : memref<2x4x16x16xf32, #tpu.memory_space<vmem>>, vector<2x4x1x16xf32>
    %133 = vector.shape_cast %132 : vector<2x4x1x16xf32> to vector<2x4x16xf32>
    %c1_174 = arith.constant 1 : index
    %c0_175 = arith.constant 0 : index
    %c0_176 = arith.constant 0 : index
    %c176 = arith.constant 176 : index
    %134 = vector.load %arg5[%c1_174, %c0_175, %c0_176, %c176] : memref<3x2x4x288xf32, #tpu.memory_space<vmem>>, vector<1x2x4x16xf32>
    %135 = vector.shape_cast %134 : vector<1x2x4x16xf32> to vector<2x4x16xf32>
    %136 = vector.shape_cast %133 : vector<2x4x16xf32> to vector<1x2x4x16xf32>
    tpu.vector_store %arg5[%c1_174, %c0_175, %c0_176, %c176], %136 {strides = array<i32>} : memref<3x2x4x288xf32, #tpu.memory_space<vmem>>, vector<1x2x4x16xf32>,
    %c0_177 = arith.constant 0 : index
    %c0_178 = arith.constant 0 : index
    %c11_179 = arith.constant 11 : index
    %c0_180 = arith.constant 0 : index
    %137 = vector.load %arg1[%c0_177, %c0_178, %c11_179, %c0_180] : memref<2x4x16x16xf32, #tpu.memory_space<vmem>>, vector<2x4x1x16xf32>
    %138 = vector.shape_cast %137 : vector<2x4x1x16xf32> to vector<2x4x16xf32>
    %c1_181 = arith.constant 1 : index
    %c0_182 = arith.constant 0 : index
    %c0_183 = arith.constant 0 : index
    %c192 = arith.constant 192 : index
    %139 = vector.load %arg5[%c1_181, %c0_182, %c0_183, %c192] : memref<3x2x4x288xf32, #tpu.memory_space<vmem>>, vector<1x2x4x16xf32>
    %140 = vector.shape_cast %139 : vector<1x2x4x16xf32> to vector<2x4x16xf32>
    %141 = vector.shape_cast %138 : vector<2x4x16xf32> to vector<1x2x4x16xf32>
    tpu.vector_store %arg5[%c1_181, %c0_182, %c0_183, %c192], %141 {strides = array<i32>} : memref<3x2x4x288xf32, #tpu.memory_space<vmem>>, vector<1x2x4x16xf32>,
    %c0_184 = arith.constant 0 : index
    %c0_185 = arith.constant 0 : index
    %c12_186 = arith.constant 12 : index
    %c0_187 = arith.constant 0 : index
    %142 = vector.load %arg1[%c0_184, %c0_185, %c12_186, %c0_187] : memref<2x4x16x16xf32, #tpu.memory_space<vmem>>, vector<2x4x1x16xf32>
    %143 = vector.shape_cast %142 : vector<2x4x1x16xf32> to vector<2x4x16xf32>
    %c1_188 = arith.constant 1 : index
    %c0_189 = arith.constant 0 : index
    %c0_190 = arith.constant 0 : index
    %c208 = arith.constant 208 : index
    %144 = vector.load %arg5[%c1_188, %c0_189, %c0_190, %c208] : memref<3x2x4x288xf32, #tpu.memory_space<vmem>>, vector<1x2x4x16xf32>
    %145 = vector.shape_cast %144 : vector<1x2x4x16xf32> to vector<2x4x16xf32>
    %146 = vector.shape_cast %143 : vector<2x4x16xf32> to vector<1x2x4x16xf32>
    tpu.vector_store %arg5[%c1_188, %c0_189, %c0_190, %c208], %146 {strides = array<i32>} : memref<3x2x4x288xf32, #tpu.memory_space<vmem>>, vector<1x2x4x16xf32>,
    %c0_191 = arith.constant 0 : index
    %c0_192 = arith.constant 0 : index
    %c13_193 = arith.constant 13 : index
    %c0_194 = arith.constant 0 : index
    %147 = vector.load %arg1[%c0_191, %c0_192, %c13_193, %c0_194] : memref<2x4x16x16xf32, #tpu.memory_space<vmem>>, vector<2x4x1x16xf32>
    %148 = vector.shape_cast %147 : vector<2x4x1x16xf32> to vector<2x4x16xf32>
    %c1_195 = arith.constant 1 : index
    %c0_196 = arith.constant 0 : index
    %c0_197 = arith.constant 0 : index
    %c224 = arith.constant 224 : index
    %149 = vector.load %arg5[%c1_195, %c0_196, %c0_197, %c224] : memref<3x2x4x288xf32, #tpu.memory_space<vmem>>, vector<1x2x4x16xf32>
    %150 = vector.shape_cast %149 : vector<1x2x4x16xf32> to vector<2x4x16xf32>
    %151 = vector.shape_cast %148 : vector<2x4x16xf32> to vector<1x2x4x16xf32>
    tpu.vector_store %arg5[%c1_195, %c0_196, %c0_197, %c224], %151 {strides = array<i32>} : memref<3x2x4x288xf32, #tpu.memory_space<vmem>>, vector<1x2x4x16xf32>,
    %c0_198 = arith.constant 0 : index
    %c0_199 = arith.constant 0 : index
    %c14_200 = arith.constant 14 : index
    %c0_201 = arith.constant 0 : index
    %152 = vector.load %arg1[%c0_198, %c0_199, %c14_200, %c0_201] : memref<2x4x16x16xf32, #tpu.memory_space<vmem>>, vector<2x4x1x16xf32>
    %153 = vector.shape_cast %152 : vector<2x4x1x16xf32> to vector<2x4x16xf32>
    %c1_202 = arith.constant 1 : index
    %c0_203 = arith.constant 0 : index
    %c0_204 = arith.constant 0 : index
    %c240 = arith.constant 240 : index
    %154 = vector.load %arg5[%c1_202, %c0_203, %c0_204, %c240] : memref<3x2x4x288xf32, #tpu.memory_space<vmem>>, vector<1x2x4x16xf32>
    %155 = vector.shape_cast %154 : vector<1x2x4x16xf32> to vector<2x4x16xf32>
    %156 = vector.shape_cast %153 : vector<2x4x16xf32> to vector<1x2x4x16xf32>
    tpu.vector_store %arg5[%c1_202, %c0_203, %c0_204, %c240], %156 {strides = array<i32>} : memref<3x2x4x288xf32, #tpu.memory_space<vmem>>, vector<1x2x4x16xf32>,
    %c0_205 = arith.constant 0 : index
    %c0_206 = arith.constant 0 : index
    %c15_207 = arith.constant 15 : index
    %c0_208 = arith.constant 0 : index
    %157 = vector.load %arg1[%c0_205, %c0_206, %c15_207, %c0_208] : memref<2x4x16x16xf32, #tpu.memory_space<vmem>>, vector<2x4x1x16xf32>
    %158 = vector.shape_cast %157 : vector<2x4x1x16xf32> to vector<2x4x16xf32>
    %c1_209 = arith.constant 1 : index
    %c0_210 = arith.constant 0 : index
    %c0_211 = arith.constant 0 : index
    %c256 = arith.constant 256 : index
    %159 = vector.load %arg5[%c1_209, %c0_210, %c0_211, %c256] : memref<3x2x4x288xf32, #tpu.memory_space<vmem>>, vector<1x2x4x16xf32>
    %160 = vector.shape_cast %159 : vector<1x2x4x16xf32> to vector<2x4x16xf32>
    %161 = vector.shape_cast %158 : vector<2x4x16xf32> to vector<1x2x4x16xf32>
    tpu.vector_store %arg5[%c1_209, %c0_210, %c0_211, %c256], %161 {strides = array<i32>} : memref<3x2x4x288xf32, #tpu.memory_space<vmem>>, vector<1x2x4x16xf32>,
    %c0_212 = arith.constant 0 : index
    %c0_213 = arith.constant 0 : index
    %c0_214 = arith.constant 0 : index
    %c1_215 = arith.constant 1 : index
    %162 = vector.load %arg1[%c0_212, %c0_213, %c0_214, %c1_215] : memref<2x4x16x16xf32, #tpu.memory_space<vmem>>, vector<2x4x1x15xf32>
    %163 = vector.shape_cast %162 : vector<2x4x1x15xf32> to vector<2x4x15xf32>
    %c2_216 = arith.constant 2 : index
    %c0_217 = arith.constant 0 : index
    %c0_218 = arith.constant 0 : index
    %c16_219 = arith.constant 16 : index
    %164 = vector.load %arg5[%c2_216, %c0_217, %c0_218, %c16_219] : memref<3x2x4x288xf32, #tpu.memory_space<vmem>>, vector<1x2x4x15xf32>
    %165 = vector.shape_cast %164 : vector<1x2x4x15xf32> to vector<2x4x15xf32>
    %166 = vector.shape_cast %163 : vector<2x4x15xf32> to vector<1x2x4x15xf32>
    tpu.vector_store %arg5[%c2_216, %c0_217, %c0_218, %c16_219], %166 {strides = array<i32>} : memref<3x2x4x288xf32, #tpu.memory_space<vmem>>, vector<1x2x4x15xf32>,
    %c0_220 = arith.constant 0 : index
    %c0_221 = arith.constant 0 : index
    %c1_222 = arith.constant 1 : index
    %c1_223 = arith.constant 1 : index
    %167 = vector.load %arg1[%c0_220, %c0_221, %c1_222, %c1_223] : memref<2x4x16x16xf32, #tpu.memory_space<vmem>>, vector<2x4x1x15xf32>
    %168 = vector.shape_cast %167 : vector<2x4x1x15xf32> to vector<2x4x15xf32>
    %c2_224 = arith.constant 2 : index
    %c0_225 = arith.constant 0 : index
    %c0_226 = arith.constant 0 : index
    %c32_227 = arith.constant 32 : index
    %169 = vector.load %arg5[%c2_224, %c0_225, %c0_226, %c32_227] : memref<3x2x4x288xf32, #tpu.memory_space<vmem>>, vector<1x2x4x15xf32>
    %170 = vector.shape_cast %169 : vector<1x2x4x15xf32> to vector<2x4x15xf32>
    %171 = vector.shape_cast %168 : vector<2x4x15xf32> to vector<1x2x4x15xf32>
    tpu.vector_store %arg5[%c2_224, %c0_225, %c0_226, %c32_227], %171 {strides = array<i32>} : memref<3x2x4x288xf32, #tpu.memory_space<vmem>>, vector<1x2x4x15xf32>,
    %c0_228 = arith.constant 0 : index
    %c0_229 = arith.constant 0 : index
    %c2_230 = arith.constant 2 : index
    %c1_231 = arith.constant 1 : index
    %172 = vector.load %arg1[%c0_228, %c0_229, %c2_230, %c1_231] : memref<2x4x16x16xf32, #tpu.memory_space<vmem>>, vector<2x4x1x15xf32>
    %173 = vector.shape_cast %172 : vector<2x4x1x15xf32> to vector<2x4x15xf32>
    %c2_232 = arith.constant 2 : index
    %c0_233 = arith.constant 0 : index
    %c0_234 = arith.constant 0 : index
    %c48_235 = arith.constant 48 : index
    %174 = vector.load %arg5[%c2_232, %c0_233, %c0_234, %c48_235] : memref<3x2x4x288xf32, #tpu.memory_space<vmem>>, vector<1x2x4x15xf32>
    %175 = vector.shape_cast %174 : vector<1x2x4x15xf32> to vector<2x4x15xf32>
    %176 = vector.shape_cast %173 : vector<2x4x15xf32> to vector<1x2x4x15xf32>
    tpu.vector_store %arg5[%c2_232, %c0_233, %c0_234, %c48_235], %176 {strides = array<i32>} : memref<3x2x4x288xf32, #tpu.memory_space<vmem>>, vector<1x2x4x15xf32>,
    %c0_236 = arith.constant 0 : index
    %c0_237 = arith.constant 0 : index
    %c3_238 = arith.constant 3 : index
    %c1_239 = arith.constant 1 : index
    %177 = vector.load %arg1[%c0_236, %c0_237, %c3_238, %c1_239] : memref<2x4x16x16xf32, #tpu.memory_space<vmem>>, vector<2x4x1x15xf32>
    %178 = vector.shape_cast %177 : vector<2x4x1x15xf32> to vector<2x4x15xf32>
    %c2_240 = arith.constant 2 : index
    %c0_241 = arith.constant 0 : index
    %c0_242 = arith.constant 0 : index
    %c64_243 = arith.constant 64 : index
    %179 = vector.load %arg5[%c2_240, %c0_241, %c0_242, %c64_243] : memref<3x2x4x288xf32, #tpu.memory_space<vmem>>, vector<1x2x4x15xf32>
    %180 = vector.shape_cast %179 : vector<1x2x4x15xf32> to vector<2x4x15xf32>
    %181 = vector.shape_cast %178 : vector<2x4x15xf32> to vector<1x2x4x15xf32>
    tpu.vector_store %arg5[%c2_240, %c0_241, %c0_242, %c64_243], %181 {strides = array<i32>} : memref<3x2x4x288xf32, #tpu.memory_space<vmem>>, vector<1x2x4x15xf32>,
    %c0_244 = arith.constant 0 : index
    %c0_245 = arith.constant 0 : index
    %c4_246 = arith.constant 4 : index
    %c1_247 = arith.constant 1 : index
    %182 = vector.load %arg1[%c0_244, %c0_245, %c4_246, %c1_247] : memref<2x4x16x16xf32, #tpu.memory_space<vmem>>, vector<2x4x1x15xf32>
    %183 = vector.shape_cast %182 : vector<2x4x1x15xf32> to vector<2x4x15xf32>
    %c2_248 = arith.constant 2 : index
    %c0_249 = arith.constant 0 : index
    %c0_250 = arith.constant 0 : index
    %c80_251 = arith.constant 80 : index
    %184 = vector.load %arg5[%c2_248, %c0_249, %c0_250, %c80_251] : memref<3x2x4x288xf32, #tpu.memory_space<vmem>>, vector<1x2x4x15xf32>
    %185 = vector.shape_cast %184 : vector<1x2x4x15xf32> to vector<2x4x15xf32>
    %186 = vector.shape_cast %183 : vector<2x4x15xf32> to vector<1x2x4x15xf32>
    tpu.vector_store %arg5[%c2_248, %c0_249, %c0_250, %c80_251], %186 {strides = array<i32>} : memref<3x2x4x288xf32, #tpu.memory_space<vmem>>, vector<1x2x4x15xf32>,
    %c0_252 = arith.constant 0 : index
    %c0_253 = arith.constant 0 : index
    %c5_254 = arith.constant 5 : index
    %c1_255 = arith.constant 1 : index
    %187 = vector.load %arg1[%c0_252, %c0_253, %c5_254, %c1_255] : memref<2x4x16x16xf32, #tpu.memory_space<vmem>>, vector<2x4x1x15xf32>
    %188 = vector.shape_cast %187 : vector<2x4x1x15xf32> to vector<2x4x15xf32>
    %c2_256 = arith.constant 2 : index
    %c0_257 = arith.constant 0 : index
    %c0_258 = arith.constant 0 : index
    %c96_259 = arith.constant 96 : index
    %189 = vector.load %arg5[%c2_256, %c0_257, %c0_258, %c96_259] : memref<3x2x4x288xf32, #tpu.memory_space<vmem>>, vector<1x2x4x15xf32>
    %190 = vector.shape_cast %189 : vector<1x2x4x15xf32> to vector<2x4x15xf32>
    %191 = vector.shape_cast %188 : vector<2x4x15xf32> to vector<1x2x4x15xf32>
    tpu.vector_store %arg5[%c2_256, %c0_257, %c0_258, %c96_259], %191 {strides = array<i32>} : memref<3x2x4x288xf32, #tpu.memory_space<vmem>>, vector<1x2x4x15xf32>,
    %c0_260 = arith.constant 0 : index
    %c0_261 = arith.constant 0 : index
    %c6_262 = arith.constant 6 : index
    %c1_263 = arith.constant 1 : index
    %192 = vector.load %arg1[%c0_260, %c0_261, %c6_262, %c1_263] : memref<2x4x16x16xf32, #tpu.memory_space<vmem>>, vector<2x4x1x15xf32>
    %193 = vector.shape_cast %192 : vector<2x4x1x15xf32> to vector<2x4x15xf32>
    %c2_264 = arith.constant 2 : index
    %c0_265 = arith.constant 0 : index
    %c0_266 = arith.constant 0 : index
    %c112_267 = arith.constant 112 : index
    %194 = vector.load %arg5[%c2_264, %c0_265, %c0_266, %c112_267] : memref<3x2x4x288xf32, #tpu.memory_space<vmem>>, vector<1x2x4x15xf32>
    %195 = vector.shape_cast %194 : vector<1x2x4x15xf32> to vector<2x4x15xf32>
    %196 = vector.shape_cast %193 : vector<2x4x15xf32> to vector<1x2x4x15xf32>
    tpu.vector_store %arg5[%c2_264, %c0_265, %c0_266, %c112_267], %196 {strides = array<i32>} : memref<3x2x4x288xf32, #tpu.memory_space<vmem>>, vector<1x2x4x15xf32>,
    %c0_268 = arith.constant 0 : index
    %c0_269 = arith.constant 0 : index
    %c7_270 = arith.constant 7 : index
    %c1_271 = arith.constant 1 : index
    %197 = vector.load %arg1[%c0_268, %c0_269, %c7_270, %c1_271] : memref<2x4x16x16xf32, #tpu.memory_space<vmem>>, vector<2x4x1x15xf32>
    %198 = vector.shape_cast %197 : vector<2x4x1x15xf32> to vector<2x4x15xf32>
    %c2_272 = arith.constant 2 : index
    %c0_273 = arith.constant 0 : index
    %c0_274 = arith.constant 0 : index
    %c128_275 = arith.constant 128 : index
    %199 = vector.load %arg5[%c2_272, %c0_273, %c0_274, %c128_275] : memref<3x2x4x288xf32, #tpu.memory_space<vmem>>, vector<1x2x4x15xf32>
    %200 = vector.shape_cast %199 : vector<1x2x4x15xf32> to vector<2x4x15xf32>
    %201 = vector.shape_cast %198 : vector<2x4x15xf32> to vector<1x2x4x15xf32>
    tpu.vector_store %arg5[%c2_272, %c0_273, %c0_274, %c128_275], %201 {strides = array<i32>} : memref<3x2x4x288xf32, #tpu.memory_space<vmem>>, vector<1x2x4x15xf32>,
    %c0_276 = arith.constant 0 : index
    %c0_277 = arith.constant 0 : index
    %c8_278 = arith.constant 8 : index
    %c1_279 = arith.constant 1 : index
    %202 = vector.load %arg1[%c0_276, %c0_277, %c8_278, %c1_279] : memref<2x4x16x16xf32, #tpu.memory_space<vmem>>, vector<2x4x1x15xf32>
    %203 = vector.shape_cast %202 : vector<2x4x1x15xf32> to vector<2x4x15xf32>
    %c2_280 = arith.constant 2 : index
    %c0_281 = arith.constant 0 : index
    %c0_282 = arith.constant 0 : index
    %c144_283 = arith.constant 144 : index
    %204 = vector.load %arg5[%c2_280, %c0_281, %c0_282, %c144_283] : memref<3x2x4x288xf32, #tpu.memory_space<vmem>>, vector<1x2x4x15xf32>
    %205 = vector.shape_cast %204 : vector<1x2x4x15xf32> to vector<2x4x15xf32>
    %206 = vector.shape_cast %203 : vector<2x4x15xf32> to vector<1x2x4x15xf32>
    tpu.vector_store %arg5[%c2_280, %c0_281, %c0_282, %c144_283], %206 {strides = array<i32>} : memref<3x2x4x288xf32, #tpu.memory_space<vmem>>, vector<1x2x4x15xf32>,
    %c0_284 = arith.constant 0 : index
    %c0_285 = arith.constant 0 : index
    %c9_286 = arith.constant 9 : index
    %c1_287 = arith.constant 1 : index
    %207 = vector.load %arg1[%c0_284, %c0_285, %c9_286, %c1_287] : memref<2x4x16x16xf32, #tpu.memory_space<vmem>>, vector<2x4x1x15xf32>
    %208 = vector.shape_cast %207 : vector<2x4x1x15xf32> to vector<2x4x15xf32>
    %c2_288 = arith.constant 2 : index
    %c0_289 = arith.constant 0 : index
    %c0_290 = arith.constant 0 : index
    %c160_291 = arith.constant 160 : index
    %209 = vector.load %arg5[%c2_288, %c0_289, %c0_290, %c160_291] : memref<3x2x4x288xf32, #tpu.memory_space<vmem>>, vector<1x2x4x15xf32>
    %210 = vector.shape_cast %209 : vector<1x2x4x15xf32> to vector<2x4x15xf32>
    %211 = vector.shape_cast %208 : vector<2x4x15xf32> to vector<1x2x4x15xf32>
    tpu.vector_store %arg5[%c2_288, %c0_289, %c0_290, %c160_291], %211 {strides = array<i32>} : memref<3x2x4x288xf32, #tpu.memory_space<vmem>>, vector<1x2x4x15xf32>,
    %c0_292 = arith.constant 0 : index
    %c0_293 = arith.constant 0 : index
    %c10_294 = arith.constant 10 : index
    %c1_295 = arith.constant 1 : index
    %212 = vector.load %arg1[%c0_292, %c0_293, %c10_294, %c1_295] : memref<2x4x16x16xf32, #tpu.memory_space<vmem>>, vector<2x4x1x15xf32>
    %213 = vector.shape_cast %212 : vector<2x4x1x15xf32> to vector<2x4x15xf32>
    %c2_296 = arith.constant 2 : index
    %c0_297 = arith.constant 0 : index
    %c0_298 = arith.constant 0 : index
    %c176_299 = arith.constant 176 : index
    %214 = vector.load %arg5[%c2_296, %c0_297, %c0_298, %c176_299] : memref<3x2x4x288xf32, #tpu.memory_space<vmem>>, vector<1x2x4x15xf32>
    %215 = vector.shape_cast %214 : vector<1x2x4x15xf32> to vector<2x4x15xf32>
    %216 = vector.shape_cast %213 : vector<2x4x15xf32> to vector<1x2x4x15xf32>
    tpu.vector_store %arg5[%c2_296, %c0_297, %c0_298, %c176_299], %216 {strides = array<i32>} : memref<3x2x4x288xf32, #tpu.memory_space<vmem>>, vector<1x2x4x15xf32>,
    %c0_300 = arith.constant 0 : index
    %c0_301 = arith.constant 0 : index
    %c11_302 = arith.constant 11 : index
    %c1_303 = arith.constant 1 : index
    %217 = vector.load %arg1[%c0_300, %c0_301, %c11_302, %c1_303] : memref<2x4x16x16xf32, #tpu.memory_space<vmem>>, vector<2x4x1x15xf32>
    %218 = vector.shape_cast %217 : vector<2x4x1x15xf32> to vector<2x4x15xf32>
    %c2_304 = arith.constant 2 : index
    %c0_305 = arith.constant 0 : index
    %c0_306 = arith.constant 0 : index
    %c192_307 = arith.constant 192 : index
    %219 = vector.load %arg5[%c2_304, %c0_305, %c0_306, %c192_307] : memref<3x2x4x288xf32, #tpu.memory_space<vmem>>, vector<1x2x4x15xf32>
    %220 = vector.shape_cast %219 : vector<1x2x4x15xf32> to vector<2x4x15xf32>
    %221 = vector.shape_cast %218 : vector<2x4x15xf32> to vector<1x2x4x15xf32>
    tpu.vector_store %arg5[%c2_304, %c0_305, %c0_306, %c192_307], %221 {strides = array<i32>} : memref<3x2x4x288xf32, #tpu.memory_space<vmem>>, vector<1x2x4x15xf32>,
    %c0_308 = arith.constant 0 : index
    %c0_309 = arith.constant 0 : index
    %c12_310 = arith.constant 12 : index
    %c1_311 = arith.constant 1 : index
    %222 = vector.load %arg1[%c0_308, %c0_309, %c12_310, %c1_311] : memref<2x4x16x16xf32, #tpu.memory_space<vmem>>, vector<2x4x1x15xf32>
    %223 = vector.shape_cast %222 : vector<2x4x1x15xf32> to vector<2x4x15xf32>
    %c2_312 = arith.constant 2 : index
    %c0_313 = arith.constant 0 : index
    %c0_314 = arith.constant 0 : index
    %c208_315 = arith.constant 208 : index
    %224 = vector.load %arg5[%c2_312, %c0_313, %c0_314, %c208_315] : memref<3x2x4x288xf32, #tpu.memory_space<vmem>>, vector<1x2x4x15xf32>
    %225 = vector.shape_cast %224 : vector<1x2x4x15xf32> to vector<2x4x15xf32>
    %226 = vector.shape_cast %223 : vector<2x4x15xf32> to vector<1x2x4x15xf32>
    tpu.vector_store %arg5[%c2_312, %c0_313, %c0_314, %c208_315], %226 {strides = array<i32>} : memref<3x2x4x288xf32, #tpu.memory_space<vmem>>, vector<1x2x4x15xf32>,
    %c0_316 = arith.constant 0 : index
    %c0_317 = arith.constant 0 : index
    %c13_318 = arith.constant 13 : index
    %c1_319 = arith.constant 1 : index
    %227 = vector.load %arg1[%c0_316, %c0_317, %c13_318, %c1_319] : memref<2x4x16x16xf32, #tpu.memory_space<vmem>>, vector<2x4x1x15xf32>
    %228 = vector.shape_cast %227 : vector<2x4x1x15xf32> to vector<2x4x15xf32>
    %c2_320 = arith.constant 2 : index
    %c0_321 = arith.constant 0 : index
    %c0_322 = arith.constant 0 : index
    %c224_323 = arith.constant 224 : index
    %229 = vector.load %arg5[%c2_320, %c0_321, %c0_322, %c224_323] : memref<3x2x4x288xf32, #tpu.memory_space<vmem>>, vector<1x2x4x15xf32>
    %230 = vector.shape_cast %229 : vector<1x2x4x15xf32> to vector<2x4x15xf32>
    %231 = vector.shape_cast %228 : vector<2x4x15xf32> to vector<1x2x4x15xf32>
    tpu.vector_store %arg5[%c2_320, %c0_321, %c0_322, %c224_323], %231 {strides = array<i32>} : memref<3x2x4x288xf32, #tpu.memory_space<vmem>>, vector<1x2x4x15xf32>,
    %c0_324 = arith.constant 0 : index
    %c0_325 = arith.constant 0 : index
    %c14_326 = arith.constant 14 : index
    %c1_327 = arith.constant 1 : index
    %232 = vector.load %arg1[%c0_324, %c0_325, %c14_326, %c1_327] : memref<2x4x16x16xf32, #tpu.memory_space<vmem>>, vector<2x4x1x15xf32>
    %233 = vector.shape_cast %232 : vector<2x4x1x15xf32> to vector<2x4x15xf32>
    %c2_328 = arith.constant 2 : index
    %c0_329 = arith.constant 0 : index
    %c0_330 = arith.constant 0 : index
    %c240_331 = arith.constant 240 : index
    %234 = vector.load %arg5[%c2_328, %c0_329, %c0_330, %c240_331] : memref<3x2x4x288xf32, #tpu.memory_space<vmem>>, vector<1x2x4x15xf32>
    %235 = vector.shape_cast %234 : vector<1x2x4x15xf32> to vector<2x4x15xf32>
    %236 = vector.shape_cast %233 : vector<2x4x15xf32> to vector<1x2x4x15xf32>
    tpu.vector_store %arg5[%c2_328, %c0_329, %c0_330, %c240_331], %236 {strides = array<i32>} : memref<3x2x4x288xf32, #tpu.memory_space<vmem>>, vector<1x2x4x15xf32>,
    %c0_332 = arith.constant 0 : index
    %c0_333 = arith.constant 0 : index
    %c15_334 = arith.constant 15 : index
    %c1_335 = arith.constant 1 : index
    %237 = vector.load %arg1[%c0_332, %c0_333, %c15_334, %c1_335] : memref<2x4x16x16xf32, #tpu.memory_space<vmem>>, vector<2x4x1x15xf32>
    %238 = vector.shape_cast %237 : vector<2x4x1x15xf32> to vector<2x4x15xf32>
    %c2_336 = arith.constant 2 : index
    %c0_337 = arith.constant 0 : index
    %c0_338 = arith.constant 0 : index
    %c256_339 = arith.constant 256 : index
    %239 = vector.load %arg5[%c2_336, %c0_337, %c0_338, %c256_339] : memref<3x2x4x288xf32, #tpu.memory_space<vmem>>, vector<1x2x4x15xf32>
    %240 = vector.shape_cast %239 : vector<1x2x4x15xf32> to vector<2x4x15xf32>
    %241 = vector.shape_cast %238 : vector<2x4x15xf32> to vector<1x2x4x15xf32>
    tpu.vector_store %arg5[%c2_336, %c0_337, %c0_338, %c256_339], %241 {strides = array<i32>} : memref<3x2x4x288xf32, #tpu.memory_space<vmem>>, vector<1x2x4x15xf32>,
    %c0_340 = arith.constant 0 : index
    %c0_341 = arith.constant 0 : index
    %c0_342 = arith.constant 0 : index
    %c0_343 = arith.constant 0 : index
    %242 = vector.load %arg5[%c0_340, %c0_341, %c0_342, %c0_343] : memref<3x2x4x288xf32, #tpu.memory_space<vmem>>, vector<1x1x4x256xf32>
    %243 = vector.shape_cast %242 : vector<1x1x4x256xf32> to vector<4x256xf32>
    %c0_344 = arith.constant 0 : index
    %c0_345 = arith.constant 0 : index
    %244 = vector.load %arg6[%c0_344, %c0_345] : memref<36x512xf32, #tpu.memory_space<vmem>>, vector<4x256xf32>
    tpu.vector_store %arg6[%c0_344, %c0_345], %243 {strides = array<i32>} : memref<36x512xf32, #tpu.memory_space<vmem>>, vector<4x256xf32>,
    %c0_346 = arith.constant 0 : index
    %c1_347 = arith.constant 1 : index
    %c0_348 = arith.constant 0 : index
    %c0_349 = arith.constant 0 : index
    %245 = vector.load %arg5[%c0_346, %c1_347, %c0_348, %c0_349] : memref<3x2x4x288xf32, #tpu.memory_space<vmem>>, vector<1x1x4x256xf32>
    %246 = vector.shape_cast %245 : vector<1x1x4x256xf32> to vector<4x256xf32>
    %c0_350 = arith.constant 0 : index
    %c256_351 = arith.constant 256 : index
    %247 = vector.load %arg6[%c0_350, %c256_351] : memref<36x512xf32, #tpu.memory_space<vmem>>, vector<4x256xf32>
    tpu.vector_store %arg6[%c0_350, %c256_351], %246 {strides = array<i32>} : memref<36x512xf32, #tpu.memory_space<vmem>>, vector<4x256xf32>,
    %c1_352 = arith.constant 1 : index
    %c0_353 = arith.constant 0 : index
    %c0_354 = arith.constant 0 : index
    %c0_355 = arith.constant 0 : index
    %248 = vector.load %arg5[%c1_352, %c0_353, %c0_354, %c0_355] : memref<3x2x4x288xf32, #tpu.memory_space<vmem>>, vector<1x1x4x256xf32>
    %249 = vector.shape_cast %248 : vector<1x1x4x256xf32> to vector<4x256xf32>
    %c4_356 = arith.constant 4 : index
    %c0_357 = arith.constant 0 : index
    %250 = vector.load %arg6[%c4_356, %c0_357] : memref<36x512xf32, #tpu.memory_space<vmem>>, vector<4x256xf32>
    tpu.vector_store %arg6[%c4_356, %c0_357], %249 {strides = array<i32>} : memref<36x512xf32, #tpu.memory_space<vmem>>, vector<4x256xf32>,
    %c1_358 = arith.constant 1 : index
    %c1_359 = arith.constant 1 : index
    %c0_360 = arith.constant 0 : index
    %c0_361 = arith.constant 0 : index
    %251 = vector.load %arg5[%c1_358, %c1_359, %c0_360, %c0_361] : memref<3x2x4x288xf32, #tpu.memory_space<vmem>>, vector<1x1x4x256xf32>
    %252 = vector.shape_cast %251 : vector<1x1x4x256xf32> to vector<4x256xf32>
    %c4_362 = arith.constant 4 : index
    %c256_363 = arith.constant 256 : index
    %253 = vector.load %arg6[%c4_362, %c256_363] : memref<36x512xf32, #tpu.memory_space<vmem>>, vector<4x256xf32>
    tpu.vector_store %arg6[%c4_362, %c256_363], %252 {strides = array<i32>} : memref<36x512xf32, #tpu.memory_space<vmem>>, vector<4x256xf32>,
    %c2_364 = arith.constant 2 : index
    %c0_365 = arith.constant 0 : index
    %c0_366 = arith.constant 0 : index
    %c0_367 = arith.constant 0 : index
    %254 = vector.load %arg5[%c2_364, %c0_365, %c0_366, %c0_367] : memref<3x2x4x288xf32, #tpu.memory_space<vmem>>, vector<1x1x4x256xf32>
    %255 = vector.shape_cast %254 : vector<1x1x4x256xf32> to vector<4x256xf32>
    %c8_368 = arith.constant 8 : index
    %c0_369 = arith.constant 0 : index
    %256 = vector.load %arg6[%c8_368, %c0_369] : memref<36x512xf32, #tpu.memory_space<vmem>>, vector<4x256xf32>
    tpu.vector_store %arg6[%c8_368, %c0_369], %255 {strides = array<i32>} : memref<36x512xf32, #tpu.memory_space<vmem>>, vector<4x256xf32>,
    %c2_370 = arith.constant 2 : index
    %c1_371 = arith.constant 1 : index
    %c0_372 = arith.constant 0 : index
    %c0_373 = arith.constant 0 : index
    %257 = vector.load %arg5[%c2_370, %c1_371, %c0_372, %c0_373] : memref<3x2x4x288xf32, #tpu.memory_space<vmem>>, vector<1x1x4x256xf32>
    %258 = vector.shape_cast %257 : vector<1x1x4x256xf32> to vector<4x256xf32>
    %c8_374 = arith.constant 8 : index
    %c256_375 = arith.constant 256 : index
    %259 = vector.load %arg6[%c8_374, %c256_375] : memref<36x512xf32, #tpu.memory_space<vmem>>, vector<4x256xf32>
    tpu.vector_store %arg6[%c8_374, %c256_375], %258 {strides = array<i32>} : memref<36x512xf32, #tpu.memory_space<vmem>>, vector<4x256xf32>,
    %c0_376 = arith.constant 0 : index
    %c0_377 = arith.constant 0 : index
    %c0_378 = arith.constant 0 : index
    %c16_379 = arith.constant 16 : index
    %260 = vector.load %arg5[%c0_376, %c0_377, %c0_378, %c16_379] : memref<3x2x4x288xf32, #tpu.memory_space<vmem>>, vector<1x1x4x256xf32>
    %261 = vector.shape_cast %260 : vector<1x1x4x256xf32> to vector<4x256xf32>
    %c12_380 = arith.constant 12 : index
    %c0_381 = arith.constant 0 : index
    %262 = vector.load %arg6[%c12_380, %c0_381] : memref<36x512xf32, #tpu.memory_space<vmem>>, vector<4x256xf32>
    tpu.vector_store %arg6[%c12_380, %c0_381], %261 {strides = array<i32>} : memref<36x512xf32, #tpu.memory_space<vmem>>, vector<4x256xf32>,
    %c0_382 = arith.constant 0 : index
    %c1_383 = arith.constant 1 : index
    %c0_384 = arith.constant 0 : index
    %c16_385 = arith.constant 16 : index
    %263 = vector.load %arg5[%c0_382, %c1_383, %c0_384, %c16_385] : memref<3x2x4x288xf32, #tpu.memory_space<vmem>>, vector<1x1x4x256xf32>
    %264 = vector.shape_cast %263 : vector<1x1x4x256xf32> to vector<4x256xf32>
    %c12_386 = arith.constant 12 : index
    %c256_387 = arith.constant 256 : index
    %265 = vector.load %arg6[%c12_386, %c256_387] : memref<36x512xf32, #tpu.memory_space<vmem>>, vector<4x256xf32>
    tpu.vector_store %arg6[%c12_386, %c256_387], %264 {strides = array<i32>} : memref<36x512xf32, #tpu.memory_space<vmem>>, vector<4x256xf32>,
    %c1_388 = arith.constant 1 : index
    %c0_389 = arith.constant 0 : index
    %c0_390 = arith.constant 0 : index
    %c16_391 = arith.constant 16 : index
    %266 = vector.load %arg5[%c1_388, %c0_389, %c0_390, %c16_391] : memref<3x2x4x288xf32, #tpu.memory_space<vmem>>, vector<1x1x4x256xf32>
    %267 = vector.shape_cast %266 : vector<1x1x4x256xf32> to vector<4x256xf32>
    %c16_392 = arith.constant 16 : index
    %c0_393 = arith.constant 0 : index
    %268 = vector.load %arg6[%c16_392, %c0_393] : memref<36x512xf32, #tpu.memory_space<vmem>>, vector<4x256xf32>
    tpu.vector_store %arg6[%c16_392, %c0_393], %267 {strides = array<i32>} : memref<36x512xf32, #tpu.memory_space<vmem>>, vector<4x256xf32>,
    %c1_394 = arith.constant 1 : index
    %c1_395 = arith.constant 1 : index
    %c0_396 = arith.constant 0 : index
    %c16_397 = arith.constant 16 : index
    %269 = vector.load %arg5[%c1_394, %c1_395, %c0_396, %c16_397] : memref<3x2x4x288xf32, #tpu.memory_space<vmem>>, vector<1x1x4x256xf32>
    %270 = vector.shape_cast %269 : vector<1x1x4x256xf32> to vector<4x256xf32>
    %c16_398 = arith.constant 16 : index
    %c256_399 = arith.constant 256 : index
    %271 = vector.load %arg6[%c16_398, %c256_399] : memref<36x512xf32, #tpu.memory_space<vmem>>, vector<4x256xf32>
    tpu.vector_store %arg6[%c16_398, %c256_399], %270 {strides = array<i32>} : memref<36x512xf32, #tpu.memory_space<vmem>>, vector<4x256xf32>,
    %c2_400 = arith.constant 2 : index
    %c0_401 = arith.constant 0 : index
    %c0_402 = arith.constant 0 : index
    %c16_403 = arith.constant 16 : index
    %272 = vector.load %arg5[%c2_400, %c0_401, %c0_402, %c16_403] : memref<3x2x4x288xf32, #tpu.memory_space<vmem>>, vector<1x1x4x256xf32>
    %273 = vector.shape_cast %272 : vector<1x1x4x256xf32> to vector<4x256xf32>
    %c20 = arith.constant 20 : index
    %c0_404 = arith.constant 0 : index
    %274 = vector.load %arg6[%c20, %c0_404] : memref<36x512xf32, #tpu.memory_space<vmem>>, vector<4x256xf32>
    tpu.vector_store %arg6[%c20, %c0_404], %273 {strides = array<i32>} : memref<36x512xf32, #tpu.memory_space<vmem>>, vector<4x256xf32>,
    %c2_405 = arith.constant 2 : index
    %c1_406 = arith.constant 1 : index
    %c0_407 = arith.constant 0 : index
    %c16_408 = arith.constant 16 : index
    %275 = vector.load %arg5[%c2_405, %c1_406, %c0_407, %c16_408] : memref<3x2x4x288xf32, #tpu.memory_space<vmem>>, vector<1x1x4x256xf32>
    %276 = vector.shape_cast %275 : vector<1x1x4x256xf32> to vector<4x256xf32>
    %c20_409 = arith.constant 20 : index
    %c256_410 = arith.constant 256 : index
    %277 = vector.load %arg6[%c20_409, %c256_410] : memref<36x512xf32, #tpu.memory_space<vmem>>, vector<4x256xf32>
    tpu.vector_store %arg6[%c20_409, %c256_410], %276 {strides = array<i32>} : memref<36x512xf32, #tpu.memory_space<vmem>>, vector<4x256xf32>,
    %c0_411 = arith.constant 0 : index
    %c0_412 = arith.constant 0 : index
    %c0_413 = arith.constant 0 : index
    %c32_414 = arith.constant 32 : index
    %278 = vector.load %arg5[%c0_411, %c0_412, %c0_413, %c32_414] : memref<3x2x4x288xf32, #tpu.memory_space<vmem>>, vector<1x1x4x256xf32>
    %279 = vector.shape_cast %278 : vector<1x1x4x256xf32> to vector<4x256xf32>
    %c24 = arith.constant 24 : index
    %c0_415 = arith.constant 0 : index
    %280 = vector.load %arg6[%c24, %c0_415] : memref<36x512xf32, #tpu.memory_space<vmem>>, vector<4x256xf32>
    tpu.vector_store %arg6[%c24, %c0_415], %279 {strides = array<i32>} : memref<36x512xf32, #tpu.memory_space<vmem>>, vector<4x256xf32>,
    %c0_416 = arith.constant 0 : index
    %c1_417 = arith.constant 1 : index
    %c0_418 = arith.constant 0 : index
    %c32_419 = arith.constant 32 : index
    %281 = vector.load %arg5[%c0_416, %c1_417, %c0_418, %c32_419] : memref<3x2x4x288xf32, #tpu.memory_space<vmem>>, vector<1x1x4x256xf32>
    %282 = vector.shape_cast %281 : vector<1x1x4x256xf32> to vector<4x256xf32>
    %c24_420 = arith.constant 24 : index
    %c256_421 = arith.constant 256 : index
    %283 = vector.load %arg6[%c24_420, %c256_421] : memref<36x512xf32, #tpu.memory_space<vmem>>, vector<4x256xf32>
    tpu.vector_store %arg6[%c24_420, %c256_421], %282 {strides = array<i32>} : memref<36x512xf32, #tpu.memory_space<vmem>>, vector<4x256xf32>,
    %c1_422 = arith.constant 1 : index
    %c0_423 = arith.constant 0 : index
    %c0_424 = arith.constant 0 : index
    %c32_425 = arith.constant 32 : index
    %284 = vector.load %arg5[%c1_422, %c0_423, %c0_424, %c32_425] : memref<3x2x4x288xf32, #tpu.memory_space<vmem>>, vector<1x1x4x256xf32>
    %285 = vector.shape_cast %284 : vector<1x1x4x256xf32> to vector<4x256xf32>
    %c28 = arith.constant 28 : index
    %c0_426 = arith.constant 0 : index
    %286 = vector.load %arg6[%c28, %c0_426] : memref<36x512xf32, #tpu.memory_space<vmem>>, vector<4x256xf32>
    tpu.vector_store %arg6[%c28, %c0_426], %285 {strides = array<i32>} : memref<36x512xf32, #tpu.memory_space<vmem>>, vector<4x256xf32>,
    %c1_427 = arith.constant 1 : index
    %c1_428 = arith.constant 1 : index
    %c0_429 = arith.constant 0 : index
    %c32_430 = arith.constant 32 : index
    %287 = vector.load %arg5[%c1_427, %c1_428, %c0_429, %c32_430] : memref<3x2x4x288xf32, #tpu.memory_space<vmem>>, vector<1x1x4x256xf32>
    %288 = vector.shape_cast %287 : vector<1x1x4x256xf32> to vector<4x256xf32>
    %c28_431 = arith.constant 28 : index
    %c256_432 = arith.constant 256 : index
    %289 = vector.load %arg6[%c28_431, %c256_432] : memref<36x512xf32, #tpu.memory_space<vmem>>, vector<4x256xf32>
    tpu.vector_store %arg6[%c28_431, %c256_432], %288 {strides = array<i32>} : memref<36x512xf32, #tpu.memory_space<vmem>>, vector<4x256xf32>,
    %c2_433 = arith.constant 2 : index
    %c0_434 = arith.constant 0 : index
    %c0_435 = arith.constant 0 : index
    %c32_436 = arith.constant 32 : index
    %290 = vector.load %arg5[%c2_433, %c0_434, %c0_435, %c32_436] : memref<3x2x4x288xf32, #tpu.memory_space<vmem>>, vector<1x1x4x256xf32>
    %291 = vector.shape_cast %290 : vector<1x1x4x256xf32> to vector<4x256xf32>
    %c32_437 = arith.constant 32 : index
    %c0_438 = arith.constant 0 : index
    %292 = vector.load %arg6[%c32_437, %c0_438] : memref<36x512xf32, #tpu.memory_space<vmem>>, vector<4x256xf32>
    tpu.vector_store %arg6[%c32_437, %c0_438], %291 {strides = array<i32>} : memref<36x512xf32, #tpu.memory_space<vmem>>, vector<4x256xf32>,
    %c2_439 = arith.constant 2 : index
    %c1_440 = arith.constant 1 : index
    %c0_441 = arith.constant 0 : index
    %c32_442 = arith.constant 32 : index
    %293 = vector.load %arg5[%c2_439, %c1_440, %c0_441, %c32_442] : memref<3x2x4x288xf32, #tpu.memory_space<vmem>>, vector<1x1x4x256xf32>
    %294 = vector.shape_cast %293 : vector<1x1x4x256xf32> to vector<4x256xf32>
    %c32_443 = arith.constant 32 : index
    %c256_444 = arith.constant 256 : index
    %295 = vector.load %arg6[%c32_443, %c256_444] : memref<36x512xf32, #tpu.memory_space<vmem>>, vector<4x256xf32>
    tpu.vector_store %arg6[%c32_443, %c256_444], %294 {strides = array<i32>} : memref<36x512xf32, #tpu.memory_space<vmem>>, vector<4x256xf32>,
    %c0_445 = arith.constant 0 : index
    %c0_446 = arith.constant 0 : index
    %296 = vector.load %arg2[%c0_445, %c0_446] : memref<8x36xf32, #tpu.memory_space<vmem>>, vector<8x36xf32>
    %c0_447 = arith.constant 0 : index
    %c0_448 = arith.constant 0 : index
    %297 = vector.load %arg6[%c0_447, %c0_448] : memref<36x512xf32, #tpu.memory_space<vmem>>, vector<36x512xf32>
    %cst_449 = arith.constant dense<0.000000e+00> : vector<8x512xf32>
    %298 = tpu.matmul %296, %297, %cst_449 {dimension_numbers = #tpu.dot_dimension_numbers<[1], [0], [0], [1], [0, 0, 1, 1], [], []>} : vector<8x36xf32>, vector<36x512xf32>, vector<8x512xf32> -> vector<8x512xf32>
    %c0_450 = arith.constant 0 : index
    %c0_451 = arith.constant 0 : index
    %299 = vector.load %arg3[%c0_450, %c0_451] : memref<8x1xf32, #tpu.memory_space<vmem>>, vector<8x1xf32>
    %300 = vector.broadcast %299 : vector<8x1xf32> to vector<8x512xf32>
    %301 = arith.addf %298, %300 : vector<8x512xf32>
    %302 = arith.negf %301 : vector<8x512xf32>
    %303 = math.exp %302 : vector<8x512xf32>
    %cst_452 = arith.constant 1.000000e+00 : f32
    %304 = vector.broadcast %cst_452 : f32 to vector<8x512xf32>
    %305 = arith.addf %304, %303 : vector<8x512xf32>
    %306 = arith.divf %304, %305 : vector<8x512xf32>
    %307 = arith.mulf %301, %306 : vector<8x512xf32>
    %308 = vector.extract_strided_slice %307 {offsets = [0, 0], sizes = [8, 256], strides = [1, 1]} : vector<8x512xf32> to vector<8x256xf32>
    %c0_453 = arith.constant 0 : index
    %c0_454 = arith.constant 0 : index
    %c0_455 = arith.constant 0 : index
    %309 = vector.load %arg4[%c0_453, %c0_454, %c0_455] : memref<2x8x256xf32, #tpu.memory_space<vmem>>, vector<1x8x256xf32>
    %310 = vector.shape_cast %309 : vector<1x8x256xf32> to vector<8x256xf32>
    %311 = vector.shape_cast %308 : vector<8x256xf32> to vector<1x8x256xf32>
    tpu.vector_store %arg4[%c0_453, %c0_454, %c0_455], %311 {strides = array<i32>} : memref<2x8x256xf32, #tpu.memory_space<vmem>>, vector<1x8x256xf32>,
    %312 = vector.extract_strided_slice %307 {offsets = [0, 256], sizes = [8, 256], strides = [1, 1]} : vector<8x512xf32> to vector<8x256xf32>
    %c1_456 = arith.constant 1 : index
    %c0_457 = arith.constant 0 : index
    %c0_458 = arith.constant 0 : index
    %313 = vector.load %arg4[%c1_456, %c0_457, %c0_458] : memref<2x8x256xf32, #tpu.memory_space<vmem>>, vector<1x8x256xf32>
    %314 = vector.shape_cast %313 : vector<1x8x256xf32> to vector<8x256xf32>
    %315 = vector.shape_cast %312 : vector<8x256xf32> to vector<1x8x256xf32>
    tpu.vector_store %arg4[%c1_456, %c0_457, %c0_458], %315 {strides = array<i32>} : memref<2x8x256xf32, #tpu.memory_space<vmem>>, vector<1x8x256xf32>,
    return
  }
  func.func @transform_0(%arg0: i32) -> (i32, i32, i32, i32) {
    %c0_i32 = arith.constant 0 : i32
    %c0_i32_0 = arith.constant 0 : i32
    %c0_i32_1 = arith.constant 0 : i32
    %c0_i32_2 = arith.constant 0 : i32
    %c0_i32_3 = arith.constant 0 : i32
    return %c0_i32, %c0_i32_0, %c0_i32_1, %c0_i32_2 : i32, i32, i32, i32
  }
  func.func @transform_1(%arg0: i32) -> (i32, i32) {
    %c0_i32 = arith.constant 0 : i32
    %c0_i32_0 = arith.constant 0 : i32
    %c0_i32_1 = arith.constant 0 : i32
    return %c0_i32, %c0_i32_0 : i32, i32
  }
  func.func @transform_2(%arg0: i32) -> (i32, i32) {
    %c0_i32 = arith.constant 0 : i32
    %c0_i32_0 = arith.constant 0 : i32
    %c0_i32_1 = arith.constant 0 : i32
    return %c0_i32, %c0_i32_0 : i32, i32
  }
  func.func @transform_3(%arg0: i32) -> (i32, i32, i32) {
    %c0_i32 = arith.constant 0 : i32
    %c0_i32_0 = arith.constant 0 : i32
    %c0_i32_1 = arith.constant 0 : i32
    %c0_i32_2 = arith.constant 0 : i32
    return %c0_i32, %c0_i32_0, %c0_i32_1 : i32, i32, i32
  }
}

</mosaic_0001>

<llo_original>
// kernel: conv_bn_silu.1
$region0: #{conv_bn_silu.1}
  #allocation0 [shape = 'u32[]', space=smem, size = 0x4, offset = 0x4, fixed_abs, tag = 'smem constant byte address 0x4 - core index']
  #allocation1 [shape = 'u32[144,128]{1,0:T(1,128)}', space=vmem, size = 0x12000, scoped, tag = 'internal scratch']
  #allocation2 [shape = 'f32[3,2,4,288]{3,2,1,0:T(4,128)}', space=vmem, size = 0x9000, scoped, tag = 'scratch operand']
  #allocation3 [shape = 'f32[36,512]{1,0:T(8,128)}', space=vmem, size = 0x14000, scoped, tag = 'scratch operand']
  %s0 = inlined_call_operand.vmem [shape: f32[2,4,16,16], index: 0, kind: input, shape index: {}]
  %s1 = inlined_call_operand.vmem [shape: f32[8,36], index: 1, kind: input, shape index: {}]
  %s2 = inlined_call_operand.vmem [shape: f32[8,1], index: 2, kind: input, shape index: {}]
  %s3 = inlined_call_operand.vmem [shape: f32[2,8,256], index: 3, kind: output, shape index: {}]
  %s4 = sld [smem:[#allocation0]]
  $region22: #{conv_bn_silu.1} parent=0
    _
  %s6 = ssub.s32 1, %s4
  %s7 = scalar_select 0, %s6, %s4
  // Predicated region
  $region2: #{conv_bn_silu.1} parent=0 // pred_check
    _
  $region3: #{conv_bn_silu.1} parent=0 // pred_check_branch
    %9 = sbr.rel (0) target = $region5
  $region4: #{conv_bn_silu.1} parent=0 // pred_region
    _
  $region5: #{conv_bn_silu.1} parent=0 // pred_fallthru
    _
  // Predicated region
  $region6: #{conv_bn_silu.1} parent=0 // pred_check
    _
  $region7: #{conv_bn_silu.1} parent=0 // pred_check_branch
    %11 = sbr.rel (0) target = $region9
  $region8: #{conv_bn_silu.1} parent=0 // pred_region
    _
  $region9: #{conv_bn_silu.1} parent=0 // pred_fallthru
    _
  // Predicated region
  $region10: #{conv_bn_silu.1} parent=0 // pred_check
    _
  $region11: #{conv_bn_silu.1} parent=0 // pred_check_branch
    %13 = sbr.rel (0) target = $region13
  $region12: #{conv_bn_silu.1} parent=0 // pred_region
    _
  $region13: #{conv_bn_silu.1} parent=0 // pred_fallthru
    _
  %14 = vst [vmem:[#allocation2] sm:$0xff] 0.0
  %vm15 = vcmask 257024
  %16 = vst.msk [vmem:[#allocation2 + $0x8] sm:$0xf] %vm15, 0.0
  %17 = vst [vmem:[#allocation2 + $0xc] sm:$0xff] 0.0
  %18 = vst.msk [vmem:[#allocation2 + $0x14] sm:$0xf] %vm15, 0.0
  %19 = vst [vmem:[#allocation2 + $0x18] sm:$0xff] 0.0
  %20 = vst.msk [vmem:[#allocation2 + $0x20] sm:$0xf] %vm15, 0.0
  %21 = vst [vmem:[#allocation2 + $0x24] sm:$0xff] 0.0
  %22 = vst.msk [vmem:[#allocation2 + $0x2c] sm:$0xf] %vm15, 0.0
  %23 = vst [vmem:[#allocation2 + $0x30] sm:$0xff] 0.0
  %24 = vst.msk [vmem:[#allocation2 + $0x38] sm:$0xf] %vm15, 0.0
  %25 = vst [vmem:[#allocation2 + $0x3c] sm:$0xff] 0.0
  %26 = vst.msk [vmem:[#allocation2 + $0x44] sm:$0xf] %vm15, 0.0
  %v27 = vld [vmem:[%s0] sm:$0x1]
  %v28 = vld [vmem:[%s0 + $0x10] sm:$0x1]
  %v29 = vld [vmem:[%s0 + $0x20] sm:$0x1]
  %v30 = vld [vmem:[%s0 + $0x30] sm:$0x1]
  %v31 = vld [vmem:[%s0 + $0x40] sm:$0x1]
  %v32 = vld [vmem:[%s0 + $0x50] sm:$0x1]
  %v33 = vld [vmem:[%s0 + $0x60] sm:$0x1]
  %v34 = vld [vmem:[%s0 + $0x70] sm:$0x1]
  %v43 = vrot.slane %v28, 7
  %vm44 = vcmask 1041409
  %v45 = vsel %vm44, %v43, %v27
  %vm46 = vcmask 1045509
  %v47 = vsel %vm46, %v43, %v45
  %v48 = vrot.slane %v29, 6
  %vm49 = vcmask 1042434
  %v50 = vsel %vm49, %v48, %v47
  %vm51 = vcmask 1046534
  %v52 = vsel %vm51, %v48, %v50
  %v53 = vrot.slane %v30, 5
  %vm54 = vcmask 1043459
  %v55 = vsel %vm54, %v53, %v52
  %vm56 = vcmask 1047559
  %v57 = vsel %vm56, %v53, %v55
  %v58 = vrot.slane %v32, 7
  %v59 = vsel %vm44, %v58, %v31
  %v60 = vsel %vm46, %v58, %v59
  %v61 = vrot.slane %v33, 6
  %v62 = vsel %vm49, %v61, %v60
  %v63 = vsel %vm51, %v61, %v62
  %v64 = vrot.slane %v34, 5
  %v65 = vsel %vm54, %v64, %v63
  %v66 = vsel %vm56, %v64, %v65
  %67 = vrot.lane.b32.xlu0 %v57, 17
  %v68 = vpop.permute.xlu0 %67
  %69 = vrot.lane.b32.xlu0 %v66, 17
  %v70 = vpop.permute.xlu0 %69
  %vm73 = vcmask 257160
  %74 = vst.msk [vmem:[#allocation2] sm:$0xf] %vm73, %v68
  %75 = vst.msk [vmem:[#allocation2 + $0xc] sm:$0xf] %vm73, %v70
  %v76 = vld [vmem:[%s0 + $0x1] sm:$0x1]
  %v77 = vld [vmem:[%s0 + $0x11] sm:$0x1]
  %v78 = vld [vmem:[%s0 + $0x21] sm:$0x1]
  %v79 = vld [vmem:[%s0 + $0x31] sm:$0x1]
  %v80 = vld [vmem:[%s0 + $0x41] sm:$0x1]
  %v81 = vld [vmem:[%s0 + $0x51] sm:$0x1]
  %v82 = vld [vmem:[%s0 + $0x61] sm:$0x1]
  %v83 = vld [vmem:[%s0 + $0x71] sm:$0x1]
  %v92 = vrot.slane %v77, 7
  %v93 = vsel %vm44, %v92, %v76
  %v94 = vsel %vm46, %v92, %v93
  %v95 = vrot.slane %v78, 6
  %v96 = vsel %vm49, %v95, %v94
  %v97 = vsel %vm51, %v95, %v96
  %v98 = vrot.slane %v79, 5
  %v99 = vsel %vm54, %v98, %v97
  %v100 = vsel %vm56, %v98, %v99
  %v101 = vrot.slane %v81, 7
  %v102 = vsel %vm44, %v101, %v80
  %v103 = vsel %vm46, %v101, %v102
  %v104 = vrot.slane %v82, 6
  %v105 = vsel %vm49, %v104, %v103
  %v106 = vsel %vm51, %v104, %v105
  %v107 = vrot.slane %v83, 5
  %v108 = vsel %vm54, %v107, %v106
  %v109 = vsel %vm56, %v107, %v108
  %110 = vrot.lane.b32.xlu0 %v100, 33
  %v111 = vpop.permute.xlu0 %110
  %112 = vrot.lane.b32.xlu0 %v109, 33
  %v113 = vpop.permute.xlu0 %112
  %vm116 = vcmask 388360
  %117 = vst.msk [vmem:[#allocation2] sm:$0xf] %vm116, %v111
  %118 = vst.msk [vmem:[#allocation2 + $0xc] sm:$0xf] %vm116, %v113
  %v119 = vld [vmem:[%s0 + $0x2] sm:$0x1]
  %v120 = vld [vmem:[%s0 + $0x12] sm:$0x1]
  %v121 = vld [vmem:[%s0 + $0x22] sm:$0x1]
  %v122 = vld [vmem:[%s0 + $0x32] sm:$0x1]
  %v123 = vld [vmem:[%s0 + $0x42] sm:$0x1]
  %v124 = vld [vmem:[%s0 + $0x52] sm:$0x1]
  %v125 = vld [vmem:[%s0 + $0x62] sm:$0x1]
  %v126 = vld [vmem:[%s0 + $0x72] sm:$0x1]
  %v135 = vrot.slane %v120, 7
  %v136 = vsel %vm44, %v135, %v119
  %v137 = vsel %vm46, %v135, %v136
  %v138 = vrot.slane %v121, 6
  %v139 = vsel %vm49, %v138, %v137
  %v140 = vsel %vm51, %v138, %v139
  %v141 = vrot.slane %v122, 5
  %v142 = vsel %vm54, %v141, %v140
  %v143 = vsel %vm56, %v141, %v142
  %v144 = vrot.slane %v124, 7
  %v145 = vsel %vm44, %v144, %v123
  %v146 = vsel %vm46, %v144, %v145
  %v147 = vrot.slane %v125, 6
  %v148 = vsel %vm49, %v147, %v146
  %v149 = vsel %vm51, %v147, %v148
  %v150 = vrot.slane %v126, 5
  %v151 = vsel %vm54, %v150, %v149
  %v152 = vsel %vm56, %v150, %v151
  %153 = vrot.lane.b32.xlu0 %v143, 49
  %v154 = vpop.permute.xlu0 %153
  %155 = vrot.lane.b32.xlu0 %v152, 49
  %v156 = vpop.permute.xlu0 %155
  %vm159 = vcmask 519560
  %160 = vst.msk [vmem:[#allocation2] sm:$0xf] %vm159, %v154
  %161 = vst.msk [vmem:[#allocation2 + $0xc] sm:$0xf] %vm159, %v156
  %v162 = vld [vmem:[%s0 + $0x3] sm:$0x1]
  %v163 = vld [vmem:[%s0 + $0x13] sm:$0x1]
  %v164 = vld [vmem:[%s0 + $0x23] sm:$0x1]
  %v165 = vld [vmem:[%s0 + $0x33] sm:$0x1]
  %v166 = vld [vmem:[%s0 + $0x43] sm:$0x1]
  %v167 = vld [vmem:[%s0 + $0x53] sm:$0x1]
  %v168 = vld [vmem:[%s0 + $0x63] sm:$0x1]
  %v169 = vld [vmem:[%s0 + $0x73] sm:$0x1]
  %v178 = vrot.slane %v163, 7
  %v179 = vsel %vm44, %v178, %v162
  %v180 = vsel %vm46, %v178, %v179
  %v181 = vrot.slane %v164, 6
  %v182 = vsel %vm49, %v181, %v180
  %v183 = vsel %vm51, %v181, %v182
  %v184 = vrot.slane %v165, 5
  %v185 = vsel %vm54, %v184, %v183
  %v186 = vsel %vm56, %v184, %v185
  %v187 = vrot.slane %v167, 7
  %v188 = vsel %vm44, %v187, %v166
  %v189 = vsel %vm46, %v187, %v188
  %v190 = vrot.slane %v168, 6
  %v191 = vsel %vm49, %v190, %v189
  %v192 = vsel %vm51, %v190, %v191
  %v193 = vrot.slane %v169, 5
  %v194 = vsel %vm54, %v193, %v192
  %v195 = vsel %vm56, %v193, %v194
  %196 = vrot.lane.b32.xlu0 %v186, 65
  %v197 = vpop.permute.xlu0 %196
  %198 = vrot.lane.b32.xlu0 %v195, 65
  %v199 = vpop.permute.xlu0 %198
  %vm202 = vcmask 650760
  %203 = vst.msk [vmem:[#allocation2] sm:$0xf] %vm202, %v197
  %204 = vst.msk [vmem:[#allocation2 + $0xc] sm:$0xf] %vm202, %v199
  %v205 = vld [vmem:[%s0 + $0x4] sm:$0x1]
  %v206 = vld [vmem:[%s0 + $0x14] sm:$0x1]
  %v207 = vld [vmem:[%s0 + $0x24] sm:$0x1]
  %v208 = vld [vmem:[%s0 + $0x34] sm:$0x1]
  %v209 = vld [vmem:[%s0 + $0x44] sm:$0x1]
  %v210 = vld [vmem:[%s0 + $0x54] sm:$0x1]
  %v211 = vld [vmem:[%s0 + $0x64] sm:$0x1]
  %v212 = vld [vmem:[%s0 + $0x74] sm:$0x1]
  %v221 = vrot.slane %v206, 7
  %v222 = vsel %vm44, %v221, %v205
  %v223 = vsel %vm46, %v221, %v222
  %v224 = vrot.slane %v207, 6
  %v225 = vsel %vm49, %v224, %v223
  %v226 = vsel %vm51, %v224, %v225
  %v227 = vrot.slane %v208, 5
  %v228 = vsel %vm54, %v227, %v226
  %v229 = vsel %vm56, %v227, %v228
  %v230 = vrot.slane %v210, 7
  %v231 = vsel %vm44, %v230, %v209
  %v232 = vsel %vm46, %v230, %v231
  %v233 = vrot.slane %v211, 6
  %v234 = vsel %vm49, %v233, %v232
  %v235 = vsel %vm51, %v233, %v234
  %v236 = vrot.slane %v212, 5
  %v237 = vsel %vm54, %v236, %v235
  %v238 = vsel %vm56, %v236, %v237
  %239 = vrot.lane.b32.xlu0 %v229, 81
  %v240 = vpop.permute.xlu0 %239
  %241 = vrot.lane.b32.xlu0 %v238, 81
  %v242 = vpop.permute.xlu0 %241
  %vm245 = vcmask 781960
  %246 = vst.msk [vmem:[#allocation2] sm:$0xf] %vm245, %v240
  %247 = vst.msk [vmem:[#allocation2 + $0xc] sm:$0xf] %vm245, %v242
  %v248 = vld [vmem:[%s0 + $0x5] sm:$0x1]
  %v249 = vld [vmem:[%s0 + $0x15] sm:$0x1]
  %v250 = vld [vmem:[%s0 + $0x25] sm:$0x1]
  %v251 = vld [vmem:[%s0 + $0x35] sm:$0x1]
  %v252 = vld [vmem:[%s0 + $0x45] sm:$0x1]
  %v253 = vld [vmem:[%s0 + $0x55] sm:$0x1]
  %v254 = vld [vmem:[%s0 + $0x65] sm:$0x1]
  %v255 = vld [vmem:[%s0 + $0x75] sm:$0x1]
  %v264 = vrot.slane %v249, 7
  %v265 = vsel %vm44, %v264, %v248
  %v266 = vsel %vm46, %v264, %v265
  %v267 = vrot.slane %v250, 6
  %v268 = vsel %vm49, %v267, %v266
  %v269 = vsel %vm51, %v267, %v268
  %v270 = vrot.slane %v251, 5
  %v271 = vsel %vm54, %v270, %v269
  %v272 = vsel %vm56, %v270, %v271
  %v273 = vrot.slane %v253, 7
  %v274 = vsel %vm44, %v273, %v252
  %v275 = vsel %vm46, %v273, %v274
  %v276 = vrot.slane %v254, 6
  %v277 = vsel %vm49, %v276, %v275
  %v278 = vsel %vm51, %v276, %v277
  %v279 = vrot.slane %v255, 5
  %v280 = vsel %vm54, %v279, %v278
  %v281 = vsel %vm56, %v279, %v280
  %282 = vrot.lane.b32.xlu0 %v272, 97
  %v283 = vpop.permute.xlu0 %282
  %284 = vrot.lane.b32.xlu0 %v281, 97
  %v285 = vpop.permute.xlu0 %284
  %vm288 = vcmask 913160
  %289 = vst.msk [vmem:[#allocation2] sm:$0xf] %vm288, %v283
  %290 = vst.msk [vmem:[#allocation2 + $0xc] sm:$0xf] %vm288, %v285
  %v291 = vld [vmem:[%s0 + $0x6] sm:$0x1]
  %v292 = vld [vmem:[%s0 + $0x16] sm:$0x1]
  %v293 = vld [vmem:[%s0 + $0x26] sm:$0x1]
  %v294 = vld [vmem:[%s0 + $0x36] sm:$0x1]
  %v295 = vld [vmem:[%s0 + $0x46] sm:$0x1]
  %v296 = vld [vmem:[%s0 + $0x56] sm:$0x1]
  %v297 = vld [vmem:[%s0 + $0x66] sm:$0x1]
  %v298 = vld [vmem:[%s0 + $0x76] sm:$0x1]
  %v307 = vrot.slane %v292, 7
  %v308 = vsel %vm44, %v307, %v291
  %v309 = vsel %vm46, %v307, %v308
  %v310 = vrot.slane %v293, 6
  %v311 = vsel %vm49, %v310, %v309
  %v312 = vsel %vm51, %v310, %v311
  %v313 = vrot.slane %v294, 5
  %v314 = vsel %vm54, %v313, %v312
  %v315 = vsel %vm56, %v313, %v314
  %v316 = vrot.slane %v296, 7
  %v317 = vsel %vm44, %v316, %v295
  %v318 = vsel %vm46, %v316, %v317
  %v319 = vrot.slane %v297, 6
  %v320 = vsel %vm49, %v319, %v318
  %v321 = vsel %vm51, %v319, %v320
  %v322 = vrot.slane %v298, 5
  %v323 = vsel %vm54, %v322, %v321
  %v324 = vsel %vm56, %v322, %v323
  %325 = vrot.lane.b32.xlu0 %v315, 113
  %v326 = vpop.permute.xlu0 %325
  %327 = vrot.lane.b32.xlu0 %v324, 113
  %v328 = vpop.permute.xlu0 %327
  %vm331 = vcmask 1044360
  %332 = vst.msk [vmem:[#allocation2] sm:$0xf] %vm331, %v326
  %333 = vst.msk [vmem:[#allocation2 + $0xc] sm:$0xf] %vm331, %v328
  %v334 = vld [vmem:[%s0 + $0x7] sm:$0x1]
  %v335 = vld [vmem:[%s0 + $0x17] sm:$0x1]
  %v336 = vld [vmem:[%s0 + $0x27] sm:$0x1]
  %v337 = vld [vmem:[%s0 + $0x37] sm:$0x1]
  %v338 = vld [vmem:[%s0 + $0x47] sm:$0x1]
  %v339 = vld [vmem:[%s0 + $0x57] sm:$0x1]
  %v340 = vld [vmem:[%s0 + $0x67] sm:$0x1]
  %v341 = vld [vmem:[%s0 + $0x77] sm:$0x1]
  %v350 = vrot.slane %v335, 7
  %v351 = vsel %vm44, %v350, %v334
  %v352 = vsel %vm46, %v350, %v351
  %v353 = vrot.slane %v336, 6
  %v354 = vsel %vm49, %v353, %v352
  %v355 = vsel %vm51, %v353, %v354
  %v356 = vrot.slane %v337, 5
  %v357 = vsel %vm54, %v356, %v355
  %v358 = vsel %vm56, %v356, %v357
  %v359 = vrot.slane %v339, 7
  %v360 = vsel %vm44, %v359, %v338
  %v361 = vsel %vm46, %v359, %v360
  %v362 = vrot.slane %v340, 6
  %v363 = vsel %vm49, %v362, %v361
  %v364 = vsel %vm51, %v362, %v363
  %v365 = vrot.slane %v341, 5
  %v366 = vsel %vm54, %v365, %v364
  %v367 = vsel %vm56, %v365, %v366
  %368 = vrot.lane.b32.xlu0 %v358, 1
  %v369 = vpop.permute.xlu0 %368
  %370 = vrot.lane.b32.xlu0 %v367, 1
  %v371 = vpop.permute.xlu0 %370
  %vm374 = vcmask 125960
  %375 = vst.msk [vmem:[#allocation2 + $0x4] sm:$0xf] %vm374, %v369
  %376 = vst.msk [vmem:[#allocation2 + $0x10] sm:$0xf] %vm374, %v371
  %v377 = vld [vmem:[%s0 + $0x8] sm:$0x1]
  %v378 = vld [vmem:[%s0 + $0x18] sm:$0x1]
  %v379 = vld [vmem:[%s0 + $0x28] sm:$0x1]
  %v380 = vld [vmem:[%s0 + $0x38] sm:$0x1]
  %v381 = vld [vmem:[%s0 + $0x48] sm:$0x1]
  %v382 = vld [vmem:[%s0 + $0x58] sm:$0x1]
  %v383 = vld [vmem:[%s0 + $0x68] sm:$0x1]
  %v384 = vld [vmem:[%s0 + $0x78] sm:$0x1]
  %v393 = vrot.slane %v378, 7
  %v394 = vsel %vm44, %v393, %v377
  %v395 = vsel %vm46, %v393, %v394
  %v396 = vrot.slane %v379, 6
  %v397 = vsel %vm49, %v396, %v395
  %v398 = vsel %vm51, %v396, %v397
  %v399 = vrot.slane %v380, 5
  %v400 = vsel %vm54, %v399, %v398
  %v401 = vsel %vm56, %v399, %v400
  %v402 = vrot.slane %v382, 7
  %v403 = vsel %vm44, %v402, %v381
  %v404 = vsel %vm46, %v402, %v403
  %v405 = vrot.slane %v383, 6
  %v406 = vsel %vm49, %v405, %v404
  %v407 = vsel %vm51, %v405, %v406
  %v408 = vrot.slane %v384, 5
  %v409 = vsel %vm54, %v408, %v407
  %v410 = vsel %vm56, %v408, %v409
  %411 = vrot.lane.b32.xlu0 %v401, 17
  %v412 = vpop.permute.xlu0 %411
  %413 = vrot.lane.b32.xlu0 %v410, 17
  %v414 = vpop.permute.xlu0 %413
  %417 = vst.msk [vmem:[#allocation2 + $0x4] sm:$0xf] %vm73, %v412
  %418 = vst.msk [vmem:[#allocation2 + $0x10] sm:$0xf] %vm73, %v414
  %v419 = vld [vmem:[%s0 + $0x9] sm:$0x1]
  %v420 = vld [vmem:[%s0 + $0x19] sm:$0x1]
  %v421 = vld [vmem:[%s0 + $0x29] sm:$0x1]
  %v422 = vld [vmem:[%s0 + $0x39] sm:$0x1]
  %v423 = vld [vmem:[%s0 + $0x49] sm:$0x1]
  %v424 = vld [vmem:[%s0 + $0x59] sm:$0x1]
  %v425 = vld [vmem:[%s0 + $0x69] sm:$0x1]
  %v426 = vld [vmem:[%s0 + $0x79] sm:$0x1]
  %v435 = vrot.slane %v420, 7
  %v436 = vsel %vm44, %v435, %v419
  %v437 = vsel %vm46, %v435, %v436
  %v438 = vrot.slane %v421, 6
  %v439 = vsel %vm49, %v438, %v437
  %v440 = vsel %vm51, %v438, %v439
  %v441 = vrot.slane %v422, 5
  %v442 = vsel %vm54, %v441, %v440
  %v443 = vsel %vm56, %v441, %v442
  %v444 = vrot.slane %v424, 7
  %v445 = vsel %vm44, %v444, %v423
  %v446 = vsel %vm46, %v444, %v445
  %v447 = vrot.slane %v425, 6
  %v448 = vsel %vm49, %v447, %v446
  %v449 = vsel %vm51, %v447, %v448
  %v450 = vrot.slane %v426, 5
  %v451 = vsel %vm54, %v450, %v449
  %v452 = vsel %vm56, %v450, %v451
  %453 = vrot.lane.b32.xlu0 %v443, 33
  %v454 = vpop.permute.xlu0 %453
  %455 = vrot.lane.b32.xlu0 %v452, 33
  %v456 = vpop.permute.xlu0 %455
  %459 = vst.msk [vmem:[#allocation2 + $0x4] sm:$0xf] %vm116, %v454
  %460 = vst.msk [vmem:[#allocation2 + $0x10] sm:$0xf] %vm116, %v456
  %v461 = vld [vmem:[%s0 + $0xa] sm:$0x1]
  %v462 = vld [vmem:[%s0 + $0x1a] sm:$0x1]
  %v463 = vld [vmem:[%s0 + $0x2a] sm:$0x1]
  %v464 = vld [vmem:[%s0 + $0x3a] sm:$0x1]
  %v465 = vld [vmem:[%s0 + $0x4a] sm:$0x1]
  %v466 = vld [vmem:[%s0 + $0x5a] sm:$0x1]
  %v467 = vld [vmem:[%s0 + $0x6a] sm:$0x1]
  %v468 = vld [vmem:[%s0 + $0x7a] sm:$0x1]
  %v477 = vrot.slane %v462, 7
  %v478 = vsel %vm44, %v477, %v461
  %v479 = vsel %vm46, %v477, %v478
  %v480 = vrot.slane %v463, 6
  %v481 = vsel %vm49, %v480, %v479
  %v482 = vsel %vm51, %v480, %v481
  %v483 = vrot.slane %v464, 5
  %v484 = vsel %vm54, %v483, %v482
  %v485 = vsel %vm56, %v483, %v484
  %v486 = vrot.slane %v466, 7
  %v487 = vsel %vm44, %v486, %v465
  %v488 = vsel %vm46, %v486, %v487
  %v489 = vrot.slane %v467, 6
  %v490 = vsel %vm49, %v489, %v488
  %v491 = vsel %vm51, %v489, %v490
  %v492 = vrot.slane %v468, 5
  %v493 = vsel %vm54, %v492, %v491
  %v494 = vsel %vm56, %v492, %v493
  %495 = vrot.lane.b32.xlu0 %v485, 49
  %v496 = vpop.permute.xlu0 %495
  %497 = vrot.lane.b32.xlu0 %v494, 49
  %v498 = vpop.permute.xlu0 %497
  %501 = vst.msk [vmem:[#allocation2 + $0x4] sm:$0xf] %vm159, %v496
  %502 = vst.msk [vmem:[#allocation2 + $0x10] sm:$0xf] %vm159, %v498
  %v503 = vld [vmem:[%s0 + $0xb] sm:$0x1]
  %v504 = vld [vmem:[%s0 + $0x1b] sm:$0x1]
  %v505 = vld [vmem:[%s0 + $0x2b] sm:$0x1]
  %v506 = vld [vmem:[%s0 + $0x3b] sm:$0x1]
  %v507 = vld [vmem:[%s0 + $0x4b] sm:$0x1]
  %v508 = vld [vmem:[%s0 + $0x5b] sm:$0x1]
  %v509 = vld [vmem:[%s0 + $0x6b] sm:$0x1]
  %v510 = vld [vmem:[%s0 + $0x7b] sm:$0x1]
  %v519 = vrot.slane %v504, 7
  %v520 = vsel %vm44, %v519, %v503
  %v521 = vsel %vm46, %v519, %v520
  %v522 = vrot.slane %v505, 6
  %v523 = vsel %vm49, %v522, %v521
  %v524 = vsel %vm51, %v522, %v523
  %v525 = vrot.slane %v506, 5
  %v526 = vsel %vm54, %v525, %v524
  %v527 = vsel %vm56, %v525, %v526
  %v528 = vrot.slane %v508, 7
  %v529 = vsel %vm44, %v528, %v507
  %v530 = vsel %vm46, %v528, %v529
  %v531 = vrot.slane %v509, 6
  %v532 = vsel %vm49, %v531, %v530
  %v533 = vsel %vm51, %v531, %v532
  %v534 = vrot.slane %v510, 5
  %v535 = vsel %vm54, %v534, %v533
  %v536 = vsel %vm56, %v534, %v535
  %537 = vrot.lane.b32.xlu0 %v527, 65
  %v538 = vpop.permute.xlu0 %537
  %539 = vrot.lane.b32.xlu0 %v536, 65
  %v540 = vpop.permute.xlu0 %539
  %543 = vst.msk [vmem:[#allocation2 + $0x4] sm:$0xf] %vm202, %v538
  %544 = vst.msk [vmem:[#allocation2 + $0x10] sm:$0xf] %vm202, %v540
  %v545 = vld [vmem:[%s0 + $0xc] sm:$0x1]
  %v546 = vld [vmem:[%s0 + $0x1c] sm:$0x1]
  %v547 = vld [vmem:[%s0 + $0x2c] sm:$0x1]
  %v548 = vld [vmem:[%s0 + $0x3c] sm:$0x1]
  %v549 = vld [vmem:[%s0 + $0x4c] sm:$0x1]
  %v550 = vld [vmem:[%s0 + $0x5c] sm:$0x1]
  %v551 = vld [vmem:[%s0 + $0x6c] sm:$0x1]
  %v552 = vld [vmem:[%s0 + $0x7c] sm:$0x1]
  %v561 = vrot.slane %v546, 7
  %v562 = vsel %vm44, %v561, %v545
  %v563 = vsel %vm46, %v561, %v562
  %v564 = vrot.slane %v547, 6
  %v565 = vsel %vm49, %v564, %v563
  %v566 = vsel %vm51, %v564, %v565
  %v567 = vrot.slane %v548, 5
  %v568 = vsel %vm54, %v567, %v566
  %v569 = vsel %vm56, %v567, %v568
  %v570 = vrot.slane %v550, 7
  %v571 = vsel %vm44, %v570, %v549
  %v572 = vsel %vm46, %v570, %v571
  %v573 = vrot.slane %v551, 6
  %v574 = vsel %vm49, %v573, %v572
  %v575 = vsel %vm51, %v573, %v574
  %v576 = vrot.slane %v552, 5
  %v577 = vsel %vm54, %v576, %v575
  %v578 = vsel %vm56, %v576, %v577
  %579 = vrot.lane.b32.xlu0 %v569, 81
  %v580 = vpop.permute.xlu0 %579
  %581 = vrot.lane.b32.xlu0 %v578, 81
  %v582 = vpop.permute.xlu0 %581
  %585 = vst.msk [vmem:[#allocation2 + $0x4] sm:$0xf] %vm245, %v580
  %586 = vst.msk [vmem:[#allocation2 + $0x10] sm:$0xf] %vm245, %v582
  %v587 = vld [vmem:[%s0 + $0xd] sm:$0x1]
  %v588 = vld [vmem:[%s0 + $0x1d] sm:$0x1]
  %v589 = vld [vmem:[%s0 + $0x2d] sm:$0x1]
  %v590 = vld [vmem:[%s0 + $0x3d] sm:$0x1]
  %v591 = vld [vmem:[%s0 + $0x4d] sm:$0x1]
  %v592 = vld [vmem:[%s0 + $0x5d] sm:$0x1]
  %v593 = vld [vmem:[%s0 + $0x6d] sm:$0x1]
  %v594 = vld [vmem:[%s0 + $0x7d] sm:$0x1]
  %v603 = vrot.slane %v588, 7
  %v604 = vsel %vm44, %v603, %v587
  %v605 = vsel %vm46, %v603, %v604
  %v606 = vrot.slane %v589, 6
  %v607 = vsel %vm49, %v606, %v605
  %v608 = vsel %vm51, %v606, %v607
  %v609 = vrot.slane %v590, 5
  %v610 = vsel %vm54, %v609, %v608
  %v611 = vsel %vm56, %v609, %v610
  %v612 = vrot.slane %v592, 7
  %v613 = vsel %vm44, %v612, %v591
  %v614 = vsel %vm46, %v612, %v613
  %v615 = vrot.slane %v593, 6
  %v616 = vsel %vm49, %v615, %v614
  %v617 = vsel %vm51, %v615, %v616
  %v618 = vrot.slane %v594, 5
  %v619 = vsel %vm54, %v618, %v617
  %v620 = vsel %vm56, %v618, %v619
  %621 = vrot.lane.b32.xlu0 %v611, 97
  %v622 = vpop.permute.xlu0 %621
  %623 = vrot.lane.b32.xlu0 %v620, 97
  %v624 = vpop.permute.xlu0 %623
  %627 = vst.msk [vmem:[#allocation2 + $0x4] sm:$0xf] %vm288, %v622
  %628 = vst.msk [vmem:[#allocation2 + $0x10] sm:$0xf] %vm288, %v624
  %v629 = vld [vmem:[%s0 + $0xe] sm:$0x1]
  %v630 = vld [vmem:[%s0 + $0x1e] sm:$0x1]
  %v631 = vld [vmem:[%s0 + $0x2e] sm:$0x1]
  %v632 = vld [vmem:[%s0 + $0x3e] sm:$0x1]
  %v633 = vld [vmem:[%s0 + $0x4e] sm:$0x1]
  %v634 = vld [vmem:[%s0 + $0x5e] sm:$0x1]
  %v635 = vld [vmem:[%s0 + $0x6e] sm:$0x1]
  %v636 = vld [vmem:[%s0 + $0x7e] sm:$0x1]
  %v645 = vrot.slane %v630, 7
  %v646 = vsel %vm44, %v645, %v629
  %v647 = vsel %vm46, %v645, %v646
  %v648 = vrot.slane %v631, 6
  %v649 = vsel %vm49, %v648, %v647
  %v650 = vsel %vm51, %v648, %v649
  %v651 = vrot.slane %v632, 5
  %v652 = vsel %vm54, %v651, %v650
  %v653 = vsel %vm56, %v651, %v652
  %v654 = vrot.slane %v634, 7
  %v655 = vsel %vm44, %v654, %v633
  %v656 = vsel %vm46, %v654, %v655
  %v657 = vrot.slane %v635, 6
  %v658 = vsel %vm49, %v657, %v656
  %v659 = vsel %vm51, %v657, %v658
  %v660 = vrot.slane %v636, 5
  %v661 = vsel %vm54, %v660, %v659
  %v662 = vsel %vm56, %v660, %v661
  %663 = vrot.lane.b32.xlu0 %v653, 113
  %v664 = vpop.permute.xlu0 %663
  %665 = vrot.lane.b32.xlu0 %v662, 113
  %v666 = vpop.permute.xlu0 %665
  %669 = vst.msk [vmem:[#allocation2 + $0x4] sm:$0xf] %vm331, %v664
  %670 = vst.msk [vmem:[#allocation2 + $0x10] sm:$0xf] %vm331, %v666
  %v671 = vld [vmem:[%s0 + $0xf] sm:$0x1]
  %v672 = vld [vmem:[%s0 + $0x1f] sm:$0x1]
  %v673 = vld [vmem:[%s0 + $0x2f] sm:$0x1]
  %v674 = vld [vmem:[%s0 + $0x3f] sm:$0x1]
  %v675 = vld [vmem:[%s0 + $0x4f] sm:$0x1]
  %v676 = vld [vmem:[%s0 + $0x5f] sm:$0x1]
  %v677 = vld [vmem:[%s0 + $0x6f] sm:$0x1]
  %v678 = vld [vmem:[%s0 + $0x7f] sm:$0x1]
  %v687 = vrot.slane %v672, 7
  %v688 = vsel %vm44, %v687, %v671
  %v689 = vsel %vm46, %v687, %v688
  %v690 = vrot.slane %v673, 6
  %v691 = vsel %vm49, %v690, %v689
  %v692 = vsel %vm51, %v690, %v691
  %v693 = vrot.slane %v674, 5
  %v694 = vsel %vm54, %v693, %v692
  %v695 = vsel %vm56, %v693, %v694
  %v696 = vrot.slane %v676, 7
  %v697 = vsel %vm44, %v696, %v675
  %v698 = vsel %vm46, %v696, %v697
  %v699 = vrot.slane %v677, 6
  %v700 = vsel %vm49, %v699, %v698
  %v701 = vsel %vm51, %v699, %v700
  %v702 = vrot.slane %v678, 5
  %v703 = vsel %vm54, %v702, %v701
  %v704 = vsel %vm56, %v702, %v703
  %705 = vrot.lane.b32.xlu0 %v695, 1
  %v706 = vpop.permute.xlu0 %705
  %707 = vrot.lane.b32.xlu0 %v704, 1
  %v708 = vpop.permute.xlu0 %707
  %711 = vst.msk [vmem:[#allocation2 + $0x8] sm:$0xf] %vm374, %v706
  %712 = vst.msk [vmem:[#allocation2 + $0x14] sm:$0xf] %vm374, %v708
  %v713 = vld [vmem:[%s0] sm:$0x1]
  %v714 = vld [vmem:[%s0 + $0x10] sm:$0x1]
  %v715 = vld [vmem:[%s0 + $0x20] sm:$0x1]
  %v716 = vld [vmem:[%s0 + $0x30] sm:$0x1]
  %v717 = vld [vmem:[%s0 + $0x40] sm:$0x1]
  %v718 = vld [vmem:[%s0 + $0x50] sm:$0x1]
  %v719 = vld [vmem:[%s0 + $0x60] sm:$0x1]
  %v720 = vld [vmem:[%s0 + $0x70] sm:$0x1]
  %v729 = vrot.slane %v714, 7
  %v730 = vsel %vm44, %v729, %v713
  %v731 = vsel %vm46, %v729, %v730
  %v732 = vrot.slane %v715, 6
  %v733 = vsel %vm49, %v732, %v731
  %v734 = vsel %vm51, %v732, %v733
  %v735 = vrot.slane %v716, 5
  %v736 = vsel %vm54, %v735, %v734
  %v737 = vsel %vm56, %v735, %v736
  %v738 = vrot.slane %v718, 7
  %v739 = vsel %vm44, %v738, %v717
  %v740 = vsel %vm46, %v738, %v739
  %v741 = vrot.slane %v719, 6
  %v742 = vsel %vm49, %v741, %v740
  %v743 = vsel %vm51, %v741, %v742
  %v744 = vrot.slane %v720, 5
  %v745 = vsel %vm54, %v744, %v743
  %v746 = vsel %vm56, %v744, %v745
  %747 = vrot.lane.b32.xlu0 %v737, 16
  %v748 = vpop.permute.xlu0 %747
  %749 = vrot.lane.b32.xlu0 %v746, 16
  %v750 = vpop.permute.xlu0 %749
  %s753 = scalar_lea.vmem [#allocation2], 24
  %vm754 = vcmask 257152
  %755 = vst.msk [vmem:[%s753] sm:$0xf] %vm754, %v748
  %756 = vst.msk [vmem:[%s753 + $0xc] sm:$0xf] %vm754, %v750
  %v757 = vld [vmem:[%s0 + $0x1] sm:$0x1]
  %v758 = vld [vmem:[%s0 + $0x11] sm:$0x1]
  %v759 = vld [vmem:[%s0 + $0x21] sm:$0x1]
  %v760 = vld [vmem:[%s0 + $0x31] sm:$0x1]
  %v761 = vld [vmem:[%s0 + $0x41] sm:$0x1]
  %v762 = vld [vmem:[%s0 + $0x51] sm:$0x1]
  %v763 = vld [vmem:[%s0 + $0x61] sm:$0x1]
  %v764 = vld [vmem:[%s0 + $0x71] sm:$0x1]
  %v773 = vrot.slane %v758, 7
  %v774 = vsel %vm44, %v773, %v757
  %v775 = vsel %vm46, %v773, %v774
  %v776 = vrot.slane %v759, 6
  %v777 = vsel %vm49, %v776, %v775
  %v778 = vsel %vm51, %v776, %v777
  %v779 = vrot.slane %v760, 5
  %v780 = vsel %vm54, %v779, %v778
  %v781 = vsel %vm56, %v779, %v780
  %v782 = vrot.slane %v762, 7
  %v783 = vsel %vm44, %v782, %v761
  %v784 = vsel %vm46, %v782, %v783
  %v785 = vrot.slane %v763, 6
  %v786 = vsel %vm49, %v785, %v784
  %v787 = vsel %vm51, %v785, %v786
  %v788 = vrot.slane %v764, 5
  %v789 = vsel %vm54, %v788, %v787
  %v790 = vsel %vm56, %v788, %v789
  %791 = vrot.lane.b32.xlu0 %v781, 32
  %v792 = vpop.permute.xlu0 %791
  %793 = vrot.lane.b32.xlu0 %v790, 32
  %v794 = vpop.permute.xlu0 %793
  %vm797 = vcmask 388352
  %798 = vst.msk [vmem:[%s753] sm:$0xf] %vm797, %v792
  %799 = vst.msk [vmem:[%s753 + $0xc] sm:$0xf] %vm797, %v794
  %v800 = vld [vmem:[%s0 + $0x2] sm:$0x1]
  %v801 = vld [vmem:[%s0 + $0x12] sm:$0x1]
  %v802 = vld [vmem:[%s0 + $0x22] sm:$0x1]
  %v803 = vld [vmem:[%s0 + $0x32] sm:$0x1]
  %v804 = vld [vmem:[%s0 + $0x42] sm:$0x1]
  %v805 = vld [vmem:[%s0 + $0x52] sm:$0x1]
  %v806 = vld [vmem:[%s0 + $0x62] sm:$0x1]
  %v807 = vld [vmem:[%s0 + $0x72] sm:$0x1]
  %v816 = vrot.slane %v801, 7
  %v817 = vsel %vm44, %v816, %v800
  %v818 = vsel %vm46, %v816, %v817
  %v819 = vrot.slane %v802, 6
  %v820 = vsel %vm49, %v819, %v818
  %v821 = vsel %vm51, %v819, %v820
  %v822 = vrot.slane %v803, 5
  %v823 = vsel %vm54, %v822, %v821
  %v824 = vsel %vm56, %v822, %v823
  %v825 = vrot.slane %v805, 7
  %v826 = vsel %vm44, %v825, %v804
  %v827 = vsel %vm46, %v825, %v826
  %v828 = vrot.slane %v806, 6
  %v829 = vsel %vm49, %v828, %v827
  %v830 = vsel %vm51, %v828, %v829
  %v831 = vrot.slane %v807, 5
  %v832 = vsel %vm54, %v831, %v830
  %v833 = vsel %vm56, %v831, %v832
  %834 = vrot.lane.b32.xlu0 %v824, 48
  %v835 = vpop.permute.xlu0 %834
  %836 = vrot.lane.b32.xlu0 %v833, 48
  %v837 = vpop.permute.xlu0 %836
  %vm840 = vcmask 519552
  %841 = vst.msk [vmem:[%s753] sm:$0xf] %vm840, %v835
  %842 = vst.msk [vmem:[%s753 + $0xc] sm:$0xf] %vm840, %v837
  %v843 = vld [vmem:[%s0 + $0x3] sm:$0x1]
  %v844 = vld [vmem:[%s0 + $0x13] sm:$0x1]
  %v845 = vld [vmem:[%s0 + $0x23] sm:$0x1]
  %v846 = vld [vmem:[%s0 + $0x33] sm:$0x1]
  %v847 = vld [vmem:[%s0 + $0x43] sm:$0x1]
  %v848 = vld [vmem:[%s0 + $0x53] sm:$0x1]
  %v849 = vld [vmem:[%s0 + $0x63] sm:$0x1]
  %v850 = vld [vmem:[%s0 + $0x73] sm:$0x1]
  %v859 = vrot.slane %v844, 7
  %v860 = vsel %vm44, %v859, %v843
  %v861 = vsel %vm46, %v859, %v860
  %v862 = vrot.slane %v845, 6
  %v863 = vsel %vm49, %v862, %v861
  %v864 = vsel %vm51, %v862, %v863
  %v865 = vrot.slane %v846, 5
  %v866 = vsel %vm54, %v865, %v864
  %v867 = vsel %vm56, %v865, %v866
  %v868 = vrot.slane %v848, 7
  %v869 = vsel %vm44, %v868, %v847
  %v870 = vsel %vm46, %v868, %v869
  %v871 = vrot.slane %v849, 6
  %v872 = vsel %vm49, %v871, %v870
  %v873 = vsel %vm51, %v871, %v872
  %v874 = vrot.slane %v850, 5
  %v875 = vsel %vm54, %v874, %v873
  %v876 = vsel %vm56, %v874, %v875
  %877 = vrot.lane.b32.xlu0 %v867, 64
  %v878 = vpop.permute.xlu0 %877
  %879 = vrot.lane.b32.xlu0 %v876, 64
  %v880 = vpop.permute.xlu0 %879
  %vm883 = vcmask 650752
  %884 = vst.msk [vmem:[%s753] sm:$0xf] %vm883, %v878
  %885 = vst.msk [vmem:[%s753 + $0xc] sm:$0xf] %vm883, %v880
  %v886 = vld [vmem:[%s0 + $0x4] sm:$0x1]
  %v887 = vld [vmem:[%s0 + $0x14] sm:$0x1]
  %v888 = vld [vmem:[%s0 + $0x24] sm:$0x1]
  %v889 = vld [vmem:[%s0 + $0x34] sm:$0x1]
  %v890 = vld [vmem:[%s0 + $0x44] sm:$0x1]
  %v891 = vld [vmem:[%s0 + $0x54] sm:$0x1]
  %v892 = vld [vmem:[%s0 + $0x64] sm:$0x1]
  %v893 = vld [vmem:[%s0 + $0x74] sm:$0x1]
  %v902 = vrot.slane %v887, 7
  %v903 = vsel %vm44, %v902, %v886
  %v904 = vsel %vm46, %v902, %v903
  %v905 = vrot.slane %v888, 6
  %v906 = vsel %vm49, %v905, %v904
  %v907 = vsel %vm51, %v905, %v906
  %v908 = vrot.slane %v889, 5
  %v909 = vsel %vm54, %v908, %v907
  %v910 = vsel %vm56, %v908, %v909
  %v911 = vrot.slane %v891, 7
  %v912 = vsel %vm44, %v911, %v890
  %v913 = vsel %vm46, %v911, %v912
  %v914 = vrot.slane %v892, 6
  %v915 = vsel %vm49, %v914, %v913
  %v916 = vsel %vm51, %v914, %v915
  %v917 = vrot.slane %v893, 5
  %v918 = vsel %vm54, %v917, %v916
  %v919 = vsel %vm56, %v917, %v918
  %920 = vrot.lane.b32.xlu0 %v910, 80
  %v921 = vpop.permute.xlu0 %920
  %922 = vrot.lane.b32.xlu0 %v919, 80
  %v923 = vpop.permute.xlu0 %922
  %vm926 = vcmask 781952
  %927 = vst.msk [vmem:[%s753] sm:$0xf] %vm926, %v921
  %928 = vst.msk [vmem:[%s753 + $0xc] sm:$0xf] %vm926, %v923
  %v929 = vld [vmem:[%s0 + $0x5] sm:$0x1]
  %v930 = vld [vmem:[%s0 + $0x15] sm:$0x1]
  %v931 = vld [vmem:[%s0 + $0x25] sm:$0x1]
  %v932 = vld [vmem:[%s0 + $0x35] sm:$0x1]
  %v933 = vld [vmem:[%s0 + $0x45] sm:$0x1]
  %v934 = vld [vmem:[%s0 + $0x55] sm:$0x1]
  %v935 = vld [vmem:[%s0 + $0x65] sm:$0x1]
  %v936 = vld [vmem:[%s0 + $0x75] sm:$0x1]
  %v945 = vrot.slane %v930, 7
  %v946 = vsel %vm44, %v945, %v929
  %v947 = vsel %vm46, %v945, %v946
  %v948 = vrot.slane %v931, 6
  %v949 = vsel %vm49, %v948, %v947
  %v950 = vsel %vm51, %v948, %v949
  %v951 = vrot.slane %v932, 5
  %v952 = vsel %vm54, %v951, %v950
  %v953 = vsel %vm56, %v951, %v952
  %v954 = vrot.slane %v934, 7
  %v955 = vsel %vm44, %v954, %v933
  %v956 = vsel %vm46, %v954, %v955
  %v957 = vrot.slane %v935, 6
  %v958 = vsel %vm49, %v957, %v956
  %v959 = vsel %vm51, %v957, %v958
  %v960 = vrot.slane %v936, 5
  %v961 = vsel %vm54, %v960, %v959
  %v962 = vsel %vm56, %v960, %v961
  %963 = vrot.lane.b32.xlu0 %v953, 96
  %v964 = vpop.permute.xlu0 %963
  %965 = vrot.lane.b32.xlu0 %v962, 96
  %v966 = vpop.permute.xlu0 %965
  %vm969 = vcmask 913152
  %970 = vst.msk [vmem:[%s753] sm:$0xf] %vm969, %v964
  %971 = vst.msk [vmem:[%s753 + $0xc] sm:$0xf] %vm969, %v966
  %v972 = vld [vmem:[%s0 + $0x6] sm:$0x1]
  %v973 = vld [vmem:[%s0 + $0x16] sm:$0x1]
  %v974 = vld [vmem:[%s0 + $0x26] sm:$0x1]
  %v975 = vld [vmem:[%s0 + $0x36] sm:$0x1]
  %v976 = vld [vmem:[%s0 + $0x46] sm:$0x1]
  %v977 = vld [vmem:[%s0 + $0x56] sm:$0x1]
  %v978 = vld [vmem:[%s0 + $0x66] sm:$0x1]
  %v979 = vld [vmem:[%s0 + $0x76] sm:$0x1]
  %v988 = vrot.slane %v973, 7
  %v989 = vsel %vm44, %v988, %v972
  %v990 = vsel %vm46, %v988, %v989
  %v991 = vrot.slane %v974, 6
  %v992 = vsel %vm49, %v991, %v990
  %v993 = vsel %vm51, %v991, %v992
  %v994 = vrot.slane %v975, 5
  %v995 = vsel %vm54, %v994, %v993
  %v996 = vsel %vm56, %v994, %v995
  %v997 = vrot.slane %v977, 7
  %v998 = vsel %vm44, %v997, %v976
  %v999 = vsel %vm46, %v997, %v998
  %v1000 = vrot.slane %v978, 6
  %v1001 = vsel %vm49, %v1000, %v999
  %v1002 = vsel %vm51, %v1000, %v1001
  %v1003 = vrot.slane %v979, 5
  %v1004 = vsel %vm54, %v1003, %v1002
  %v1005 = vsel %vm56, %v1003, %v1004
  %1006 = vrot.lane.b32.xlu0 %v996, 112
  %v1007 = vpop.permute.xlu0 %1006
  %1008 = vrot.lane.b32.xlu0 %v1005, 112
  %v1009 = vpop.permute.xlu0 %1008
  %vm1012 = vcmask 1044352
  %1013 = vst.msk [vmem:[%s753] sm:$0xf] %vm1012, %v1007
  %1014 = vst.msk [vmem:[%s753 + $0xc] sm:$0xf] %vm1012, %v1009
  %v1015 = vld [vmem:[%s0 + $0x7] sm:$0x1]
  %v1016 = vld [vmem:[%s0 + $0x17] sm:$0x1]
  %v1017 = vld [vmem:[%s0 + $0x27] sm:$0x1]
  %v1018 = vld [vmem:[%s0 + $0x37] sm:$0x1]
  %v1019 = vld [vmem:[%s0 + $0x47] sm:$0x1]
  %v1020 = vld [vmem:[%s0 + $0x57] sm:$0x1]
  %v1021 = vld [vmem:[%s0 + $0x67] sm:$0x1]
  %v1022 = vld [vmem:[%s0 + $0x77] sm:$0x1]
  %v1031 = vrot.slane %v1016, 7
  %v1032 = vsel %vm44, %v1031, %v1015
  %v1033 = vsel %vm46, %v1031, %v1032
  %v1034 = vrot.slane %v1017, 6
  %v1035 = vsel %vm49, %v1034, %v1033
  %v1036 = vsel %vm51, %v1034, %v1035
  %v1037 = vrot.slane %v1018, 5
  %v1038 = vsel %vm54, %v1037, %v1036
  %v1039 = vsel %vm56, %v1037, %v1038
  %v1040 = vrot.slane %v1020, 7
  %v1041 = vsel %vm44, %v1040, %v1019
  %v1042 = vsel %vm46, %v1040, %v1041
  %v1043 = vrot.slane %v1021, 6
  %v1044 = vsel %vm49, %v1043, %v1042
  %v1045 = vsel %vm51, %v1043, %v1044
  %v1046 = vrot.slane %v1022, 5
  %v1047 = vsel %vm54, %v1046, %v1045
  %v1048 = vsel %vm56, %v1046, %v1047
  %vm1051 = vcmask 125952
  %1052 = vst.msk [vmem:[%s753 + $0x4] sm:$0xf] %vm1051, %v1039
  %1053 = vst.msk [vmem:[%s753 + $0x10] sm:$0xf] %vm1051, %v1048
  %v1054 = vld [vmem:[%s0 + $0x8] sm:$0x1]
  %v1055 = vld [vmem:[%s0 + $0x18] sm:$0x1]
  %v1056 = vld [vmem:[%s0 + $0x28] sm:$0x1]
  %v1057 = vld [vmem:[%s0 + $0x38] sm:$0x1]
  %v1058 = vld [vmem:[%s0 + $0x48] sm:$0x1]
  %v1059 = vld [vmem:[%s0 + $0x58] sm:$0x1]
  %v1060 = vld [vmem:[%s0 + $0x68] sm:$0x1]
  %v1061 = vld [vmem:[%s0 + $0x78] sm:$0x1]
  %v1070 = vrot.slane %v1055, 7
  %v1071 = vsel %vm44, %v1070, %v1054
  %v1072 = vsel %vm46, %v1070, %v1071
  %v1073 = vrot.slane %v1056, 6
  %v1074 = vsel %vm49, %v1073, %v1072
  %v1075 = vsel %vm51, %v1073, %v1074
  %v1076 = vrot.slane %v1057, 5
  %v1077 = vsel %vm54, %v1076, %v1075
  %v1078 = vsel %vm56, %v1076, %v1077
  %v1079 = vrot.slane %v1059, 7
  %v1080 = vsel %vm44, %v1079, %v1058
  %v1081 = vsel %vm46, %v1079, %v1080
  %v1082 = vrot.slane %v1060, 6
  %v1083 = vsel %vm49, %v1082, %v1081
  %v1084 = vsel %vm51, %v1082, %v1083
  %v1085 = vrot.slane %v1061, 5
  %v1086 = vsel %vm54, %v1085, %v1084
  %v1087 = vsel %vm56, %v1085, %v1086
  %1088 = vrot.lane.b32.xlu0 %v1078, 16
  %v1089 = vpop.permute.xlu0 %1088
  %1090 = vrot.lane.b32.xlu0 %v1087, 16
  %v1091 = vpop.permute.xlu0 %1090
  %1094 = vst.msk [vmem:[%s753 + $0x4] sm:$0xf] %vm754, %v1089
  %1095 = vst.msk [vmem:[%s753 + $0x10] sm:$0xf] %vm754, %v1091
  %v1096 = vld [vmem:[%s0 + $0x9] sm:$0x1]
  %v1097 = vld [vmem:[%s0 + $0x19] sm:$0x1]
  %v1098 = vld [vmem:[%s0 + $0x29] sm:$0x1]
  %v1099 = vld [vmem:[%s0 + $0x39] sm:$0x1]
  %v1100 = vld [vmem:[%s0 + $0x49] sm:$0x1]
  %v1101 = vld [vmem:[%s0 + $0x59] sm:$0x1]
  %v1102 = vld [vmem:[%s0 + $0x69] sm:$0x1]
  %v1103 = vld [vmem:[%s0 + $0x79] sm:$0x1]
  %v1112 = vrot.slane %v1097, 7
  %v1113 = vsel %vm44, %v1112, %v1096
  %v1114 = vsel %vm46, %v1112, %v1113
  %v1115 = vrot.slane %v1098, 6
  %v1116 = vsel %vm49, %v1115, %v1114
  %v1117 = vsel %vm51, %v1115, %v1116
  %v1118 = vrot.slane %v1099, 5
  %v1119 = vsel %vm54, %v1118, %v1117
  %v1120 = vsel %vm56, %v1118, %v1119
  %v1121 = vrot.slane %v1101, 7
  %v1122 = vsel %vm44, %v1121, %v1100
  %v1123 = vsel %vm46, %v1121, %v1122
  %v1124 = vrot.slane %v1102, 6
  %v1125 = vsel %vm49, %v1124, %v1123
  %v1126 = vsel %vm51, %v1124, %v1125
  %v1127 = vrot.slane %v1103, 5
  %v1128 = vsel %vm54, %v1127, %v1126
  %v1129 = vsel %vm56, %v1127, %v1128
  %1130 = vrot.lane.b32.xlu0 %v1120, 32
  %v1131 = vpop.permute.xlu0 %1130
  %1132 = vrot.lane.b32.xlu0 %v1129, 32
  %v1133 = vpop.permute.xlu0 %1132
  %1136 = vst.msk [vmem:[%s753 + $0x4] sm:$0xf] %vm797, %v1131
  %1137 = vst.msk [vmem:[%s753 + $0x10] sm:$0xf] %vm797, %v1133
  %v1138 = vld [vmem:[%s0 + $0xa] sm:$0x1]
  %v1139 = vld [vmem:[%s0 + $0x1a] sm:$0x1]
  %v1140 = vld [vmem:[%s0 + $0x2a] sm:$0x1]
  %v1141 = vld [vmem:[%s0 + $0x3a] sm:$0x1]
  %v1142 = vld [vmem:[%s0 + $0x4a] sm:$0x1]
  %v1143 = vld [vmem:[%s0 + $0x5a] sm:$0x1]
  %v1144 = vld [vmem:[%s0 + $0x6a] sm:$0x1]
  %v1145 = vld [vmem:[%s0 + $0x7a] sm:$0x1]
  %v1154 = vrot.slane %v1139, 7
  %v1155 = vsel %vm44, %v1154, %v1138
  %v1156 = vsel %vm46, %v1154, %v1155
  %v1157 = vrot.slane %v1140, 6
  %v1158 = vsel %vm49, %v1157, %v1156
  %v1159 = vsel %vm51, %v1157, %v1158
  %v1160 = vrot.slane %v1141, 5
  %v1161 = vsel %vm54, %v1160, %v1159
  %v1162 = vsel %vm56, %v1160, %v1161
  %v1163 = vrot.slane %v1143, 7
  %v1164 = vsel %vm44, %v1163, %v1142
  %v1165 = vsel %vm46, %v1163, %v1164
  %v1166 = vrot.slane %v1144, 6
  %v1167 = vsel %vm49, %v1166, %v1165
  %v1168 = vsel %vm51, %v1166, %v1167
  %v1169 = vrot.slane %v1145, 5
  %v1170 = vsel %vm54, %v1169, %v1168
  %v1171 = vsel %vm56, %v1169, %v1170
  %1172 = vrot.lane.b32.xlu0 %v1162, 48
  %v1173 = vpop.permute.xlu0 %1172
  %1174 = vrot.lane.b32.xlu0 %v1171, 48
  %v1175 = vpop.permute.xlu0 %1174
  %1178 = vst.msk [vmem:[%s753 + $0x4] sm:$0xf] %vm840, %v1173
  %1179 = vst.msk [vmem:[%s753 + $0x10] sm:$0xf] %vm840, %v1175
  %v1180 = vld [vmem:[%s0 + $0xb] sm:$0x1]
  %v1181 = vld [vmem:[%s0 + $0x1b] sm:$0x1]
  %v1182 = vld [vmem:[%s0 + $0x2b] sm:$0x1]
  %v1183 = vld [vmem:[%s0 + $0x3b] sm:$0x1]
  %v1184 = vld [vmem:[%s0 + $0x4b] sm:$0x1]
  %v1185 = vld [vmem:[%s0 + $0x5b] sm:$0x1]
  %v1186 = vld [vmem:[%s0 + $0x6b] sm:$0x1]
  %v1187 = vld [vmem:[%s0 + $0x7b] sm:$0x1]
  %v1196 = vrot.slane %v1181, 7
  %v1197 = vsel %vm44, %v1196, %v1180
  %v1198 = vsel %vm46, %v1196, %v1197
  %v1199 = vrot.slane %v1182, 6
  %v1200 = vsel %vm49, %v1199, %v1198
  %v1201 = vsel %vm51, %v1199, %v1200
  %v1202 = vrot.slane %v1183, 5
  %v1203 = vsel %vm54, %v1202, %v1201
  %v1204 = vsel %vm56, %v1202, %v1203
  %v1205 = vrot.slane %v1185, 7
  %v1206 = vsel %vm44, %v1205, %v1184
  %v1207 = vsel %vm46, %v1205, %v1206
  %v1208 = vrot.slane %v1186, 6
  %v1209 = vsel %vm49, %v1208, %v1207
  %v1210 = vsel %vm51, %v1208, %v1209
  %v1211 = vrot.slane %v1187, 5
  %v1212 = vsel %vm54, %v1211, %v1210
  %v1213 = vsel %vm56, %v1211, %v1212
  %1214 = vrot.lane.b32.xlu0 %v1204, 64
  %v1215 = vpop.permute.xlu0 %1214
  %1216 = vrot.lane.b32.xlu0 %v1213, 64
  %v1217 = vpop.permute.xlu0 %1216
  %1220 = vst.msk [vmem:[%s753 + $0x4] sm:$0xf] %vm883, %v1215
  %1221 = vst.msk [vmem:[%s753 + $0x10] sm:$0xf] %vm883, %v1217
  %v1222 = vld [vmem:[%s0 + $0xc] sm:$0x1]
  %v1223 = vld [vmem:[%s0 + $0x1c] sm:$0x1]
  %v1224 = vld [vmem:[%s0 + $0x2c] sm:$0x1]
  %v1225 = vld [vmem:[%s0 + $0x3c] sm:$0x1]
  %v1226 = vld [vmem:[%s0 + $0x4c] sm:$0x1]
  %v1227 = vld [vmem:[%s0 + $0x5c] sm:$0x1]
  %v1228 = vld [vmem:[%s0 + $0x6c] sm:$0x1]
  %v1229 = vld [vmem:[%s0 + $0x7c] sm:$0x1]
  %v1238 = vrot.slane %v1223, 7
  %v1239 = vsel %vm44, %v1238, %v1222
  %v1240 = vsel %vm46, %v1238, %v1239
  %v1241 = vrot.slane %v1224, 6
  %v1242 = vsel %vm49, %v1241, %v1240
  %v1243 = vsel %vm51, %v1241, %v1242
  %v1244 = vrot.slane %v1225, 5
  %v1245 = vsel %vm54, %v1244, %v1243
  %v1246 = vsel %vm56, %v1244, %v1245
  %v1247 = vrot.slane %v1227, 7
  %v1248 = vsel %vm44, %v1247, %v1226
  %v1249 = vsel %vm46, %v1247, %v1248
  %v1250 = vrot.slane %v1228, 6
  %v1251 = vsel %vm49, %v1250, %v1249
  %v1252 = vsel %vm51, %v1250, %v1251
  %v1253 = vrot.slane %v1229, 5
  %v1254 = vsel %vm54, %v1253, %v1252
  %v1255 = vsel %vm56, %v1253, %v1254
  %1256 = vrot.lane.b32.xlu0 %v1246, 80
  %v1257 = vpop.permute.xlu0 %1256
  %1258 = vrot.lane.b32.xlu0 %v1255, 80
  %v1259 = vpop.permute.xlu0 %1258
  %1262 = vst.msk [vmem:[%s753 + $0x4] sm:$0xf] %vm926, %v1257
  %1263 = vst.msk [vmem:[%s753 + $0x10] sm:$0xf] %vm926, %v1259
  %v1264 = vld [vmem:[%s0 + $0xd] sm:$0x1]
  %v1265 = vld [vmem:[%s0 + $0x1d] sm:$0x1]
  %v1266 = vld [vmem:[%s0 + $0x2d] sm:$0x1]
  %v1267 = vld [vmem:[%s0 + $0x3d] sm:$0x1]
  %v1268 = vld [vmem:[%s0 + $0x4d] sm:$0x1]
  %v1269 = vld [vmem:[%s0 + $0x5d] sm:$0x1]
  %v1270 = vld [vmem:[%s0 + $0x6d] sm:$0x1]
  %v1271 = vld [vmem:[%s0 + $0x7d] sm:$0x1]
  %v1280 = vrot.slane %v1265, 7
  %v1281 = vsel %vm44, %v1280, %v1264
  %v1282 = vsel %vm46, %v1280, %v1281
  %v1283 = vrot.slane %v1266, 6
  %v1284 = vsel %vm49, %v1283, %v1282
  %v1285 = vsel %vm51, %v1283, %v1284
  %v1286 = vrot.slane %v1267, 5
  %v1287 = vsel %vm54, %v1286, %v1285
  %v1288 = vsel %vm56, %v1286, %v1287
  %v1289 = vrot.slane %v1269, 7
  %v1290 = vsel %vm44, %v1289, %v1268
  %v1291 = vsel %vm46, %v1289, %v1290
  %v1292 = vrot.slane %v1270, 6
  %v1293 = vsel %vm49, %v1292, %v1291
  %v1294 = vsel %vm51, %v1292, %v1293
  %v1295 = vrot.slane %v1271, 5
  %v1296 = vsel %vm54, %v1295, %v1294
  %v1297 = vsel %vm56, %v1295, %v1296
  %1298 = vrot.lane.b32.xlu0 %v1288, 96
  %v1299 = vpop.permute.xlu0 %1298
  %1300 = vrot.lane.b32.xlu0 %v1297, 96
  %v1301 = vpop.permute.xlu0 %1300
  %1304 = vst.msk [vmem:[%s753 + $0x4] sm:$0xf] %vm969, %v1299
  %1305 = vst.msk [vmem:[%s753 + $0x10] sm:$0xf] %vm969, %v1301
  %v1306 = vld [vmem:[%s0 + $0xe] sm:$0x1]
  %v1307 = vld [vmem:[%s0 + $0x1e] sm:$0x1]
  %v1308 = vld [vmem:[%s0 + $0x2e] sm:$0x1]
  %v1309 = vld [vmem:[%s0 + $0x3e] sm:$0x1]
  %v1310 = vld [vmem:[%s0 + $0x4e] sm:$0x1]
  %v1311 = vld [vmem:[%s0 + $0x5e] sm:$0x1]
  %v1312 = vld [vmem:[%s0 + $0x6e] sm:$0x1]
  %v1313 = vld [vmem:[%s0 + $0x7e] sm:$0x1]
  %v1322 = vrot.slane %v1307, 7
  %v1323 = vsel %vm44, %v1322, %v1306
  %v1324 = vsel %vm46, %v1322, %v1323
  %v1325 = vrot.slane %v1308, 6
  %v1326 = vsel %vm49, %v1325, %v1324
  %v1327 = vsel %vm51, %v1325, %v1326
  %v1328 = vrot.slane %v1309, 5
  %v1329 = vsel %vm54, %v1328, %v1327
  %v1330 = vsel %vm56, %v1328, %v1329
  %v1331 = vrot.slane %v1311, 7
  %v1332 = vsel %vm44, %v1331, %v1310
  %v1333 = vsel %vm46, %v1331, %v1332
  %v1334 = vrot.slane %v1312, 6
  %v1335 = vsel %vm49, %v1334, %v1333
  %v1336 = vsel %vm51, %v1334, %v1335
  %v1337 = vrot.slane %v1313, 5
  %v1338 = vsel %vm54, %v1337, %v1336
  %v1339 = vsel %vm56, %v1337, %v1338
  %1340 = vrot.lane.b32.xlu0 %v1330, 112
  %v1341 = vpop.permute.xlu0 %1340
  %1342 = vrot.lane.b32.xlu0 %v1339, 112
  %v1343 = vpop.permute.xlu0 %1342
  %1346 = vst.msk [vmem:[%s753 + $0x4] sm:$0xf] %vm1012, %v1341
  %1347 = vst.msk [vmem:[%s753 + $0x10] sm:$0xf] %vm1012, %v1343
  %v1348 = vld [vmem:[%s0 + $0xf] sm:$0x1]
  %v1349 = vld [vmem:[%s0 + $0x1f] sm:$0x1]
  %v1350 = vld [vmem:[%s0 + $0x2f] sm:$0x1]
  %v1351 = vld [vmem:[%s0 + $0x3f] sm:$0x1]
  %v1352 = vld [vmem:[%s0 + $0x4f] sm:$0x1]
  %v1353 = vld [vmem:[%s0 + $0x5f] sm:$0x1]
  %v1354 = vld [vmem:[%s0 + $0x6f] sm:$0x1]
  %v1355 = vld [vmem:[%s0 + $0x7f] sm:$0x1]
  %v1364 = vrot.slane %v1349, 7
  %v1365 = vsel %vm44, %v1364, %v1348
  %v1366 = vsel %vm46, %v1364, %v1365
  %v1367 = vrot.slane %v1350, 6
  %v1368 = vsel %vm49, %v1367, %v1366
  %v1369 = vsel %vm51, %v1367, %v1368
  %v1370 = vrot.slane %v1351, 5
  %v1371 = vsel %vm54, %v1370, %v1369
  %v1372 = vsel %vm56, %v1370, %v1371
  %v1373 = vrot.slane %v1353, 7
  %v1374 = vsel %vm44, %v1373, %v1352
  %v1375 = vsel %vm46, %v1373, %v1374
  %v1376 = vrot.slane %v1354, 6
  %v1377 = vsel %vm49, %v1376, %v1375
  %v1378 = vsel %vm51, %v1376, %v1377
  %v1379 = vrot.slane %v1355, 5
  %v1380 = vsel %vm54, %v1379, %v1378
  %v1381 = vsel %vm56, %v1379, %v1380
  %1384 = vst.msk [vmem:[%s753 + $0x8] sm:$0xf] %vm1051, %v1372
  %1385 = vst.msk [vmem:[%s753 + $0x14] sm:$0xf] %vm1051, %v1381
  %v1386 = vld [vmem:[%s0] sm:$0x1]
  %v1387 = vld [vmem:[%s0 + $0x10] sm:$0x1]
  %v1388 = vld [vmem:[%s0 + $0x20] sm:$0x1]
  %v1389 = vld [vmem:[%s0 + $0x30] sm:$0x1]
  %v1390 = vld [vmem:[%s0 + $0x40] sm:$0x1]
  %v1391 = vld [vmem:[%s0 + $0x50] sm:$0x1]
  %v1392 = vld [vmem:[%s0 + $0x60] sm:$0x1]
  %v1393 = vld [vmem:[%s0 + $0x70] sm:$0x1]
  %v1402 = vrot.slane %v1387, 7
  %v1403 = vsel %vm44, %v1402, %v1386
  %v1404 = vsel %vm46, %v1402, %v1403
  %v1405 = vrot.slane %v1388, 6
  %v1406 = vsel %vm49, %v1405, %v1404
  %v1407 = vsel %vm51, %v1405, %v1406
  %v1408 = vrot.slane %v1389, 5
  %v1409 = vsel %vm54, %v1408, %v1407
  %v1410 = vsel %vm56, %v1408, %v1409
  %v1411 = vrot.slane %v1391, 7
  %v1412 = vsel %vm44, %v1411, %v1390
  %v1413 = vsel %vm46, %v1411, %v1412
  %v1414 = vrot.slane %v1392, 6
  %v1415 = vsel %vm49, %v1414, %v1413
  %v1416 = vsel %vm51, %v1414, %v1415
  %v1417 = vrot.slane %v1393, 5
  %v1418 = vsel %vm54, %v1417, %v1416
  %v1419 = vsel %vm56, %v1417, %v1418
  %1420 = vrot.lane.b32.xlu0 %v1410, 15
  %v1421 = vpop.permute.xlu0 %1420
  %1422 = vrot.lane.b32.xlu0 %v1419, 15
  %v1423 = vpop.permute.xlu0 %1422
  %s1426 = scalar_lea.vmem [#allocation2], 48
  %vm1427 = vcmask 248960
  %1428 = vst.msk [vmem:[%s1426] sm:$0xf] %vm1427, %v1421
  %1429 = vst.msk [vmem:[%s1426 + $0xc] sm:$0xf] %vm1427, %v1423
  %v1430 = vld [vmem:[%s0 + $0x1] sm:$0x1]
  %v1431 = vld [vmem:[%s0 + $0x11] sm:$0x1]
  %v1432 = vld [vmem:[%s0 + $0x21] sm:$0x1]
  %v1433 = vld [vmem:[%s0 + $0x31] sm:$0x1]
  %v1434 = vld [vmem:[%s0 + $0x41] sm:$0x1]
  %v1435 = vld [vmem:[%s0 + $0x51] sm:$0x1]
  %v1436 = vld [vmem:[%s0 + $0x61] sm:$0x1]
  %v1437 = vld [vmem:[%s0 + $0x71] sm:$0x1]
  %v1446 = vrot.slane %v1431, 7
  %v1447 = vsel %vm44, %v1446, %v1430
  %v1448 = vsel %vm46, %v1446, %v1447
  %v1449 = vrot.slane %v1432, 6
  %v1450 = vsel %vm49, %v1449, %v1448
  %v1451 = vsel %vm51, %v1449, %v1450
  %v1452 = vrot.slane %v1433, 5
  %v1453 = vsel %vm54, %v1452, %v1451
  %v1454 = vsel %vm56, %v1452, %v1453
  %v1455 = vrot.slane %v1435, 7
  %v1456 = vsel %vm44, %v1455, %v1434
  %v1457 = vsel %vm46, %v1455, %v1456
  %v1458 = vrot.slane %v1436, 6
  %v1459 = vsel %vm49, %v1458, %v1457
  %v1460 = vsel %vm51, %v1458, %v1459
  %v1461 = vrot.slane %v1437, 5
  %v1462 = vsel %vm54, %v1461, %v1460
  %v1463 = vsel %vm56, %v1461, %v1462
  %1464 = vrot.lane.b32.xlu0 %v1454, 31
  %v1465 = vpop.permute.xlu0 %1464
  %1466 = vrot.lane.b32.xlu0 %v1463, 31
  %v1467 = vpop.permute.xlu0 %1466
  %vm1470 = vcmask 380160
  %1471 = vst.msk [vmem:[%s1426] sm:$0xf] %vm1470, %v1465
  %1472 = vst.msk [vmem:[%s1426 + $0xc] sm:$0xf] %vm1470, %v1467
  %v1473 = vld [vmem:[%s0 + $0x2] sm:$0x1]
  %v1474 = vld [vmem:[%s0 + $0x12] sm:$0x1]
  %v1475 = vld [vmem:[%s0 + $0x22] sm:$0x1]
  %v1476 = vld [vmem:[%s0 + $0x32] sm:$0x1]
  %v1477 = vld [vmem:[%s0 + $0x42] sm:$0x1]
  %v1478 = vld [vmem:[%s0 + $0x52] sm:$0x1]
  %v1479 = vld [vmem:[%s0 + $0x62] sm:$0x1]
  %v1480 = vld [vmem:[%s0 + $0x72] sm:$0x1]
  %v1489 = vrot.slane %v1474, 7
  %v1490 = vsel %vm44, %v1489, %v1473
  %v1491 = vsel %vm46, %v1489, %v1490
  %v1492 = vrot.slane %v1475, 6
  %v1493 = vsel %vm49, %v1492, %v1491
  %v1494 = vsel %vm51, %v1492, %v1493
  %v1495 = vrot.slane %v1476, 5
  %v1496 = vsel %vm54, %v1495, %v1494
  %v1497 = vsel %vm56, %v1495, %v1496
  %v1498 = vrot.slane %v1478, 7
  %v1499 = vsel %vm44, %v1498, %v1477
  %v1500 = vsel %vm46, %v1498, %v1499
  %v1501 = vrot.slane %v1479, 6
  %v1502 = vsel %vm49, %v1501, %v1500
  %v1503 = vsel %vm51, %v1501, %v1502
  %v1504 = vrot.slane %v1480, 5
  %v1505 = vsel %vm54, %v1504, %v1503
  %v1506 = vsel %vm56, %v1504, %v1505
  %1507 = vrot.lane.b32.xlu0 %v1497, 47
  %v1508 = vpop.permute.xlu0 %1507
  %1509 = vrot.lane.b32.xlu0 %v1506, 47
  %v1510 = vpop.permute.xlu0 %1509
  %vm1513 = vcmask 511360
  %1514 = vst.msk [vmem:[%s1426] sm:$0xf] %vm1513, %v1508
  %1515 = vst.msk [vmem:[%s1426 + $0xc] sm:$0xf] %vm1513, %v1510
  %v1516 = vld [vmem:[%s0 + $0x3] sm:$0x1]
  %v1517 = vld [vmem:[%s0 + $0x13] sm:$0x1]
  %v1518 = vld [vmem:[%s0 + $0x23] sm:$0x1]
  %v1519 = vld [vmem:[%s0 + $0x33] sm:$0x1]
  %v1520 = vld [vmem:[%s0 + $0x43] sm:$0x1]
  %v1521 = vld [vmem:[%s0 + $0x53] sm:$0x1]
  %v1522 = vld [vmem:[%s0 + $0x63] sm:$0x1]
  %v1523 = vld [vmem:[%s0 + $0x73] sm:$0x1]
  %v1532 = vrot.slane %v1517, 7
  %v1533 = vsel %vm44, %v1532, %v1516
  %v1534 = vsel %vm46, %v1532, %v1533
  %v1535 = vrot.slane %v1518, 6
  %v1536 = vsel %vm49, %v1535, %v1534
  %v1537 = vsel %vm51, %v1535, %v1536
  %v1538 = vrot.slane %v1519, 5
  %v1539 = vsel %vm54, %v1538, %v1537
  %v1540 = vsel %vm56, %v1538, %v1539
  %v1541 = vrot.slane %v1521, 7
  %v1542 = vsel %vm44, %v1541, %v1520
  %v1543 = vsel %vm46, %v1541, %v1542
  %v1544 = vrot.slane %v1522, 6
  %v1545 = vsel %vm49, %v1544, %v1543
  %v1546 = vsel %vm51, %v1544, %v1545
  %v1547 = vrot.slane %v1523, 5
  %v1548 = vsel %vm54, %v1547, %v1546
  %v1549 = vsel %vm56, %v1547, %v1548
  %1550 = vrot.lane.b32.xlu0 %v1540, 63
  %v1551 = vpop.permute.xlu0 %1550
  %1552 = vrot.lane.b32.xlu0 %v1549, 63
  %v1553 = vpop.permute.xlu0 %1552
  %vm1556 = vcmask 642560
  %1557 = vst.msk [vmem:[%s1426] sm:$0xf] %vm1556, %v1551
  %1558 = vst.msk [vmem:[%s1426 + $0xc] sm:$0xf] %vm1556, %v1553
  %v1559 = vld [vmem:[%s0 + $0x4] sm:$0x1]
  %v1560 = vld [vmem:[%s0 + $0x14] sm:$0x1]
  %v1561 = vld [vmem:[%s0 + $0x24] sm:$0x1]
  %v1562 = vld [vmem:[%s0 + $0x34] sm:$0x1]
  %v1563 = vld [vmem:[%s0 + $0x44] sm:$0x1]
  %v1564 = vld [vmem:[%s0 + $0x54] sm:$0x1]
  %v1565 = vld [vmem:[%s0 + $0x64] sm:$0x1]
  %v1566 = vld [vmem:[%s0 + $0x74] sm:$0x1]
  %v1575 = vrot.slane %v1560, 7
  %v1576 = vsel %vm44, %v1575, %v1559
  %v1577 = vsel %vm46, %v1575, %v1576
  %v1578 = vrot.slane %v1561, 6
  %v1579 = vsel %vm49, %v1578, %v1577
  %v1580 = vsel %vm51, %v1578, %v1579
  %v1581 = vrot.slane %v1562, 5
  %v1582 = vsel %vm54, %v1581, %v1580
  %v1583 = vsel %vm56, %v1581, %v1582
  %v1584 = vrot.slane %v1564, 7
  %v1585 = vsel %vm44, %v1584, %v1563
  %v1586 = vsel %vm46, %v1584, %v1585
  %v1587 = vrot.slane %v1565, 6
  %v1588 = vsel %vm49, %v1587, %v1586
  %v1589 = vsel %vm51, %v1587, %v1588
  %v1590 = vrot.slane %v1566, 5
  %v1591 = vsel %vm54, %v1590, %v1589
  %v1592 = vsel %vm56, %v1590, %v1591
  %1593 = vrot.lane.b32.xlu0 %v1583, 79
  %v1594 = vpop.permute.xlu0 %1593
  %1595 = vrot.lane.b32.xlu0 %v1592, 79
  %v1596 = vpop.permute.xlu0 %1595
  %vm1599 = vcmask 773760
  %1600 = vst.msk [vmem:[%s1426] sm:$0xf] %vm1599, %v1594
  %1601 = vst.msk [vmem:[%s1426 + $0xc] sm:$0xf] %vm1599, %v1596
  %v1602 = vld [vmem:[%s0 + $0x5] sm:$0x1]
  %v1603 = vld [vmem:[%s0 + $0x15] sm:$0x1]
  %v1604 = vld [vmem:[%s0 + $0x25] sm:$0x1]
  %v1605 = vld [vmem:[%s0 + $0x35] sm:$0x1]
  %v1606 = vld [vmem:[%s0 + $0x45] sm:$0x1]
  %v1607 = vld [vmem:[%s0 + $0x55] sm:$0x1]
  %v1608 = vld [vmem:[%s0 + $0x65] sm:$0x1]
  %v1609 = vld [vmem:[%s0 + $0x75] sm:$0x1]
  %v1618 = vrot.slane %v1603, 7
  %v1619 = vsel %vm44, %v1618, %v1602
  %v1620 = vsel %vm46, %v1618, %v1619
  %v1621 = vrot.slane %v1604, 6
  %v1622 = vsel %vm49, %v1621, %v1620
  %v1623 = vsel %vm51, %v1621, %v1622
  %v1624 = vrot.slane %v1605, 5
  %v1625 = vsel %vm54, %v1624, %v1623
  %v1626 = vsel %vm56, %v1624, %v1625
  %v1627 = vrot.slane %v1607, 7
  %v1628 = vsel %vm44, %v1627, %v1606
  %v1629 = vsel %vm46, %v1627, %v1628
  %v1630 = vrot.slane %v1608, 6
  %v1631 = vsel %vm49, %v1630, %v1629
  %v1632 = vsel %vm51, %v1630, %v1631
  %v1633 = vrot.slane %v1609, 5
  %v1634 = vsel %vm54, %v1633, %v1632
  %v1635 = vsel %vm56, %v1633, %v1634
  %1636 = vrot.lane.b32.xlu0 %v1626, 95
  %v1637 = vpop.permute.xlu0 %1636
  %1638 = vrot.lane.b32.xlu0 %v1635, 95
  %v1639 = vpop.permute.xlu0 %1638
  %vm1642 = vcmask 904960
  %1643 = vst.msk [vmem:[%s1426] sm:$0xf] %vm1642, %v1637
  %1644 = vst.msk [vmem:[%s1426 + $0xc] sm:$0xf] %vm1642, %v1639
  %v1645 = vld [vmem:[%s0 + $0x6] sm:$0x1]
  %v1646 = vld [vmem:[%s0 + $0x16] sm:$0x1]
  %v1647 = vld [vmem:[%s0 + $0x26] sm:$0x1]
  %v1648 = vld [vmem:[%s0 + $0x36] sm:$0x1]
  %v1649 = vld [vmem:[%s0 + $0x46] sm:$0x1]
  %v1650 = vld [vmem:[%s0 + $0x56] sm:$0x1]
  %v1651 = vld [vmem:[%s0 + $0x66] sm:$0x1]
  %v1652 = vld [vmem:[%s0 + $0x76] sm:$0x1]
  %v1661 = vrot.slane %v1646, 7
  %v1662 = vsel %vm44, %v1661, %v1645
  %v1663 = vsel %vm46, %v1661, %v1662
  %v1664 = vrot.slane %v1647, 6
  %v1665 = vsel %vm49, %v1664, %v1663
  %v1666 = vsel %vm51, %v1664, %v1665
  %v1667 = vrot.slane %v1648, 5
  %v1668 = vsel %vm54, %v1667, %v1666
  %v1669 = vsel %vm56, %v1667, %v1668
  %v1670 = vrot.slane %v1650, 7
  %v1671 = vsel %vm44, %v1670, %v1649
  %v1672 = vsel %vm46, %v1670, %v1671
  %v1673 = vrot.slane %v1651, 6
  %v1674 = vsel %vm49, %v1673, %v1672
  %v1675 = vsel %vm51, %v1673, %v1674
  %v1676 = vrot.slane %v1652, 5
  %v1677 = vsel %vm54, %v1676, %v1675
  %v1678 = vsel %vm56, %v1676, %v1677
  %1679 = vrot.lane.b32.xlu0 %v1669, 111
  %v1680 = vpop.permute.xlu0 %1679
  %1681 = vrot.lane.b32.xlu0 %v1678, 111
  %v1682 = vpop.permute.xlu0 %1681
  %vm1685 = vcmask 1036160
  %1686 = vst.msk [vmem:[%s1426] sm:$0xf] %vm1685, %v1680
  %1687 = vst.msk [vmem:[%s1426 + $0xc] sm:$0xf] %vm1685, %v1682
  %v1688 = vld [vmem:[%s0 + $0x7] sm:$0x1]
  %v1689 = vld [vmem:[%s0 + $0x17] sm:$0x1]
  %v1690 = vld [vmem:[%s0 + $0x27] sm:$0x1]
  %v1691 = vld [vmem:[%s0 + $0x37] sm:$0x1]
  %v1692 = vld [vmem:[%s0 + $0x47] sm:$0x1]
  %v1693 = vld [vmem:[%s0 + $0x57] sm:$0x1]
  %v1694 = vld [vmem:[%s0 + $0x67] sm:$0x1]
  %v1695 = vld [vmem:[%s0 + $0x77] sm:$0x1]
  %v1704 = vrot.slane %v1689, 7
  %v1705 = vsel %vm44, %v1704, %v1688
  %v1706 = vsel %vm46, %v1704, %v1705
  %v1707 = vrot.slane %v1690, 6
  %v1708 = vsel %vm49, %v1707, %v1706
  %v1709 = vsel %vm51, %v1707, %v1708
  %v1710 = vrot.slane %v1691, 5
  %v1711 = vsel %vm54, %v1710, %v1709
  %v1712 = vsel %vm56, %v1710, %v1711
  %v1713 = vrot.slane %v1693, 7
  %v1714 = vsel %vm44, %v1713, %v1692
  %v1715 = vsel %vm46, %v1713, %v1714
  %v1716 = vrot.slane %v1694, 6
  %v1717 = vsel %vm49, %v1716, %v1715
  %v1718 = vsel %vm51, %v1716, %v1717
  %v1719 = vrot.slane %v1695, 5
  %v1720 = vsel %vm54, %v1719, %v1718
  %v1721 = vsel %vm56, %v1719, %v1720
  %1722 = vrot.lane.b32.xlu0 %v1712, 127
  %v1723 = vpop.permute.xlu0 %1722
  %1724 = vrot.lane.b32.xlu0 %v1721, 127
  %v1725 = vpop.permute.xlu0 %1724
  %vm1728 = vcmask 117760
  %1729 = vst.msk [vmem:[%s1426 + $0x4] sm:$0xf] %vm1728, %v1723
  %1730 = vst.msk [vmem:[%s1426 + $0x10] sm:$0xf] %vm1728, %v1725
  %v1731 = vld [vmem:[%s0 + $0x8] sm:$0x1]
  %v1732 = vld [vmem:[%s0 + $0x18] sm:$0x1]
  %v1733 = vld [vmem:[%s0 + $0x28] sm:$0x1]
  %v1734 = vld [vmem:[%s0 + $0x38] sm:$0x1]
  %v1735 = vld [vmem:[%s0 + $0x48] sm:$0x1]
  %v1736 = vld [vmem:[%s0 + $0x58] sm:$0x1]
  %v1737 = vld [vmem:[%s0 + $0x68] sm:$0x1]
  %v1738 = vld [vmem:[%s0 + $0x78] sm:$0x1]
  %v1747 = vrot.slane %v1732, 7
  %v1748 = vsel %vm44, %v1747, %v1731
  %v1749 = vsel %vm46, %v1747, %v1748
  %v1750 = vrot.slane %v1733, 6
  %v1751 = vsel %vm49, %v1750, %v1749
  %v1752 = vsel %vm51, %v1750, %v1751
  %v1753 = vrot.slane %v1734, 5
  %v1754 = vsel %vm54, %v1753, %v1752
  %v1755 = vsel %vm56, %v1753, %v1754
  %v1756 = vrot.slane %v1736, 7
  %v1757 = vsel %vm44, %v1756, %v1735
  %v1758 = vsel %vm46, %v1756, %v1757
  %v1759 = vrot.slane %v1737, 6
  %v1760 = vsel %vm49, %v1759, %v1758
  %v1761 = vsel %vm51, %v1759, %v1760
  %v1762 = vrot.slane %v1738, 5
  %v1763 = vsel %vm54, %v1762, %v1761
  %v1764 = vsel %vm56, %v1762, %v1763
  %1765 = vrot.lane.b32.xlu0 %v1755, 15
  %v1766 = vpop.permute.xlu0 %1765
  %1767 = vrot.lane.b32.xlu0 %v1764, 15
  %v1768 = vpop.permute.xlu0 %1767
  %1771 = vst.msk [vmem:[%s1426 + $0x4] sm:$0xf] %vm1427, %v1766
  %1772 = vst.msk [vmem:[%s1426 + $0x10] sm:$0xf] %vm1427, %v1768
  %v1773 = vld [vmem:[%s0 + $0x9] sm:$0x1]
  %v1774 = vld [vmem:[%s0 + $0x19] sm:$0x1]
  %v1775 = vld [vmem:[%s0 + $0x29] sm:$0x1]
  %v1776 = vld [vmem:[%s0 + $0x39] sm:$0x1]
  %v1777 = vld [vmem:[%s0 + $0x49] sm:$0x1]
  %v1778 = vld [vmem:[%s0 + $0x59] sm:$0x1]
  %v1779 = vld [vmem:[%s0 + $0x69] sm:$0x1]
  %v1780 = vld [vmem:[%s0 + $0x79] sm:$0x1]
  %v1789 = vrot.slane %v1774, 7
  %v1790 = vsel %vm44, %v1789, %v1773
  %v1791 = vsel %vm46, %v1789, %v1790
  %v1792 = vrot.slane %v1775, 6
  %v1793 = vsel %vm49, %v1792, %v1791
  %v1794 = vsel %vm51, %v1792, %v1793
  %v1795 = vrot.slane %v1776, 5
  %v1796 = vsel %vm54, %v1795, %v1794
  %v1797 = vsel %vm56, %v1795, %v1796
  %v1798 = vrot.slane %v1778, 7
  %v1799 = vsel %vm44, %v1798, %v1777
  %v1800 = vsel %vm46, %v1798, %v1799
  %v1801 = vrot.slane %v1779, 6
  %v1802 = vsel %vm49, %v1801, %v1800
  %v1803 = vsel %vm51, %v1801, %v1802
  %v1804 = vrot.slane %v1780, 5
  %v1805 = vsel %vm54, %v1804, %v1803
  %v1806 = vsel %vm56, %v1804, %v1805
  %1807 = vrot.lane.b32.xlu0 %v1797, 31
  %v1808 = vpop.permute.xlu0 %1807
  %1809 = vrot.lane.b32.xlu0 %v1806, 31
  %v1810 = vpop.permute.xlu0 %1809
  %1813 = vst.msk [vmem:[%s1426 + $0x4] sm:$0xf] %vm1470, %v1808
  %1814 = vst.msk [vmem:[%s1426 + $0x10] sm:$0xf] %vm1470, %v1810
  %v1815 = vld [vmem:[%s0 + $0xa] sm:$0x1]
  %v1816 = vld [vmem:[%s0 + $0x1a] sm:$0x1]
  %v1817 = vld [vmem:[%s0 + $0x2a] sm:$0x1]
  %v1818 = vld [vmem:[%s0 + $0x3a] sm:$0x1]
  %v1819 = vld [vmem:[%s0 + $0x4a] sm:$0x1]
  %v1820 = vld [vmem:[%s0 + $0x5a] sm:$0x1]
  %v1821 = vld [vmem:[%s0 + $0x6a] sm:$0x1]
  %v1822 = vld [vmem:[%s0 + $0x7a] sm:$0x1]
  %v1831 = vrot.slane %v1816, 7
  %v1832 = vsel %vm44, %v1831, %v1815
  %v1833 = vsel %vm46, %v1831, %v1832
  %v1834 = vrot.slane %v1817, 6
  %v1835 = vsel %vm49, %v1834, %v1833
  %v1836 = vsel %vm51, %v1834, %v1835
  %v1837 = vrot.slane %v1818, 5
  %v1838 = vsel %vm54, %v1837, %v1836
  %v1839 = vsel %vm56, %v1837, %v1838
  %v1840 = vrot.slane %v1820, 7
  %v1841 = vsel %vm44, %v1840, %v1819
  %v1842 = vsel %vm46, %v1840, %v1841
  %v1843 = vrot.slane %v1821, 6
  %v1844 = vsel %vm49, %v1843, %v1842
  %v1845 = vsel %vm51, %v1843, %v1844
  %v1846 = vrot.slane %v1822, 5
  %v1847 = vsel %vm54, %v1846, %v1845
  %v1848 = vsel %vm56, %v1846, %v1847
  %1849 = vrot.lane.b32.xlu0 %v1839, 47
  %v1850 = vpop.permute.xlu0 %1849
  %1851 = vrot.lane.b32.xlu0 %v1848, 47
  %v1852 = vpop.permute.xlu0 %1851
  %1855 = vst.msk [vmem:[%s1426 + $0x4] sm:$0xf] %vm1513, %v1850
  %1856 = vst.msk [vmem:[%s1426 + $0x10] sm:$0xf] %vm1513, %v1852
  %v1857 = vld [vmem:[%s0 + $0xb] sm:$0x1]
  %v1858 = vld [vmem:[%s0 + $0x1b] sm:$0x1]
  %v1859 = vld [vmem:[%s0 + $0x2b] sm:$0x1]
  %v1860 = vld [vmem:[%s0 + $0x3b] sm:$0x1]
  %v1861 = vld [vmem:[%s0 + $0x4b] sm:$0x1]
  %v1862 = vld [vmem:[%s0 + $0x5b] sm:$0x1]
  %v1863 = vld [vmem:[%s0 + $0x6b] sm:$0x1]
  %v1864 = vld [vmem:[%s0 + $0x7b] sm:$0x1]
  %v1873 = vrot.slane %v1858, 7
  %v1874 = vsel %vm44, %v1873, %v1857
  %v1875 = vsel %vm46, %v1873, %v1874
  %v1876 = vrot.slane %v1859, 6
  %v1877 = vsel %vm49, %v1876, %v1875
  %v1878 = vsel %vm51, %v1876, %v1877
  %v1879 = vrot.slane %v1860, 5
  %v1880 = vsel %vm54, %v1879, %v1878
  %v1881 = vsel %vm56, %v1879, %v1880
  %v1882 = vrot.slane %v1862, 7
  %v1883 = vsel %vm44, %v1882, %v1861
  %v1884 = vsel %vm46, %v1882, %v1883
  %v1885 = vrot.slane %v1863, 6
  %v1886 = vsel %vm49, %v1885, %v1884
  %v1887 = vsel %vm51, %v1885, %v1886
  %v1888 = vrot.slane %v1864, 5
  %v1889 = vsel %vm54, %v1888, %v1887
  %v1890 = vsel %vm56, %v1888, %v1889
  %1891 = vrot.lane.b32.xlu0 %v1881, 63
  %v1892 = vpop.permute.xlu0 %1891
  %1893 = vrot.lane.b32.xlu0 %v1890, 63
  %v1894 = vpop.permute.xlu0 %1893
  %1897 = vst.msk [vmem:[%s1426 + $0x4] sm:$0xf] %vm1556, %v1892
  %1898 = vst.msk [vmem:[%s1426 + $0x10] sm:$0xf] %vm1556, %v1894
  %v1899 = vld [vmem:[%s0 + $0xc] sm:$0x1]
  %v1900 = vld [vmem:[%s0 + $0x1c] sm:$0x1]
  %v1901 = vld [vmem:[%s0 + $0x2c] sm:$0x1]
  %v1902 = vld [vmem:[%s0 + $0x3c] sm:$0x1]
  %v1903 = vld [vmem:[%s0 + $0x4c] sm:$0x1]
  %v1904 = vld [vmem:[%s0 + $0x5c] sm:$0x1]
  %v1905 = vld [vmem:[%s0 + $0x6c] sm:$0x1]
  %v1906 = vld [vmem:[%s0 + $0x7c] sm:$0x1]
  %v1915 = vrot.slane %v1900, 7
  %v1916 = vsel %vm44, %v1915, %v1899
  %v1917 = vsel %vm46, %v1915, %v1916
  %v1918 = vrot.slane %v1901, 6
  %v1919 = vsel %vm49, %v1918, %v1917
  %v1920 = vsel %vm51, %v1918, %v1919
  %v1921 = vrot.slane %v1902, 5
  %v1922 = vsel %vm54, %v1921, %v1920
  %v1923 = vsel %vm56, %v1921, %v1922
  %v1924 = vrot.slane %v1904, 7
  %v1925 = vsel %vm44, %v1924, %v1903
  %v1926 = vsel %vm46, %v1924, %v1925
  %v1927 = vrot.slane %v1905, 6
  %v1928 = vsel %vm49, %v1927, %v1926
  %v1929 = vsel %vm51, %v1927, %v1928
  %v1930 = vrot.slane %v1906, 5
  %v1931 = vsel %vm54, %v1930, %v1929
  %v1932 = vsel %vm56, %v1930, %v1931
  %1933 = vrot.lane.b32.xlu0 %v1923, 79
  %v1934 = vpop.permute.xlu0 %1933
  %1935 = vrot.lane.b32.xlu0 %v1932, 79
  %v1936 = vpop.permute.xlu0 %1935
  %1939 = vst.msk [vmem:[%s1426 + $0x4] sm:$0xf] %vm1599, %v1934
  %1940 = vst.msk [vmem:[%s1426 + $0x10] sm:$0xf] %vm1599, %v1936
  %v1941 = vld [vmem:[%s0 + $0xd] sm:$0x1]
  %v1942 = vld [vmem:[%s0 + $0x1d] sm:$0x1]
  %v1943 = vld [vmem:[%s0 + $0x2d] sm:$0x1]
  %v1944 = vld [vmem:[%s0 + $0x3d] sm:$0x1]
  %v1945 = vld [vmem:[%s0 + $0x4d] sm:$0x1]
  %v1946 = vld [vmem:[%s0 + $0x5d] sm:$0x1]
  %v1947 = vld [vmem:[%s0 + $0x6d] sm:$0x1]
  %v1948 = vld [vmem:[%s0 + $0x7d] sm:$0x1]
  %v1957 = vrot.slane %v1942, 7
  %v1958 = vsel %vm44, %v1957, %v1941
  %v1959 = vsel %vm46, %v1957, %v1958
  %v1960 = vrot.slane %v1943, 6
  %v1961 = vsel %vm49, %v1960, %v1959
  %v1962 = vsel %vm51, %v1960, %v1961
  %v1963 = vrot.slane %v1944, 5
  %v1964 = vsel %vm54, %v1963, %v1962
  %v1965 = vsel %vm56, %v1963, %v1964
  %v1966 = vrot.slane %v1946, 7
  %v1967 = vsel %vm44, %v1966, %v1945
  %v1968 = vsel %vm46, %v1966, %v1967
  %v1969 = vrot.slane %v1947, 6
  %v1970 = vsel %vm49, %v1969, %v1968
  %v1971 = vsel %vm51, %v1969, %v1970
  %v1972 = vrot.slane %v1948, 5
  %v1973 = vsel %vm54, %v1972, %v1971
  %v1974 = vsel %vm56, %v1972, %v1973
  %1975 = vrot.lane.b32.xlu0 %v1965, 95
  %v1976 = vpop.permute.xlu0 %1975
  %1977 = vrot.lane.b32.xlu0 %v1974, 95
  %v1978 = vpop.permute.xlu0 %1977
  %1981 = vst.msk [vmem:[%s1426 + $0x4] sm:$0xf] %vm1642, %v1976
  %1982 = vst.msk [vmem:[%s1426 + $0x10] sm:$0xf] %vm1642, %v1978
  %v1983 = vld [vmem:[%s0 + $0xe] sm:$0x1]
  %v1984 = vld [vmem:[%s0 + $0x1e] sm:$0x1]
  %v1985 = vld [vmem:[%s0 + $0x2e] sm:$0x1]
  %v1986 = vld [vmem:[%s0 + $0x3e] sm:$0x1]
  %v1987 = vld [vmem:[%s0 + $0x4e] sm:$0x1]
  %v1988 = vld [vmem:[%s0 + $0x5e] sm:$0x1]
  %v1989 = vld [vmem:[%s0 + $0x6e] sm:$0x1]
  %v1990 = vld [vmem:[%s0 + $0x7e] sm:$0x1]
  %v1999 = vrot.slane %v1984, 7
  %v2000 = vsel %vm44, %v1999, %v1983
  %v2001 = vsel %vm46, %v1999, %v2000
  %v2002 = vrot.slane %v1985, 6
  %v2003 = vsel %vm49, %v2002, %v2001
  %v2004 = vsel %vm51, %v2002, %v2003
  %v2005 = vrot.slane %v1986, 5
  %v2006 = vsel %vm54, %v2005, %v2004
  %v2007 = vsel %vm56, %v2005, %v2006
  %v2008 = vrot.slane %v1988, 7
  %v2009 = vsel %vm44, %v2008, %v1987
  %v2010 = vsel %vm46, %v2008, %v2009
  %v2011 = vrot.slane %v1989, 6
  %v2012 = vsel %vm49, %v2011, %v2010
  %v2013 = vsel %vm51, %v2011, %v2012
  %v2014 = vrot.slane %v1990, 5
  %v2015 = vsel %vm54, %v2014, %v2013
  %v2016 = vsel %vm56, %v2014, %v2015
  %2017 = vrot.lane.b32.xlu0 %v2007, 111
  %v2018 = vpop.permute.xlu0 %2017
  %2019 = vrot.lane.b32.xlu0 %v2016, 111
  %v2020 = vpop.permute.xlu0 %2019
  %2023 = vst.msk [vmem:[%s1426 + $0x4] sm:$0xf] %vm1685, %v2018
  %2024 = vst.msk [vmem:[%s1426 + $0x10] sm:$0xf] %vm1685, %v2020
  %v2025 = vld [vmem:[%s0 + $0xf] sm:$0x1]
  %v2026 = vld [vmem:[%s0 + $0x1f] sm:$0x1]
  %v2027 = vld [vmem:[%s0 + $0x2f] sm:$0x1]
  %v2028 = vld [vmem:[%s0 + $0x3f] sm:$0x1]
  %v2029 = vld [vmem:[%s0 + $0x4f] sm:$0x1]
  %v2030 = vld [vmem:[%s0 + $0x5f] sm:$0x1]
  %v2031 = vld [vmem:[%s0 + $0x6f] sm:$0x1]
  %v2032 = vld [vmem:[%s0 + $0x7f] sm:$0x1]
  %v2041 = vrot.slane %v2026, 7
  %v2042 = vsel %vm44, %v2041, %v2025
  %v2043 = vsel %vm46, %v2041, %v2042
  %v2044 = vrot.slane %v2027, 6
  %v2045 = vsel %vm49, %v2044, %v2043
  %v2046 = vsel %vm51, %v2044, %v2045
  %v2047 = vrot.slane %v2028, 5
  %v2048 = vsel %vm54, %v2047, %v2046
  %v2049 = vsel %vm56, %v2047, %v2048
  %v2050 = vrot.slane %v2030, 7
  %v2051 = vsel %vm44, %v2050, %v2029
  %v2052 = vsel %vm46, %v2050, %v2051
  %v2053 = vrot.slane %v2031, 6
  %v2054 = vsel %vm49, %v2053, %v2052
  %v2055 = vsel %vm51, %v2053, %v2054
  %v2056 = vrot.slane %v2032, 5
  %v2057 = vsel %vm54, %v2056, %v2055
  %v2058 = vsel %vm56, %v2056, %v2057
  %2059 = vrot.lane.b32.xlu0 %v2049, 127
  %v2060 = vpop.permute.xlu0 %2059
  %2061 = vrot.lane.b32.xlu0 %v2058, 127
  %v2062 = vpop.permute.xlu0 %2061
  %2065 = vst.msk [vmem:[%s1426 + $0x8] sm:$0xf] %vm1728, %v2060
  %2066 = vst.msk [vmem:[%s1426 + $0x14] sm:$0xf] %vm1728, %v2062
  %v2067 = vld [vmem:[#allocation2] sm:$0xff]
  %v2069 = vcombine.high %v2067, %v2067
  %2071 = vst [vmem:[#allocation3] sm:$0xf] %v2067
  %2072 = vst [vmem:[#allocation3 + $0x8] sm:$0xf] %v2069
  %s2073 = scalar_lea.vmem [#allocation2], 12
  %v2074 = vld [vmem:[%s2073] sm:$0xff]
  %v2076 = vcombine.high %v2074, %v2074
  %2078 = vst [vmem:[#allocation3 + $0x10] sm:$0xf] %v2074
  %2079 = vst [vmem:[#allocation3 + $0x18] sm:$0xf] %v2076
  %v2080 = vld [vmem:[%s753] sm:$0xff]
  %v2082 = vcombine.low %v2080, %v2080
  %2084 = vst [vmem:[#allocation3] sm:$0xf0] %v2082
  %2085 = vst [vmem:[#allocation3 + $0x8] sm:$0xf0] %v2080
  %s2086 = scalar_lea.vmem [#allocation2], 36
  %v2087 = vld [vmem:[%s2086] sm:$0xff]
  %v2089 = vcombine.low %v2087, %v2087
  %2091 = vst [vmem:[#allocation3 + $0x10] sm:$0xf0] %v2089
  %2092 = vst [vmem:[#allocation3 + $0x18] sm:$0xf0] %v2087
  %v2093 = vld [vmem:[%s1426] sm:$0xff]
  %v2095 = vcombine.high %v2093, %v2093
  %2097 = vst [vmem:[#allocation3 + $0x20] sm:$0xf] %v2093
  %2098 = vst [vmem:[#allocation3 + $0x28] sm:$0xf] %v2095
  %s2099 = scalar_lea.vmem [#allocation2], 60
  %v2100 = vld [vmem:[%s2099] sm:$0xff]
  %v2102 = vcombine.high %v2100, %v2100
  %2104 = vst [vmem:[#allocation3 + $0x30] sm:$0xf] %v2100
  %2105 = vst [vmem:[#allocation3 + $0x38] sm:$0xf] %v2102
  %v2106 = vld [vmem:[#allocation2] sm:$0xff]
  %v2107 = vld [vmem:[#allocation2 + $0x8] sm:$0xf]
  %v2110 = vcombine.low %v2106, %v2106
  %v2111 = vcombine.low %v2107, %v2107
  %2112 = vrot.lane.b32.xlu0 %v2110, 112
  %v2113 = vpop.permute.xlu0 %2112
  %2114 = vrot.lane.b32.xlu0 %v2106, 112
  %v2115 = vpop.permute.xlu0 %2114
  %2116 = vrot.lane.b32.xlu0 %v2111, 112
  %v2117 = vpop.permute.xlu0 %2116
  %vm2118 = vcmask 916480
  %v2119 = vsel %vm2118, %v2113, %v2115
  %v2120 = vsel %vm2118, %v2115, %v2117
  %2123 = vst [vmem:[#allocation3 + $0x20] sm:$0xf0] %v2119
  %2124 = vst [vmem:[#allocation3 + $0x28] sm:$0xf0] %v2120
  %v2125 = vld [vmem:[%s2073] sm:$0xff]
  %v2126 = vld [vmem:[%s2073 + $0x8] sm:$0xf]
  %v2129 = vcombine.low %v2125, %v2125
  %v2130 = vcombine.low %v2126, %v2126
  %2131 = vrot.lane.b32.xlu0 %v2129, 112
  %v2132 = vpop.permute.xlu0 %2131
  %2133 = vrot.lane.b32.xlu0 %v2125, 112
  %v2134 = vpop.permute.xlu0 %2133
  %2135 = vrot.lane.b32.xlu0 %v2130, 112
  %v2136 = vpop.permute.xlu0 %2135
  %v2137 = vsel %vm2118, %v2132, %v2134
  %v2138 = vsel %vm2118, %v2134, %v2136
  %2141 = vst [vmem:[#allocation3 + $0x30] sm:$0xf0] %v2137
  %2142 = vst [vmem:[#allocation3 + $0x38] sm:$0xf0] %v2138
  %v2143 = vld [vmem:[%s753] sm:$0xff]
  %v2144 = vld [vmem:[%s753 + $0x8] sm:$0xf]
  %v2147 = vcombine.high %v2143, %v2143
  %2148 = vrot.lane.b32.xlu0 %v2143, 112
  %v2149 = vpop.permute.xlu0 %2148
  %2150 = vrot.lane.b32.xlu0 %v2147, 112
  %v2151 = vpop.permute.xlu0 %2150
  %2152 = vrot.lane.b32.xlu0 %v2144, 112
  %v2153 = vpop.permute.xlu0 %2152
  %v2154 = vsel %vm2118, %v2149, %v2151
  %v2155 = vsel %vm2118, %v2151, %v2153
  %2158 = vst [vmem:[#allocation3 + $0x40] sm:$0xf] %v2154
  %2159 = vst [vmem:[#allocation3 + $0x48] sm:$0xf] %v2155
  %v2160 = vld [vmem:[%s2086] sm:$0xff]
  %v2161 = vld [vmem:[%s2086 + $0x8] sm:$0xf]
  %v2164 = vcombine.high %v2160, %v2160
  %2165 = vrot.lane.b32.xlu0 %v2160, 112
  %v2166 = vpop.permute.xlu0 %2165
  %2167 = vrot.lane.b32.xlu0 %v2164, 112
  %v2168 = vpop.permute.xlu0 %2167
  %2169 = vrot.lane.b32.xlu0 %v2161, 112
  %v2170 = vpop.permute.xlu0 %2169
  %v2171 = vsel %vm2118, %v2166, %v2168
  %v2172 = vsel %vm2118, %v2168, %v2170
  %2175 = vst [vmem:[#allocation3 + $0x50] sm:$0xf] %v2171
  %2176 = vst [vmem:[#allocation3 + $0x58] sm:$0xf] %v2172
  %v2177 = vld [vmem:[%s1426] sm:$0xff]
  %v2178 = vld [vmem:[%s1426 + $0x8] sm:$0xf]
  %v2181 = vcombine.low %v2177, %v2177
  %v2182 = vcombine.low %v2178, %v2178
  %2183 = vrot.lane.b32.xlu0 %v2181, 112
  %v2184 = vpop.permute.xlu0 %2183
  %2185 = vrot.lane.b32.xlu0 %v2177, 112
  %v2186 = vpop.permute.xlu0 %2185
  %2187 = vrot.lane.b32.xlu0 %v2182, 112
  %v2188 = vpop.permute.xlu0 %2187
  %v2189 = vsel %vm2118, %v2184, %v2186
  %v2190 = vsel %vm2118, %v2186, %v2188
  %2193 = vst [vmem:[#allocation3 + $0x40] sm:$0xf0] %v2189
  %2194 = vst [vmem:[#allocation3 + $0x48] sm:$0xf0] %v2190
  %v2195 = vld [vmem:[%s2099] sm:$0xff]
  %v2196 = vld [vmem:[%s2099 + $0x8] sm:$0xf]
  %v2199 = vcombine.low %v2195, %v2195
  %v2200 = vcombine.low %v2196, %v2196
  %2201 = vrot.lane.b32.xlu0 %v2199, 112
  %v2202 = vpop.permute.xlu0 %2201
  %2203 = vrot.lane.b32.xlu0 %v2195, 112
  %v2204 = vpop.permute.xlu0 %2203
  %2205 = vrot.lane.b32.xlu0 %v2200, 112
  %v2206 = vpop.permute.xlu0 %2205
  %v2207 = vsel %vm2118, %v2202, %v2204
  %v2208 = vsel %vm2118, %v2204, %v2206
  %2211 = vst [vmem:[#allocation3 + $0x50] sm:$0xf0] %v2207
  %2212 = vst [vmem:[#allocation3 + $0x58] sm:$0xf0] %v2208
  %v2213 = vld [vmem:[#allocation2] sm:$0xff]
  %v2214 = vld [vmem:[#allocation2 + $0x8] sm:$0xf]
  %v2217 = vcombine.high %v2213, %v2213
  %2218 = vrot.lane.b32.xlu0 %v2213, 96
  %v2219 = vpop.permute.xlu0 %2218
  %2220 = vrot.lane.b32.xlu0 %v2217, 96
  %v2221 = vpop.permute.xlu0 %2220
  %2222 = vrot.lane.b32.xlu0 %v2214, 96
  %v2223 = vpop.permute.xlu0 %2222
  %vm2224 = vcmask 785408
  %v2225 = vsel %vm2224, %v2219, %v2221
  %v2226 = vsel %vm2224, %v2221, %v2223
  %2229 = vst [vmem:[#allocation3 + $0x60] sm:$0xf] %v2225
  %2230 = vst [vmem:[#allocation3 + $0x68] sm:$0xf] %v2226
  %v2231 = vld [vmem:[%s2073] sm:$0xff]
  %v2232 = vld [vmem:[%s2073 + $0x8] sm:$0xf]
  %v2235 = vcombine.high %v2231, %v2231
  %2236 = vrot.lane.b32.xlu0 %v2231, 96
  %v2237 = vpop.permute.xlu0 %2236
  %2238 = vrot.lane.b32.xlu0 %v2235, 96
  %v2239 = vpop.permute.xlu0 %2238
  %2240 = vrot.lane.b32.xlu0 %v2232, 96
  %v2241 = vpop.permute.xlu0 %2240
  %v2242 = vsel %vm2224, %v2237, %v2239
  %v2243 = vsel %vm2224, %v2239, %v2241
  %2246 = vst [vmem:[#allocation3 + $0x70] sm:$0xf] %v2242
  %2247 = vst [vmem:[#allocation3 + $0x78] sm:$0xf] %v2243
  %v2248 = vld [vmem:[%s753] sm:$0xff]
  %v2249 = vld [vmem:[%s753 + $0x8] sm:$0xf]
  %v2252 = vcombine.low %v2248, %v2248
  %v2253 = vcombine.low %v2249, %v2249
  %2254 = vrot.lane.b32.xlu0 %v2252, 96
  %v2255 = vpop.permute.xlu0 %2254
  %2256 = vrot.lane.b32.xlu0 %v2248, 96
  %v2257 = vpop.permute.xlu0 %2256
  %2258 = vrot.lane.b32.xlu0 %v2253, 96
  %v2259 = vpop.permute.xlu0 %2258
  %v2260 = vsel %vm2224, %v2255, %v2257
  %v2261 = vsel %vm2224, %v2257, %v2259
  %2264 = vst [vmem:[#allocation3 + $0x60] sm:$0xf0] %v2260
  %2265 = vst [vmem:[#allocation3 + $0x68] sm:$0xf0] %v2261
  %v2266 = vld [vmem:[%s2086] sm:$0xff]
  %v2267 = vld [vmem:[%s2086 + $0x8] sm:$0xf]
  %v2270 = vcombine.low %v2266, %v2266
  %v2271 = vcombine.low %v2267, %v2267
  %2272 = vrot.lane.b32.xlu0 %v2270, 96
  %v2273 = vpop.permute.xlu0 %2272
  %2274 = vrot.lane.b32.xlu0 %v2266, 96
  %v2275 = vpop.permute.xlu0 %2274
  %2276 = vrot.lane.b32.xlu0 %v2271, 96
  %v2277 = vpop.permute.xlu0 %2276
  %v2278 = vsel %vm2224, %v2273, %v2275
  %v2279 = vsel %vm2224, %v2275, %v2277
  %2282 = vst [vmem:[#allocation3 + $0x70] sm:$0xf0] %v2278
  %2283 = vst [vmem:[#allocation3 + $0x78] sm:$0xf0] %v2279
  %v2284 = vld [vmem:[%s1426] sm:$0xff]
  %v2285 = vld [vmem:[%s1426 + $0x8] sm:$0xf]
  %v2288 = vcombine.high %v2284, %v2284
  %2289 = vrot.lane.b32.xlu0 %v2284, 96
  %v2290 = vpop.permute.xlu0 %2289
  %2291 = vrot.lane.b32.xlu0 %v2288, 96
  %v2292 = vpop.permute.xlu0 %2291
  %2293 = vrot.lane.b32.xlu0 %v2285, 96
  %v2294 = vpop.permute.xlu0 %2293
  %v2295 = vsel %vm2224, %v2290, %v2292
  %v2296 = vsel %vm2224, %v2292, %v2294
  %2299 = vst [vmem:[#allocation3 + $0x80] sm:$0xf] %v2295
  %2300 = vst [vmem:[#allocation3 + $0x88] sm:$0xf] %v2296
  %v2301 = vld [vmem:[%s2099] sm:$0xff]
  %v2302 = vld [vmem:[%s2099 + $0x8] sm:$0xf]
  %v2305 = vcombine.high %v2301, %v2301
  %2306 = vrot.lane.b32.xlu0 %v2301, 96
  %v2307 = vpop.permute.xlu0 %2306
  %2308 = vrot.lane.b32.xlu0 %v2305, 96
  %v2309 = vpop.permute.xlu0 %2308
  %2310 = vrot.lane.b32.xlu0 %v2302, 96
  %v2311 = vpop.permute.xlu0 %2310
  %v2312 = vsel %vm2224, %v2307, %v2309
  %v2313 = vsel %vm2224, %v2309, %v2311
  %2316 = vst [vmem:[#allocation3 + $0x90] sm:$0xf] %v2312
  %2317 = vst [vmem:[#allocation3 + $0x98] sm:$0xf] %v2313
  %v2318 = vld [vmem:[%s1] sm:$0xff]
  %v2319 = vld [vmem:[#allocation3] sm:$0xff]
  %v2320 = vld [vmem:[#allocation3 + $0x8] sm:$0xff]
  %v2321 = vld [vmem:[#allocation3 + $0x10] sm:$0xff]
  %v2322 = vld [vmem:[#allocation3 + $0x18] sm:$0xff]
  %v2323 = vld [vmem:[#allocation3 + $0x20] sm:$0xff]
  %v2324 = vld [vmem:[#allocation3 + $0x28] sm:$0xff]
  %v2325 = vld [vmem:[#allocation3 + $0x30] sm:$0xff]
  %v2326 = vld [vmem:[#allocation3 + $0x38] sm:$0xff]
  %v2327 = vld [vmem:[#allocation3 + $0x40] sm:$0xff]
  %v2328 = vld [vmem:[#allocation3 + $0x48] sm:$0xff]
  %v2329 = vld [vmem:[#allocation3 + $0x50] sm:$0xff]
  %v2330 = vld [vmem:[#allocation3 + $0x58] sm:$0xff]
  %v2331 = vld [vmem:[#allocation3 + $0x60] sm:$0xff]
  %v2332 = vld [vmem:[#allocation3 + $0x68] sm:$0xff]
  %v2333 = vld [vmem:[#allocation3 + $0x70] sm:$0xff]
  %v2334 = vld [vmem:[#allocation3 + $0x78] sm:$0xff]
  %v2335 = vld [vmem:[#allocation3 + $0x80] sm:$0xf]
  %v2336 = vld [vmem:[#allocation3 + $0x88] sm:$0xf]
  %v2337 = vld [vmem:[#allocation3 + $0x90] sm:$0xf]
  %v2338 = vld [vmem:[#allocation3 + $0x98] sm:$0xf]
  %v2339 = vld [vmem:[%s2] sm:$0xff]
  %2341 = vset.pattern.permute.xlu0 0
  %2342 = vperm.xlu0 %2341, %v2339
  %v2343 = vpop.permute.xlu0 %2342
  %vm2345 = vcmask 293888
  %v2347 = vsel %vm2345, %v2318, 0
  %vm2349 = vcmask 1043456
  %v2351 = vsel %vm2349, %v2335, 0
  %v2354 = vsel %vm2349, %v2336, 0
  %v2357 = vsel %vm2349, %v2337, 0
  %v2360 = vsel %vm2349, %v2338, 0
  %2362 = vmatprep.subr.mxu0 0.0
  %2363 = vmatpush1.msra.mxu0 0.0
  %2364 = vmatprep.subr.mxu0 0.0
  %2365 = vmatpush1.msra.mxu0 0.0
  %2366 = vmatprep.subr.mxu0 0.0
  %2367 = vmatpush1.msra.mxu0 0.0
  %2368 = vmatprep.subr.mxu0 0.0
  %2369 = vmatpush1.msra.mxu0 0.0
  %2370 = vmatprep.subr.mxu0 0.0
  %2371 = vmatpush1.msra.mxu0 0.0
  %2372 = vmatprep.subr.mxu0 0.0
  %2373 = vmatpush1.msra.mxu0 0.0
  %2374 = vmatprep.subr.mxu0 0.0
  %2375 = vmatpush1.msra.mxu0 0.0
  %2376 = vmatprep.subr.mxu0 0.0
  %2377 = vmatpush1.msra.mxu0 0.0
  %2378 = vmatprep.subr.mxu0 0.0
  %2379 = vmatpush1.msra.mxu0 0.0
  %2380 = vmatprep.subr.mxu0 0.0
  %2381 = vmatpush1.msra.mxu0 0.0
  %2382 = vmatprep.subr.mxu0 0.0
  %2383 = vmatpush1.msra.mxu0 0.0
  %2384 = vmatprep.subr.mxu0 %v2354
  %2385 = vmatpush1.msra.mxu0 %v2351
  %2386 = vmatprep.subr.mxu0 %v2332
  %2387 = vmatpush1.msra.mxu0 %v2331
  %2388 = vmatprep.subr.mxu0 %v2328
  %2389 = vmatpush1.msra.mxu0 %v2327
  %2390 = vmatprep.subr.mxu0 %v2324
  %2391 = vmatpush1.msra.mxu0 %v2323
  %2392 = vmatprep.subr.mxu0 %v2320
  %2393 = vmatpush1.msra.mxu0 %v2319
  %2394 = vmatprep.subr.mxu0 0.0
  %2395 = vmatpush2.msra.mxu0 0.0
  %2396 = vmatprep.subr.mxu0 0.0
  %2397 = vmatpush2.msra.mxu0 0.0
  %2398 = vmatprep.subr.mxu0 0.0
  %2399 = vmatpush2.msra.mxu0 0.0
  %2400 = vmatprep.subr.mxu0 0.0
  %2401 = vmatpush2.msra.mxu0 0.0
  %2402 = vmatprep.subr.mxu0 0.0
  %2403 = vmatpush2.msra.mxu0 0.0
  %2404 = vmatprep.subr.mxu0 0.0
  %2405 = vmatpush2.msra.mxu0 0.0
  %2406 = vmatprep.subr.mxu0 0.0
  %2407 = vmatpush2.msra.mxu0 0.0
  %2408 = vmatprep.subr.mxu0 0.0
  %2409 = vmatpush2.msra.mxu0 0.0
  %2410 = vmatprep.subr.mxu0 0.0
  %2411 = vmatpush2.msra.mxu0 0.0
  %2412 = vmatprep.subr.mxu0 0.0
  %2413 = vmatpush2.msra.mxu0 0.0
  %2414 = vmatprep.subr.mxu0 0.0
  %2415 = vmatpush2.msra.mxu0 0.0
  %2416 = vmatprep.subr.mxu0 0.0
  %2417 = vmatpush2.msra.mxu0 0.0
  %2418 = vmatprep.subr.mxu0 0.0
  %2419 = vmatpush2.msra.mxu0 0.0
  %2420 = vmatprep.subr.mxu0 0.0
  %2421 = vmatpush2.msra.mxu0 0.0
  %2422 = vmatprep.subr.mxu0 0.0
  %2423 = vmatpush2.msra.mxu0 0.0
  %2424 = vmatprep.subr.mxu0 0.0
  %2425 = vmatpush2.msra.mxu0 0.0
  %2426 = vmatprep.mubr.f32.mxu0 0.0
  %2427 = vmatmul.mubr.f32.gmra.mxu0 %v2347
  %v2428 = vpop.f32.mrf.mxu0
  %v2429 = vadd.f32 %v2343, %v2428
  %v2430 = vpop.f32.mrf.mxu0
  %v2431 = vadd.f32 %v2343, %v2430
  %2432 = vdwg.mxu0
  %2433 = vmatprep.subr.mxu0 0.0
  %2434 = vmatpush1.msra.mxu0 0.0
  %2435 = vmatprep.subr.mxu0 0.0
  %2436 = vmatpush1.msra.mxu0 0.0
  %2437 = vmatprep.subr.mxu0 0.0
  %2438 = vmatpush1.msra.mxu0 0.0
  %2439 = vmatprep.subr.mxu0 0.0
  %2440 = vmatpush1.msra.mxu0 0.0
  %2441 = vmatprep.subr.mxu0 0.0
  %2442 = vmatpush1.msra.mxu0 0.0
  %2443 = vmatprep.subr.mxu0 0.0
  %2444 = vmatpush1.msra.mxu0 0.0
  %2445 = vmatprep.subr.mxu0 0.0
  %2446 = vmatpush1.msra.mxu0 0.0
  %2447 = vmatprep.subr.mxu0 0.0
  %2448 = vmatpush1.msra.mxu0 0.0
  %2449 = vmatprep.subr.mxu0 0.0
  %2450 = vmatpush1.msra.mxu0 0.0
  %2451 = vmatprep.subr.mxu0 0.0
  %2452 = vmatpush1.msra.mxu0 0.0
  %2453 = vmatprep.subr.mxu0 0.0
  %2454 = vmatpush1.msra.mxu0 0.0
  %2455 = vmatprep.subr.mxu0 %v2360
  %2456 = vmatpush1.msra.mxu0 %v2357
  %2457 = vmatprep.subr.mxu0 %v2334
  %2458 = vmatpush1.msra.mxu0 %v2333
  %2459 = vmatprep.subr.mxu0 %v2330
  %2460 = vmatpush1.msra.mxu0 %v2329
  %2461 = vmatprep.subr.mxu0 %v2326
  %2462 = vmatpush1.msra.mxu0 %v2325
  %2463 = vmatprep.subr.mxu0 %v2322
  %2464 = vmatpush1.msra.mxu0 %v2321
  %2465 = vmatprep.subr.mxu0 0.0
  %2466 = vmatpush2.msra.mxu0 0.0
  %2467 = vmatprep.subr.mxu0 0.0
  %2468 = vmatpush2.msra.mxu0 0.0
  %2469 = vmatprep.subr.mxu0 0.0
  %2470 = vmatpush2.msra.mxu0 0.0
  %2471 = vmatprep.subr.mxu0 0.0
  %2472 = vmatpush2.msra.mxu0 0.0
  %2473 = vmatprep.subr.mxu0 0.0
  %2474 = vmatpush2.msra.mxu0 0.0
  %2475 = vmatprep.subr.mxu0 0.0
  %2476 = vmatpush2.msra.mxu0 0.0
  %2477 = vmatprep.subr.mxu0 0.0
  %2478 = vmatpush2.msra.mxu0 0.0
  %2479 = vmatprep.subr.mxu0 0.0
  %2480 = vmatpush2.msra.mxu0 0.0
  %2481 = vmatprep.subr.mxu0 0.0
  %2482 = vmatpush2.msra.mxu0 0.0
  %2483 = vmatprep.subr.mxu0 0.0
  %2484 = vmatpush2.msra.mxu0 0.0
  %2485 = vmatprep.subr.mxu0 0.0
  %2486 = vmatpush2.msra.mxu0 0.0
  %2487 = vmatprep.subr.mxu0 0.0
  %2488 = vmatpush2.msra.mxu0 0.0
  %2489 = vmatprep.subr.mxu0 0.0
  %2490 = vmatpush2.msra.mxu0 0.0
  %2491 = vmatprep.subr.mxu0 0.0
  %2492 = vmatpush2.msra.mxu0 0.0
  %2493 = vmatprep.subr.mxu0 0.0
  %2494 = vmatpush2.msra.mxu0 0.0
  %2495 = vmatprep.subr.mxu0 0.0
  %2496 = vmatpush2.msra.mxu0 0.0
  %2497 = vmatprep.mubr.f32.mxu0 0.0
  %2498 = vmatmul.mubr.f32.gmra.mxu0 %v2347
  %v2499 = vpop.f32.mrf.mxu0
  %v2500 = vadd.f32 %v2343, %v2499
  %v2501 = vpop.f32.mrf.mxu0
  %v2502 = vadd.f32 %v2343, %v2501
  %2503 = vdwg.mxu0
  %v2504 = vxor.u32 %v2429, 2147483648
  %v2505 = vxor.u32 %v2431, 2147483648
  %v2506 = vxor.u32 %v2500, 2147483648
  %v2507 = vxor.u32 %v2502, 2147483648
  %v2508 = vmul.f32 %v2504, 1.442695
  %v2509 = vpow.pop %v2508
  %v2510 = vmul.f32 %v2505, 1.442695
  %v2511 = vpow.pop %v2510
  %v2512 = vmul.f32 %v2506, 1.442695
  %v2513 = vpow.pop %v2512
  %v2514 = vmul.f32 %v2507, 1.442695
  %v2515 = vpow.pop %v2514
  %v2516 = vadd.f32 %v2509, 1.0
  %v2517 = vadd.f32 %v2511, 1.0
  %v2518 = vadd.f32 %v2513, 1.0
  %v2519 = vadd.f32 %v2515, 1.0
  %v2520 = vrcp.pop %v2516
  %v2521 = vmul.f32 1.0, %v2520
  %v2522 = vrcp.pop %v2517
  %v2523 = vmul.f32 1.0, %v2522
  %v2524 = vrcp.pop %v2518
  %v2525 = vmul.f32 1.0, %v2524
  %v2526 = vrcp.pop %v2519
  %v2527 = vmul.f32 1.0, %v2526
  %v2528 = vmul.f32 %v2429, %v2521
  %v2529 = vmul.f32 %v2431, %v2523
  %v2530 = vmul.f32 %v2500, %v2525
  %v2531 = vmul.f32 %v2502, %v2527
  %2532 = vst [vmem:[%s3] sm:$0xff] %v2528
  %2533 = vst [vmem:[%s3 + $0x8] sm:$0xff] %v2529
  %s2534 = scalar_lea.vmem %s3, 16
  %2535 = vst [vmem:[%s2534] sm:$0xff] %v2530
  %2536 = vst [vmem:[%s2534 + $0x8] sm:$0xff] %v2531
  // Predicated region
  $region14: #{conv_bn_silu.1} parent=0 // pred_check
    _
  $region15: #{conv_bn_silu.1} parent=0 // pred_check_branch
    %2538 = sbr.rel (0) target = $region17
  $region16: #{conv_bn_silu.1} parent=0 // pred_region
    _
  $region17: #{conv_bn_silu.1} parent=0 // pred_fallthru
    _
  // Predicated region
  $region18: #{conv_bn_silu.1} parent=0 // pred_check
    _
  $region19: #{conv_bn_silu.1} parent=0 // pred_check_branch
    %2540 = sbr.rel (0) target = $region21
  $region20: #{conv_bn_silu.1} parent=0 // pred_region
    _
  $region21: #{conv_bn_silu.1} parent=0 // pred_fallthru
    _

</llo_original>
